<compile_context>
chip_gen: v6e
topology: v6e:2x2x1
jax: 0.10.0
libtpu: 0.0.40
codegen_flags: <defaults>
</compile_context>

<pallas_src>
import functools

import jax
import jax.numpy as jnp
from jax.experimental import pallas as pl
from jax.experimental.pallas import tpu as pltpu


# ----------------------------------------------------------------------------
# Fused ResidualBlock kernel
# ----------------------------------------------------------------------------
def _resblock_kernel(xcol_ref, xres_ref, w1_ref, b1_ref, w2_ref, b2_ref,
                     alpha_ref, o_ref, hp_ref, *, H, W, C, KH, KW):
    HW = H * W
    KC = KW * C
    ph, pw = KH // 2, KW // 2

    # ---- conv1 (+ folded BN1 scale) -------------------------------------
    # xcol_ref block: (1, H+KH-1, W, KW*C) bf16, already im2col'd over kw in
    # the wrapper, so only H (outer-dim, free) shifts happen here.
    acc = jnp.zeros((HW, C), dtype=jnp.float32)
    for kh in range(KH):
        xs = xcol_ref[0, kh:kh + H].reshape(HW, KC)           # bf16
        acc = acc + jax.lax.dot_general(
            xs, w1_ref[kh],
            (((1,), (0,)), ((), ())),
            preferred_element_type=jnp.float32)
    h = acc + b1_ref[...]                                      # (HW,C)+(1,C)

    # ---- PReLU (single shared alpha, from SMEM) --------------------------
    alpha = alpha_ref[0]
    h = jnp.where(h > 0, h, alpha * h)

    # ---- zero-pad the intermediate into VMEM scratch for 'same' conv2 ----
    hp_ref[...] = jnp.zeros_like(hp_ref)
    hp_ref[ph:ph + H, pw:pw + W, :] = h.reshape(H, W, C).astype(hp_ref.dtype)

    # ---- in-kernel im2col over kw (only KW sublane-shifted slices) -------
    hcol = jnp.concatenate(
        [hp_ref[:, kw:kw + W, :] for kw in range(KW)], axis=-1)  # (H+2, W, KC)

    # ---- conv2 (+ folded BN2 scale) --------------------------------------
    acc2 = jnp.zeros((HW, C), dtype=jnp.float32)
    for kh in range(KH):
        hs = hcol[kh:kh + H].reshape(HW, KC)                   # bf16
        acc2 = acc2 + jax.lax.dot_general(
            hs, w2_ref[kh],
            (((1,), (0,)), ((), ())),
            preferred_element_type=jnp.float32)
    y = acc2 + b2_ref[...]

    # ---- residual add -----------------------------------------------------
    out = xres_ref[0] + y.reshape(H, W, C)
    o_ref[...] = out[None].astype(o_ref.dtype)


# ----------------------------------------------------------------------------
# BN folding (eval mode) + wrapper
# ----------------------------------------------------------------------------
def fold_bn_into_conv(w, b, gamma, beta, mean, var, eps=1e-5):
    """Fold an eval-mode BatchNorm into the preceding conv's weights/bias."""
    scale = gamma / jnp.sqrt(var + eps)
    w_f = w * scale[None, None, None, :]
    b_f = scale * (b - mean) + beta
    return w_f, b_f


def residual_block_forward(params, x_nchw):
    x = jnp.transpose(x_nchw, (0, 2, 3, 1)).astype(jnp.float32)   # -> NHWC
    N, H, W, C = x.shape
    KH = KW = 3
    ph, pw = KH // 2, KW // 2

    w1, b1 = fold_bn_into_conv(params["w1"], params["b1"], params["gamma1"],
                               params["beta1"], params["mean1"], params["var1"])
    w2, b2 = fold_bn_into_conv(params["w2"], params["b2"], params["gamma2"],
                               params["beta2"], params["mean2"], params["var2"])

    # 'same' zero padding + im2col over kw (wrapper side, layout only):
    #   xcol[n, h, w, kw*C + c] = xpad[n, h, w + kw, c]
    xp = jnp.pad(x, ((0, 0), (ph, ph), (pw, pw), (0, 0)))
    Hp = H + KH - 1
    xcol = jnp.concatenate(
        [xp[:, :, kw:kw + W, :] for kw in range(KW)],
        axis=-1).astype(jnp.bfloat16)                              # (N,Hp,W,KW*C)

    # Weight layout matches the im2col channel ordering: (kh, kw*C + cin, cout)
    w1r = w1.reshape(KH, KW * C, C).astype(jnp.bfloat16)
    w2r = w2.reshape(KH, KW * C, C).astype(jnp.bfloat16)
    b1r = b1.reshape(1, C).astype(jnp.float32)
    b2r = b2.reshape(1, C).astype(jnp.float32)
    alpha = jnp.asarray(params["alpha"], jnp.float32).reshape((1,))

    kernel = functools.partial(_resblock_kernel, H=H, W=W, C=C, KH=KH, KW=KW)

    out = pl.pallas_call(
        kernel,
        out_shape=jax.ShapeDtypeStruct((N, H, W, C), jnp.float32),
        grid=(N,),
        in_specs=[
            pl.BlockSpec((1, Hp, W, KW * C), lambda n: (n, 0, 0, 0)),
            pl.BlockSpec((1, H, W, C), lambda n: (n, 0, 0, 0)),
            pl.BlockSpec((KH, KW * C, C), lambda n: (0, 0, 0)),
            pl.BlockSpec((1, C), lambda n: (0, 0)),
            pl.BlockSpec((KH, KW * C, C), lambda n: (0, 0, 0)),
            pl.BlockSpec((1, C), lambda n: (0, 0)),
            pl.BlockSpec(memory_space=pltpu.MemorySpace.SMEM),
        ],
        out_specs=pl.BlockSpec((1, H, W, C), lambda n: (n, 0, 0, 0)),
        scratch_shapes=[
            pltpu.VMEM((H + KH - 1, W + KW - 1, C), jnp.bfloat16),
        ],
        compiler_params=pltpu.CompilerParams(
            dimension_semantics=("parallel",)),
    )(xcol, x, w1r, b1r, w2r, b2r, alpha)

    return jnp.transpose(out, (0, 3, 1, 2))                        # -> NCHW


# ----------------------------------------------------------------------------
# Pure-JAX reference (f32), deterministic synthetic parameters
# ----------------------------------------------------------------------------
def residual_block_ref(params, x_nchw):
    x = jnp.transpose(x_nchw, (0, 2, 3, 1)).astype(jnp.float32)
    w1, b1 = fold_bn_into_conv(params["w1"], params["b1"], params["gamma1"],
                               params["beta1"], params["mean1"], params["var1"])
    w2, b2 = fold_bn_into_conv(params["w2"], params["b2"], params["gamma2"],
                               params["beta2"], params["mean2"], params["var2"])

    def conv(z, w, b):
        return jax.lax.conv_general_dilated(
            z, w, window_strides=(1, 1), padding="SAME",
            dimension_numbers=("NHWC", "HWIO", "NHWC")) + b

    h = conv(x, w1, b1)
    h = jnp.where(h > 0, h, params["alpha"] * h)
    y = x + conv(h, w2, b2)
    return jnp.transpose(y, (0, 3, 1, 2))


def init_residual_block_params(key, c):
    ks = jax.random.split(key, 8)
    return dict(
        w1=jax.random.normal(ks[0], (3, 3, c, c), jnp.float32) * 0.05,
        b1=jax.random.normal(ks[1], (c,), jnp.float32) * 0.01,
        gamma1=1.0 + 0.1 * jax.random.normal(ks[2], (c,), jnp.float32),
        beta1=0.1 * jax.random.normal(ks[3], (c,), jnp.float32),
        mean1=jnp.zeros((c,), jnp.float32),
        var1=jnp.ones((c,), jnp.float32),
        w2=jax.random.normal(ks[4], (3, 3, c, c), jnp.float32) * 0.05,
        b2=jax.random.normal(ks[5], (c,), jnp.float32) * 0.01,
        gamma2=1.0 + 0.1 * jax.random.normal(ks[6], (c,), jnp.float32),
        beta2=0.1 * jax.random.normal(ks[7], (c,), jnp.float32),
        mean2=jnp.zeros((c,), jnp.float32),
        var2=jnp.ones((c,), jnp.float32),
        alpha=jnp.full((1,), 0.25, jnp.float32),   # nn.PReLU() default
    )


if __name__ == "__main__":
    key = jax.random.PRNGKey(0)
    pkey, xkey = jax.random.split(key)

    C = 64                                   # in_features (SRGAN trunk width)
    params = init_residual_block_params(pkey, C)
    x = jax.random.normal(xkey, (2, C, 16, 16), jnp.float32)   # NCHW like torch

    fwd = jax.jit(residual_block_forward)
    y = fwd(params, x)
    y = jax.block_until_ready(y)

    assert y.shape == x.shape, y.shape
    assert bool(jnp.all(jnp.isfinite(y)))

    y_ref = residual_block_ref(params, x)
    max_err = float(jnp.max(jnp.abs(y - y_ref)))
    assert max_err < 0.15, max_err          # bf16 matmul operands, f32 accum

    print("KERNEL_OK")
</pallas_src>

<mosaic_0001>
module attributes {stable_mosaic.version = 11 : i64} {
  func.func @_resblock_kernel(%arg0: i32, %arg1: memref<1x18x16x192xbf16, #tpu.memory_space<vmem>>, %arg2: memref<1x16x16x64xf32, #tpu.memory_space<vmem>>, %arg3: memref<3x192x64xbf16, #tpu.memory_space<vmem>>, %arg4: memref<1x64xf32, #tpu.memory_space<vmem>>, %arg5: memref<3x192x64xbf16, #tpu.memory_space<vmem>>, %arg6: memref<1x64xf32, #tpu.memory_space<vmem>>, %arg7: memref<1xf32, #tpu.memory_space<smem>>, %arg8: memref<1x16x16x64xf32, #tpu.memory_space<vmem>>, %arg9: memref<18x18x64xbf16, #tpu.memory_space<vmem>>) attributes {dimension_semantics = [#tpu.dimension_semantics<parallel>], iteration_bounds = array<i64: 2>, scalar_prefetch = 0 : i64, scratch_operands = 1 : i64, tpu.core_type = #tpu.core_type<tc>, window_params = [{transform_indices = @transform_0, window_bounds = array<i64: 1, 18, 16, 192>}, {transform_indices = @transform_1, window_bounds = array<i64: 1, 16, 16, 64>}, {pipeline_mode = #tpu.pipeline_mode<synchronous>, transform_indices = @transform_2, window_bounds = array<i64: 3, 192, 64>}, {pipeline_mode = #tpu.pipeline_mode<synchronous>, transform_indices = @transform_3, window_bounds = array<i64: 1, 64>}, {pipeline_mode = #tpu.pipeline_mode<synchronous>, transform_indices = @transform_4, window_bounds = array<i64: 3, 192, 64>}, {pipeline_mode = #tpu.pipeline_mode<synchronous>, transform_indices = @transform_5, window_bounds = array<i64: 1, 64>}, {transform_indices = @transform_6, window_bounds = array<i64: 1>}, {transform_indices = @transform_7, window_bounds = array<i64: 1, 16, 16, 64>}]} {
    %cst = arith.constant 0.000000e+00 : f32
    %0 = vector.broadcast %cst : f32 to vector<256x64xf32>
    %c0 = arith.constant 0 : index
    %c0_0 = arith.constant 0 : index
    %c0_1 = arith.constant 0 : index
    %c0_2 = arith.constant 0 : index
    %1 = vector.load %arg1[%c0, %c0_0, %c0_1, %c0_2] : memref<1x18x16x192xbf16, #tpu.memory_space<vmem>>, vector<1x16x16x192xbf16>
    %2 = vector.shape_cast %1 : vector<1x16x16x192xbf16> to vector<16x16x192xbf16>
    %3 = vector.shape_cast %2 : vector<16x16x192xbf16> to vector<256x192xbf16>
    %c0_3 = arith.constant 0 : index
    %c0_4 = arith.constant 0 : index
    %c0_5 = arith.constant 0 : index
    %4 = vector.load %arg3[%c0_3, %c0_4, %c0_5] : memref<3x192x64xbf16, #tpu.memory_space<vmem>>, vector<1x192x64xbf16>
    %5 = vector.shape_cast %4 : vector<1x192x64xbf16> to vector<192x64xbf16>
    %cst_6 = arith.constant dense<0.000000e+00> : vector<256x64xf32>
    %6 = tpu.matmul %3, %5, %cst_6 {dimension_numbers = #tpu.dot_dimension_numbers<[1], [0], [0], [1], [0, 0, 1, 1], [], []>} : vector<256x192xbf16>, vector<192x64xbf16>, vector<256x64xf32> -> vector<256x64xf32>
    %7 = arith.addf %0, %6 : vector<256x64xf32>
    %c0_7 = arith.constant 0 : index
    %c1 = arith.constant 1 : index
    %c0_8 = arith.constant 0 : index
    %c0_9 = arith.constant 0 : index
    %8 = vector.load %arg1[%c0_7, %c1, %c0_8, %c0_9] : memref<1x18x16x192xbf16, #tpu.memory_space<vmem>>, vector<1x16x16x192xbf16>
    %9 = vector.shape_cast %8 : vector<1x16x16x192xbf16> to vector<16x16x192xbf16>
    %10 = vector.shape_cast %9 : vector<16x16x192xbf16> to vector<256x192xbf16>
    %c1_10 = arith.constant 1 : index
    %c0_11 = arith.constant 0 : index
    %c0_12 = arith.constant 0 : index
    %11 = vector.load %arg3[%c1_10, %c0_11, %c0_12] : memref<3x192x64xbf16, #tpu.memory_space<vmem>>, vector<1x192x64xbf16>
    %12 = vector.shape_cast %11 : vector<1x192x64xbf16> to vector<192x64xbf16>
    %cst_13 = arith.constant dense<0.000000e+00> : vector<256x64xf32>
    %13 = tpu.matmul %10, %12, %cst_13 {dimension_numbers = #tpu.dot_dimension_numbers<[1], [0], [0], [1], [0, 0, 1, 1], [], []>} : vector<256x192xbf16>, vector<192x64xbf16>, vector<256x64xf32> -> vector<256x64xf32>
    %14 = arith.addf %7, %13 : vector<256x64xf32>
    %c0_14 = arith.constant 0 : index
    %c2 = arith.constant 2 : index
    %c0_15 = arith.constant 0 : index
    %c0_16 = arith.constant 0 : index
    %15 = vector.load %arg1[%c0_14, %c2, %c0_15, %c0_16] : memref<1x18x16x192xbf16, #tpu.memory_space<vmem>>, vector<1x16x16x192xbf16>
    %16 = vector.shape_cast %15 : vector<1x16x16x192xbf16> to vector<16x16x192xbf16>
    %17 = vector.shape_cast %16 : vector<16x16x192xbf16> to vector<256x192xbf16>
    %c2_17 = arith.constant 2 : index
    %c0_18 = arith.constant 0 : index
    %c0_19 = arith.constant 0 : index
    %18 = vector.load %arg3[%c2_17, %c0_18, %c0_19] : memref<3x192x64xbf16, #tpu.memory_space<vmem>>, vector<1x192x64xbf16>
    %19 = vector.shape_cast %18 : vector<1x192x64xbf16> to vector<192x64xbf16>
    %cst_20 = arith.constant dense<0.000000e+00> : vector<256x64xf32>
    %20 = tpu.matmul %17, %19, %cst_20 {dimension_numbers = #tpu.dot_dimension_numbers<[1], [0], [0], [1], [0, 0, 1, 1], [], []>} : vector<256x192xbf16>, vector<192x64xbf16>, vector<256x64xf32> -> vector<256x64xf32>
    %21 = arith.addf %14, %20 : vector<256x64xf32>
    %c0_21 = arith.constant 0 : index
    %c0_22 = arith.constant 0 : index
    %22 = vector.load %arg4[%c0_21, %c0_22] : memref<1x64xf32, #tpu.memory_space<vmem>>, vector<1x64xf32>
    %23 = vector.broadcast %22 : vector<1x64xf32> to vector<256x64xf32>
    %24 = arith.addf %21, %23 : vector<256x64xf32>
    %c0_23 = arith.constant 0 : index
    %25 = memref.load %arg7[%c0_23] : memref<1xf32, #tpu.memory_space<smem>>
    %cst_24 = arith.constant 0.000000e+00 : f32
    %26 = vector.broadcast %cst_24 : f32 to vector<256x64xf32>
    %27 = arith.cmpf ogt, %24, %26 : vector<256x64xf32>
    %28 = vector.broadcast %25 : f32 to vector<256x64xf32>
    %29 = arith.mulf %28, %24 : vector<256x64xf32>
    %30 = arith.select %27, %24, %29 : vector<256x64xi1>, vector<256x64xf32>
    %cst_25 = arith.constant 0.000000e+00 : bf16
    %31 = vector.broadcast %cst_25 : bf16 to vector<18x18x64xbf16>
    %c0_26 = arith.constant 0 : index
    %c0_27 = arith.constant 0 : index
    %c0_28 = arith.constant 0 : index
    %32 = vector.load %arg9[%c0_26, %c0_27, %c0_28] : memref<18x18x64xbf16, #tpu.memory_space<vmem>>, vector<18x18x64xbf16>
    tpu.vector_store %arg9[%c0_26, %c0_27, %c0_28], %31 {strides = array<i32>} : memref<18x18x64xbf16, #tpu.memory_space<vmem>>, vector<18x18x64xbf16>,
    %33 = vector.shape_cast %30 : vector<256x64xf32> to vector<16x16x64xf32>
    %34 = arith.truncf %33 : vector<16x16x64xf32> to vector<16x16x64xbf16>
    %c1_29 = arith.constant 1 : index
    %c1_30 = arith.constant 1 : index
    %c0_31 = arith.constant 0 : index
    %35 = vector.load %arg9[%c1_29, %c1_30, %c0_31] : memref<18x18x64xbf16, #tpu.memory_space<vmem>>, vector<16x16x64xbf16>
    tpu.vector_store %arg9[%c1_29, %c1_30, %c0_31], %34 {strides = array<i32>} : memref<18x18x64xbf16, #tpu.memory_space<vmem>>, vector<16x16x64xbf16>,
    %c0_32 = arith.constant 0 : index
    %c0_33 = arith.constant 0 : index
    %c0_34 = arith.constant 0 : index
    %36 = vector.load %arg9[%c0_32, %c0_33, %c0_34] : memref<18x18x64xbf16, #tpu.memory_space<vmem>>, vector<18x16x64xbf16>
    %c0_35 = arith.constant 0 : index
    %c1_36 = arith.constant 1 : index
    %c0_37 = arith.constant 0 : index
    %37 = vector.load %arg9[%c0_35, %c1_36, %c0_37] : memref<18x18x64xbf16, #tpu.memory_space<vmem>>, vector<18x16x64xbf16>
    %c0_38 = arith.constant 0 : index
    %c2_39 = arith.constant 2 : index
    %c0_40 = arith.constant 0 : index
    %38 = vector.load %arg9[%c0_38, %c2_39, %c0_40] : memref<18x18x64xbf16, #tpu.memory_space<vmem>>, vector<18x16x64xbf16>
    %39 = tpu.concatenate %36, %37, %38 in 2 : vector<18x16x64xbf16>, vector<18x16x64xbf16>, vector<18x16x64xbf16> -> vector<18x16x192xbf16>
    %cst_41 = arith.constant 0.000000e+00 : f32
    %40 = vector.broadcast %cst_41 : f32 to vector<256x64xf32>
    %41 = vector.extract_strided_slice %39 {offsets = [0, 0, 0], sizes = [16, 16, 192], strides = [1, 1, 1]} : vector<18x16x192xbf16> to vector<16x16x192xbf16>
    %42 = vector.shape_cast %41 : vector<16x16x192xbf16> to vector<256x192xbf16>
    %c0_42 = arith.constant 0 : index
    %c0_43 = arith.constant 0 : index
    %c0_44 = arith.constant 0 : index
    %43 = vector.load %arg5[%c0_42, %c0_43, %c0_44] : memref<3x192x64xbf16, #tpu.memory_space<vmem>>, vector<1x192x64xbf16>
    %44 = vector.shape_cast %43 : vector<1x192x64xbf16> to vector<192x64xbf16>
    %cst_45 = arith.constant dense<0.000000e+00> : vector<256x64xf32>
    %45 = tpu.matmul %42, %44, %cst_45 {dimension_numbers = #tpu.dot_dimension_numbers<[1], [0], [0], [1], [0, 0, 1, 1], [], []>} : vector<256x192xbf16>, vector<192x64xbf16>, vector<256x64xf32> -> vector<256x64xf32>
    %46 = arith.addf %40, %45 : vector<256x64xf32>
    %47 = vector.extract_strided_slice %39 {offsets = [1, 0, 0], sizes = [16, 16, 192], strides = [1, 1, 1]} : vector<18x16x192xbf16> to vector<16x16x192xbf16>
    %48 = vector.shape_cast %47 : vector<16x16x192xbf16> to vector<256x192xbf16>
    %c1_46 = arith.constant 1 : index
    %c0_47 = arith.constant 0 : index
    %c0_48 = arith.constant 0 : index
    %49 = vector.load %arg5[%c1_46, %c0_47, %c0_48] : memref<3x192x64xbf16, #tpu.memory_space<vmem>>, vector<1x192x64xbf16>
    %50 = vector.shape_cast %49 : vector<1x192x64xbf16> to vector<192x64xbf16>
    %cst_49 = arith.constant dense<0.000000e+00> : vector<256x64xf32>
    %51 = tpu.matmul %48, %50, %cst_49 {dimension_numbers = #tpu.dot_dimension_numbers<[1], [0], [0], [1], [0, 0, 1, 1], [], []>} : vector<256x192xbf16>, vector<192x64xbf16>, vector<256x64xf32> -> vector<256x64xf32>
    %52 = arith.addf %46, %51 : vector<256x64xf32>
    %53 = vector.extract_strided_slice %39 {offsets = [2, 0, 0], sizes = [16, 16, 192], strides = [1, 1, 1]} : vector<18x16x192xbf16> to vector<16x16x192xbf16>
    %54 = vector.shape_cast %53 : vector<16x16x192xbf16> to vector<256x192xbf16>
    %c2_50 = arith.constant 2 : index
    %c0_51 = arith.constant 0 : index
    %c0_52 = arith.constant 0 : index
    %55 = vector.load %arg5[%c2_50, %c0_51, %c0_52] : memref<3x192x64xbf16, #tpu.memory_space<vmem>>, vector<1x192x64xbf16>
    %56 = vector.shape_cast %55 : vector<1x192x64xbf16> to vector<192x64xbf16>
    %cst_53 = arith.constant dense<0.000000e+00> : vector<256x64xf32>
    %57 = tpu.matmul %54, %56, %cst_53 {dimension_numbers = #tpu.dot_dimension_numbers<[1], [0], [0], [1], [0, 0, 1, 1], [], []>} : vector<256x192xbf16>, vector<192x64xbf16>, vector<256x64xf32> -> vector<256x64xf32>
    %58 = arith.addf %52, %57 : vector<256x64xf32>
    %c0_54 = arith.constant 0 : index
    %c0_55 = arith.constant 0 : index
    %59 = vector.load %arg6[%c0_54, %c0_55] : memref<1x64xf32, #tpu.memory_space<vmem>>, vector<1x64xf32>
    %60 = vector.broadcast %59 : vector<1x64xf32> to vector<256x64xf32>
    %61 = arith.addf %58, %60 : vector<256x64xf32>
    %c0_56 = arith.constant 0 : index
    %c0_57 = arith.constant 0 : index
    %c0_58 = arith.constant 0 : index
    %c0_59 = arith.constant 0 : index
    %62 = vector.load %arg2[%c0_56, %c0_57, %c0_58, %c0_59] : memref<1x16x16x64xf32, #tpu.memory_space<vmem>>, vector<1x16x16x64xf32>
    %63 = vector.shape_cast %62 : vector<1x16x16x64xf32> to vector<16x16x64xf32>
    %64 = vector.shape_cast %61 : vector<256x64xf32> to vector<16x16x64xf32>
    %65 = arith.addf %63, %64 : vector<16x16x64xf32>
    %66 = vector.shape_cast %65 : vector<16x16x64xf32> to vector<1x16x16x64xf32>
    %c0_60 = arith.constant 0 : index
    %c0_61 = arith.constant 0 : index
    %c0_62 = arith.constant 0 : index
    %c0_63 = arith.constant 0 : index
    %67 = vector.load %arg8[%c0_60, %c0_61, %c0_62, %c0_63] : memref<1x16x16x64xf32, #tpu.memory_space<vmem>>, vector<1x16x16x64xf32>
    tpu.vector_store %arg8[%c0_60, %c0_61, %c0_62, %c0_63], %66 {strides = array<i32>} : memref<1x16x16x64xf32, #tpu.memory_space<vmem>>, vector<1x16x16x64xf32>,
    return
  }
  func.func @transform_0(%arg0: i32) -> (i32, i32, i32, i32) {
    %c0_i32 = arith.constant 0 : i32
    %c0_i32_0 = arith.constant 0 : i32
    %c0_i32_1 = arith.constant 0 : i32
    %c0_i32_2 = arith.constant 0 : i32
    return %arg0, %c0_i32, %c0_i32_0, %c0_i32_1 : i32, i32, i32, i32
  }
  func.func @transform_1(%arg0: i32) -> (i32, i32, i32, i32) {
    %c0_i32 = arith.constant 0 : i32
    %c0_i32_0 = arith.constant 0 : i32
    %c0_i32_1 = arith.constant 0 : i32
    %c0_i32_2 = arith.constant 0 : i32
    return %arg0, %c0_i32, %c0_i32_0, %c0_i32_1 : i32, i32, i32, i32
  }
  func.func @transform_2(%arg0: i32) -> (i32, i32, i32) {
    %c0_i32 = arith.constant 0 : i32
    %c0_i32_0 = arith.constant 0 : i32
    %c0_i32_1 = arith.constant 0 : i32
    %c0_i32_2 = arith.constant 0 : i32
    return %c0_i32, %c0_i32_0, %c0_i32_1 : i32, i32, i32
  }
  func.func @transform_3(%arg0: i32) -> (i32, i32) {
    %c0_i32 = arith.constant 0 : i32
    %c0_i32_0 = arith.constant 0 : i32
    %c0_i32_1 = arith.constant 0 : i32
    return %c0_i32, %c0_i32_0 : i32, i32
  }
  func.func @transform_4(%arg0: i32) -> (i32, i32, i32) {
    %c0_i32 = arith.constant 0 : i32
    %c0_i32_0 = arith.constant 0 : i32
    %c0_i32_1 = arith.constant 0 : i32
    %c0_i32_2 = arith.constant 0 : i32
    return %c0_i32, %c0_i32_0, %c0_i32_1 : i32, i32, i32
  }
  func.func @transform_5(%arg0: i32) -> (i32, i32) {
    %c0_i32 = arith.constant 0 : i32
    %c0_i32_0 = arith.constant 0 : i32
    %c0_i32_1 = arith.constant 0 : i32
    return %c0_i32, %c0_i32_0 : i32, i32
  }
  func.func @transform_6(%arg0: i32) -> i32 {
    %c0_i32 = arith.constant 0 : i32
    %c0_i32_0 = arith.constant 0 : i32
    return %c0_i32 : i32
  }
  func.func @transform_7(%arg0: i32) -> (i32, i32, i32, i32) {
    %c0_i32 = arith.constant 0 : i32
    %c0_i32_0 = arith.constant 0 : i32
    %c0_i32_1 = arith.constant 0 : i32
    %c0_i32_2 = arith.constant 0 : i32
    return %arg0, %c0_i32, %c0_i32_0, %c0_i32_1 : i32, i32, i32, i32
  }
}

</mosaic_0001>

<llo_original>
// kernel: residual_block_forward.1
$region0: #{residual_block_forward.1}
  #allocation0 [shape = 'u32[]', space=smem, size = 0x4, offset = 0x4, fixed_abs, tag = 'smem constant byte address 0x4 - core index']
  #allocation1 [shape = 'u32[144,128]{1,0:T(1,128)}', space=vmem, size = 0x12000, scoped, tag = 'internal scratch']
  #allocation2 [shape = 'bf16[18,18,64]{2,1,0:T(8,128)(2,1)}', space=vmem, size = 0x1b000, scoped, tag = 'scratch operand']
  #allocation3 [shape = 'f32[1]{0:T(128)S(6)}', space=smem, size = 0x200, scoped, tag = 'scoped memory for residual_block_forward.1']
  %s0 = inlined_call_operand.vmem [shape: bf16[2,18,16,192], index: 0, kind: input, shape index: {}]
  %s1 = inlined_call_operand.vmem [shape: f32[2,16,16,64], index: 1, kind: input, shape index: {}]
  %s2 = inlined_call_operand.vmem [shape: bf16[3,192,64], index: 2, kind: input, shape index: {}]
  %s3 = inlined_call_operand.vmem [shape: f32[1,64], index: 3, kind: input, shape index: {}]
  %s4 = inlined_call_operand.vmem [shape: bf16[3,192,64], index: 4, kind: input, shape index: {}]
  %s5 = inlined_call_operand.vmem [shape: f32[1,64], index: 5, kind: input, shape index: {}]
  %s6 = inlined_call_operand.<no memory space> [shape: f32[1], index: 6, kind: input, shape index: {}]
  %s7 = inlined_call_operand.hbm [shape: f32[2,16,16,64], index: 7, kind: output, shape index: {}]
  %s8 = sld [smem:[#allocation0]]
  $region61: #{residual_block_forward.1} parent=0
    _
  %s10 = ssub.s32 1, %s8
  %s11 = scalar_select 0, %s10, %s8
  %12 = sst [smem:[#allocation3]] %s6
  $region1: #{residual_block_forward.1} parent=0
    #allocation4 [shape = 'u8[262144]{0}', space=vmem, size = 0x40000, scoped, tag = 'output window, operand 0']
    #allocation5 [shape = 's32[2]{0}', space=sflag, size = 0x8, scoped, tag = 'scoped memory for residual_block_forward.1']
    %13 = vsyncpa [#allocation5], 0
    %s14 = scalar_lea.sflag [#allocation5], 1
    %15 = vsyncpa %s14, 0
    loop: start=0, step=1, limit=4
    $region2: #{residual_block_forward.1} parent=1 // loop_pre_header
      _
    $region3: #{residual_block_forward.1} parent=1 // loop_header
      %s17 = sphi 0, %s21
      %p18 = scmp.ge.s32.totalorder %s17, 4
      %s27 = sphi 0, %s29
      %s30 = sphi 0, %s27
      %s31 = sphi 0, %s30
      %s47 = sphi 0, %s31
      %s53 = sphi 0, %s55
      %s56 = sphi 0, %s53
      %s57 = sphi 0, %s56
      %s73 = sphi 0, %s57
      %s77 = sphi 0, %s77
      %s79 = sphi 0, %s77
      %s80 = sphi 0, %s79
      %s94 = sphi 0, %s80
      %s98 = sphi 0, %s98
      %s100 = sphi 0, %s98
      %s101 = sphi 0, %s100
      %s115 = sphi 0, %s101
      %s119 = sphi 0, %s119
      %s121 = sphi 0, %s119
      %s122 = sphi 0, %s121
      %s136 = sphi 0, %s122
      %s140 = sphi 0, %s140
      %s142 = sphi 0, %s140
      %s143 = sphi 0, %s142
      %s157 = sphi 0, %s143
      %s161 = sphi 0, %s161
      %s163 = sphi 0, %s161
      %s164 = sphi 0, %s163
      %s178 = sphi 0, %s164
      %s184 = sphi 0, %s186
      %s187 = sphi 0, %s184
      %s188 = sphi 0, %s187
      %s204 = sphi 0, %s188
    $region4: #{residual_block_forward.1} parent=1 // loop_header_branch
      %20 = sbr.rel (%p18) target = $region8
    $region5: #{residual_block_forward.1} parent=1 // loop_body
      %s22 = ssub.s32 %s17, 1
      %s23 = ssub.s32 %s17, 2
      %s24 = sadd.s32 %s17, 1
      %s25 = ssub.s32 %s17, %s24
      %p26 = scmp.eq.s32.totalorder %s25, 0
      %s28 = sadd.s32 %s27, 1
      %s29 = scalar_select %p26, %s27, %s28
      %p32 = pneg %p26
      %p33 = scmp.eq.s32.totalorder %s17, 1
      %p34 = por %p32, %p33
      %p35 = scmp.ne.s32.totalorder %s27, %s30
      %p36 = scmp.eq.s32.totalorder %s17, 0
      %p37 = por %p35, %p36
      %p38 = scmp.ne.s32.totalorder %s27, %s30
      %p39 = scmp.eq.s32.totalorder %s22, 1
      %p40 = por %p38, %p39
      %p41 = scmp.ne.s32.totalorder %s30, %s31
      %p42 = scmp.eq.s32.totalorder %s22, 0
      %p43 = por %p41, %p42
      %p44 = scmp.ne.s32.totalorder %s30, %s31
      %p45 = scmp.eq.s32.totalorder %s23, 1
      %p46 = por %p44, %p45
      %p48 = scmp.ne.s32.totalorder %s31, %s47
      %p49 = scmp.eq.s32.totalorder %s23, 0
      %p50 = por %p48, %p49
      %s51 = ssub.s32 %s17, %s24
      %p52 = scmp.eq.s32.totalorder %s51, 0
      %s54 = sadd.s32 %s53, 1
      %s55 = scalar_select %p52, %s53, %s54
      %p58 = pneg %p52
      %p59 = scmp.eq.s32.totalorder %s17, 1
      %p60 = por %p58, %p59
      %p61 = scmp.ne.s32.totalorder %s53, %s56
      %p62 = scmp.eq.s32.totalorder %s17, 0
      %p63 = por %p61, %p62
      %p64 = scmp.ne.s32.totalorder %s53, %s56
      %p65 = scmp.eq.s32.totalorder %s22, 1
      %p66 = por %p64, %p65
      %p67 = scmp.ne.s32.totalorder %s56, %s57
      %p68 = scmp.eq.s32.totalorder %s22, 0
      %p69 = por %p67, %p68
      %p70 = scmp.ne.s32.totalorder %s56, %s57
      %p71 = scmp.eq.s32.totalorder %s23, 1
      %p72 = por %p70, %p71
      %p74 = scmp.ne.s32.totalorder %s57, %s73
      %p75 = scmp.eq.s32.totalorder %s23, 0
      %p76 = por %p74, %p75
      %s78 = sadd.s32 %s77, 1
      %p81 = scmp.eq.s32.totalorder %s17, 1
      %p82 = scmp.ne.s32.totalorder %s77, %s79
      %p83 = scmp.eq.s32.totalorder %s17, 0
      %p84 = por %p82, %p83
      %p85 = scmp.ne.s32.totalorder %s77, %s79
      %p86 = scmp.eq.s32.totalorder %s22, 1
      %p87 = por %p85, %p86
      %p88 = scmp.ne.s32.totalorder %s79, %s80
      %p89 = scmp.eq.s32.totalorder %s22, 0
      %p90 = por %p88, %p89
      %p91 = scmp.ne.s32.totalorder %s79, %s80
      %p92 = scmp.eq.s32.totalorder %s23, 1
      %p93 = por %p91, %p92
      %p95 = scmp.ne.s32.totalorder %s80, %s94
      %p96 = scmp.eq.s32.totalorder %s23, 0
      %p97 = por %p95, %p96
      %s99 = sadd.s32 %s98, 1
      %p102 = scmp.eq.s32.totalorder %s17, 1
      %p103 = scmp.ne.s32.totalorder %s98, %s100
      %p104 = scmp.eq.s32.totalorder %s17, 0
      %p105 = por %p103, %p104
      %p106 = scmp.ne.s32.totalorder %s98, %s100
      %p107 = scmp.eq.s32.totalorder %s22, 1
      %p108 = por %p106, %p107
      %p109 = scmp.ne.s32.totalorder %s100, %s101
      %p110 = scmp.eq.s32.totalorder %s22, 0
      %p111 = por %p109, %p110
      %p112 = scmp.ne.s32.totalorder %s100, %s101
      %p113 = scmp.eq.s32.totalorder %s23, 1
      %p114 = por %p112, %p113
      %p116 = scmp.ne.s32.totalorder %s101, %s115
      %p117 = scmp.eq.s32.totalorder %s23, 0
      %p118 = por %p116, %p117
      %s120 = sadd.s32 %s119, 1
      %p123 = scmp.eq.s32.totalorder %s17, 1
      %p124 = scmp.ne.s32.totalorder %s119, %s121
      %p125 = scmp.eq.s32.totalorder %s17, 0
      %p126 = por %p124, %p125
      %p127 = scmp.ne.s32.totalorder %s119, %s121
      %p128 = scmp.eq.s32.totalorder %s22, 1
      %p129 = por %p127, %p128
      %p130 = scmp.ne.s32.totalorder %s121, %s122
      %p131 = scmp.eq.s32.totalorder %s22, 0
      %p132 = por %p130, %p131
      %p133 = scmp.ne.s32.totalorder %s121, %s122
      %p134 = scmp.eq.s32.totalorder %s23, 1
      %p135 = por %p133, %p134
      %p137 = scmp.ne.s32.totalorder %s122, %s136
      %p138 = scmp.eq.s32.totalorder %s23, 0
      %p139 = por %p137, %p138
      %s141 = sadd.s32 %s140, 1
      %p144 = scmp.eq.s32.totalorder %s17, 1
      %p145 = scmp.ne.s32.totalorder %s140, %s142
      %p146 = scmp.eq.s32.totalorder %s17, 0
      %p147 = por %p145, %p146
      %p148 = scmp.ne.s32.totalorder %s140, %s142
      %p149 = scmp.eq.s32.totalorder %s22, 1
      %p150 = por %p148, %p149
      %p151 = scmp.ne.s32.totalorder %s142, %s143
      %p152 = scmp.eq.s32.totalorder %s22, 0
      %p153 = por %p151, %p152
      %p154 = scmp.ne.s32.totalorder %s142, %s143
      %p155 = scmp.eq.s32.totalorder %s23, 1
      %p156 = por %p154, %p155
      %p158 = scmp.ne.s32.totalorder %s143, %s157
      %p159 = scmp.eq.s32.totalorder %s23, 0
      %p160 = por %p158, %p159
      %s162 = sadd.s32 %s161, 1
      %p165 = scmp.eq.s32.totalorder %s17, 1
      %p166 = scmp.ne.s32.totalorder %s161, %s163
      %p167 = scmp.eq.s32.totalorder %s17, 0
      %p168 = por %p166, %p167
      %p169 = scmp.ne.s32.totalorder %s161, %s163
      %p170 = scmp.eq.s32.totalorder %s22, 1
      %p171 = por %p169, %p170
      %p172 = scmp.ne.s32.totalorder %s163, %s164
      %p173 = scmp.eq.s32.totalorder %s22, 0
      %p174 = por %p172, %p173
      %p175 = scmp.ne.s32.totalorder %s163, %s164
      %p176 = scmp.eq.s32.totalorder %s23, 1
      %p177 = por %p175, %p176
      %p179 = scmp.ne.s32.totalorder %s164, %s178
      %p180 = scmp.eq.s32.totalorder %s23, 0
      %p181 = por %p179, %p180
      %s182 = ssub.s32 %s17, %s24
      %p183 = scmp.eq.s32.totalorder %s182, 0
      %s185 = sadd.s32 %s184, 1
      %s186 = scalar_select %p183, %s184, %s185
      %p189 = pneg %p183
      %p190 = scmp.eq.s32.totalorder %s17, 1
      %p191 = por %p189, %p190
      %p192 = scmp.ne.s32.totalorder %s184, %s187
      %p193 = scmp.eq.s32.totalorder %s17, 0
      %p194 = por %p192, %p193
      %p195 = scmp.ne.s32.totalorder %s184, %s187
      %p196 = scmp.eq.s32.totalorder %s22, 1
      %p197 = por %p195, %p196
      %p198 = scmp.ne.s32.totalorder %s187, %s188
      %p199 = scmp.eq.s32.totalorder %s22, 0
      %p200 = por %p198, %p199
      %p201 = scmp.ne.s32.totalorder %s187, %s188
      %p202 = scmp.eq.s32.totalorder %s23, 1
      %p203 = por %p201, %p202
      %p205 = scmp.ne.s32.totalorder %s188, %s204
      %p206 = scmp.eq.s32.totalorder %s23, 0
      %p207 = por %p205, %p206
      %p208 = scmp.le.s32.totalorder 1, %s17
      %p209 = scmp.lt.s32.totalorder %s17, 3
      %p210 = pnand %p208, %p209
      %p211 = pneg %p210
      // Predicated region
      $region9: #{residual_block_forward.1} parent=5 // pred_check
        _
      $region10: #{residual_block_forward.1} parent=5 // pred_check_branch
        %213 = sbr.rel (%p210) target = $region12
      $region11: #{residual_block_forward.1} parent=5 // pred_region
        %s214 = ssub.s32 %s17, 1
        // Predicated region
        $region13: #{residual_block_forward.1} parent=11 // pred_check
          %p215 = pneg %p90
        $region14: #{residual_block_forward.1} parent=11 // pred_check_branch
          %217 = sbr.rel (%p215) target = $region16
        $region15: #{residual_block_forward.1} parent=11 // pred_region
          _
        $region16: #{residual_block_forward.1} parent=11 // pred_fallthru
          _
        // Predicated region
        $region17: #{residual_block_forward.1} parent=11 // pred_check
          %p218 = pneg %p111
        $region18: #{residual_block_forward.1} parent=11 // pred_check_branch
          %220 = sbr.rel (%p218) target = $region20
        $region19: #{residual_block_forward.1} parent=11 // pred_region
          _
        $region20: #{residual_block_forward.1} parent=11 // pred_fallthru
          _
        // Predicated region
        $region21: #{residual_block_forward.1} parent=11 // pred_check
          %p221 = pneg %p132
        $region22: #{residual_block_forward.1} parent=11 // pred_check_branch
          %223 = sbr.rel (%p221) target = $region24
        $region23: #{residual_block_forward.1} parent=11 // pred_region
          _
        $region24: #{residual_block_forward.1} parent=11 // pred_fallthru
          _
        // Predicated region
        $region25: #{residual_block_forward.1} parent=11 // pred_check
          %p224 = pneg %p153
        $region26: #{residual_block_forward.1} parent=11 // pred_check_branch
          %226 = sbr.rel (%p224) target = $region28
        $region27: #{residual_block_forward.1} parent=11 // pred_region
          _
        $region28: #{residual_block_forward.1} parent=11 // pred_fallthru
          _
        // Predicated region
        $region29: #{residual_block_forward.1} parent=11 // pred_check
          %p227 = pneg %p174
        $region30: #{residual_block_forward.1} parent=11 // pred_check_branch
          %229 = sbr.rel (%p227) target = $region32
        $region31: #{residual_block_forward.1} parent=11 // pred_region
          _
        $region32: #{residual_block_forward.1} parent=11 // pred_fallthru
          _
      $region12: #{residual_block_forward.1} parent=5 // pred_fallthru
        _
      %p230 = scmp.lt.s32.totalorder %s17, 2
      // Predicated region
      $region33: #{residual_block_forward.1} parent=5 // pred_check
        %p231 = pneg %p230
      $region34: #{residual_block_forward.1} parent=5 // pred_check_branch
        %233 = sbr.rel (%p231) target = $region36
      $region35: #{residual_block_forward.1} parent=5 // pred_region
        // Predicated region
        $region37: #{residual_block_forward.1} parent=35 // pred_check
          %p234 = pneg %p37
        $region38: #{residual_block_forward.1} parent=35 // pred_check_branch
          %236 = sbr.rel (%p234) target = $region40
        $region39: #{residual_block_forward.1} parent=35 // pred_region
          %p237 = scmp.lt.s32.totalorder %s17, 1
          %s238 = scalar_select %p237, %s17, 1
          %s239 = smul.addr %s238, 72
          %s240 = smul.addr %s239, 4
          %s241 = scalar_lea.vmem %s0, %s240
        $region40: #{residual_block_forward.1} parent=35 // pred_fallthru
          _
        // Predicated region
        $region41: #{residual_block_forward.1} parent=35 // pred_check
          %p242 = pneg %p63
        $region42: #{residual_block_forward.1} parent=35 // pred_check_branch
          %244 = sbr.rel (%p242) target = $region44
        $region43: #{residual_block_forward.1} parent=35 // pred_region
          %p245 = scmp.lt.s32.totalorder %s17, 1
          %s246 = scalar_select %p245, %s17, 1
          %s247 = smul.addr %s246, 32
          %s248 = smul.addr %s247, 8
          %s249 = scalar_lea.vmem %s1, %s248
        $region44: #{residual_block_forward.1} parent=35 // pred_fallthru
          _
      $region36: #{residual_block_forward.1} parent=5 // pred_fallthru
        _
      %p250 = scmp.le.s32.totalorder 1, %s17
      %p251 = scmp.lt.s32.totalorder %s17, 3
      %p252 = pnand %p250, %p251
      %p253 = pneg %p252
      // Predicated region
      $region45: #{residual_block_forward.1} parent=5 // pred_check
        _
      $region46: #{residual_block_forward.1} parent=5 // pred_check_branch
        %255 = sbr.rel (%p252) target = $region48
      $region47: #{residual_block_forward.1} parent=5 // pred_region
        %s256 = ssub.s32 %s17, 1
        %p257 = scmp.lt.s32.totalorder %s22, 1
        %s258 = scalar_select %p257, %s22, 1
        %s259 = smul.addr %s258, 72
        %s260 = smul.addr %s259, 4
        %s261 = scalar_lea.vmem %s0, %s260
        %p262 = pneg %p43
        %p263 = pneg %p40
        %p264 = scmp.lt.s32.totalorder %s22, 1
        %s265 = scalar_select %p264, %s22, 1
        %s266 = smul.addr %s265, 32
        %s267 = smul.addr %s266, 8
        %s268 = scalar_lea.vmem %s1, %s267
        %p269 = pneg %p69
        %p270 = pneg %p66
        %p271 = pneg %p90
        %p272 = pneg %p87
        %p273 = pneg %p111
        %p274 = pneg %p108
        %p275 = pneg %p132
        %p276 = pneg %p129
        %p277 = pneg %p153
        %p278 = pneg %p150
        %p279 = pneg %p174
        %p280 = pneg %p171
        %p281 = pneg %p200
        %p282 = pneg %p197
        %s283 = sand.u32 %s187, 1
        %s284 = scalar_lea.sflag [#allocation5], %s283
        %s285 = sand.u32 %s187, 1
        %s286 = smul.addr %s285, 256
        %s287 = scalar_lea.vmem [#allocation4], %s286
        %p288 = scmp.lt.s32.totalorder %s22, 1
        %s289 = scalar_select %p288, %s22, 1
        %s290 = smul.addr %s289, 72
        %s291 = smul.addr %s290, 4
        %s292 = scalar_lea.vmem %s0, %s291
        %p293 = scmp.lt.s32.totalorder %s22, 1
        %s294 = scalar_select %p293, %s22, 1
        %s295 = smul.addr %s294, 32
        %s296 = smul.addr %s295, 8
        %s297 = scalar_lea.vmem %s1, %s296
        %v299 = vld [vmem:[%s292] sm:$0xff]
        %v300 = vld [vmem:[%s292 + $0x8] sm:$0xff]
        %v301 = vld [vmem:[%s292 + $0x10] sm:$0xff]
        %v302 = vld [vmem:[%s292 + $0x18] sm:$0xff]
        %v303 = vld [vmem:[%s292 + $0x20] sm:$0xff]
        %v304 = vld [vmem:[%s292 + $0x28] sm:$0xff]
        %v305 = vld [vmem:[%s292 + $0x30] sm:$0xff]
        %v306 = vld [vmem:[%s292 + $0x38] sm:$0xff]
        %v307 = vld [vmem:[%s292 + $0x40] sm:$0xff]
        %v308 = vld [vmem:[%s292 + $0x48] sm:$0xff]
        %v309 = vld [vmem:[%s292 + $0x50] sm:$0xff]
        %v310 = vld [vmem:[%s292 + $0x58] sm:$0xff]
        %v311 = vld [vmem:[%s292 + $0x60] sm:$0xff]
        %v312 = vld [vmem:[%s292 + $0x68] sm:$0xff]
        %v313 = vld [vmem:[%s292 + $0x70] sm:$0xff]
        %v314 = vld [vmem:[%s292 + $0x78] sm:$0xff]
        %v315 = vld [vmem:[%s292 + $0x80] sm:$0xff]
        %v316 = vld [vmem:[%s292 + $0x88] sm:$0xff]
        %v317 = vld [vmem:[%s292 + $0x90] sm:$0xff]
        %v318 = vld [vmem:[%s292 + $0x98] sm:$0xff]
        %v319 = vld [vmem:[%s292 + $0xa0] sm:$0xff]
        %v320 = vld [vmem:[%s292 + $0xa8] sm:$0xff]
        %v321 = vld [vmem:[%s292 + $0xb0] sm:$0xff]
        %v322 = vld [vmem:[%s292 + $0xb8] sm:$0xff]
        %v323 = vld [vmem:[%s292 + $0xc0] sm:$0xff]
        %v324 = vld [vmem:[%s292 + $0xc8] sm:$0xff]
        %v325 = vld [vmem:[%s292 + $0xd0] sm:$0xff]
        %v326 = vld [vmem:[%s292 + $0xd8] sm:$0xff]
        %v327 = vld [vmem:[%s292 + $0xe0] sm:$0xff]
        %v328 = vld [vmem:[%s292 + $0xe8] sm:$0xff]
        %v329 = vld [vmem:[%s292 + $0xf0] sm:$0xff]
        %v330 = vld [vmem:[%s292 + $0xf8] sm:$0xff]
        %v331 = vld [vmem:[%s2] sm:$0xf]
        %v332 = vld [vmem:[%s2 + $0x4] sm:$0xf]
        %v333 = vld [vmem:[%s2 + $0x8] sm:$0xf]
        %v334 = vld [vmem:[%s2 + $0xc] sm:$0xf]
        %v335 = vld [vmem:[%s2 + $0x10] sm:$0xf]
        %v336 = vld [vmem:[%s2 + $0x14] sm:$0xf]
        %v337 = vld [vmem:[%s2 + $0x18] sm:$0xf]
        %v338 = vld [vmem:[%s2 + $0x1c] sm:$0xf]
        %v339 = vld [vmem:[%s2 + $0x20] sm:$0xf]
        %v340 = vld [vmem:[%s2 + $0x24] sm:$0xf]
        %v341 = vld [vmem:[%s2 + $0x28] sm:$0xf]
        %v342 = vld [vmem:[%s2 + $0x2c] sm:$0xf]
        %v343 = vld [vmem:[%s2 + $0x30] sm:$0xf]
        %v344 = vld [vmem:[%s2 + $0x34] sm:$0xf]
        %v345 = vld [vmem:[%s2 + $0x38] sm:$0xf]
        %v346 = vld [vmem:[%s2 + $0x3c] sm:$0xf]
        %v347 = vld [vmem:[%s2 + $0x40] sm:$0xf]
        %v348 = vld [vmem:[%s2 + $0x44] sm:$0xf]
        %v349 = vld [vmem:[%s2 + $0x48] sm:$0xf]
        %v350 = vld [vmem:[%s2 + $0x4c] sm:$0xf]
        %v351 = vld [vmem:[%s2 + $0x50] sm:$0xf]
        %v352 = vld [vmem:[%s2 + $0x54] sm:$0xf]
        %v353 = vld [vmem:[%s2 + $0x58] sm:$0xf]
        %v354 = vld [vmem:[%s2 + $0x5c] sm:$0xf]
        %s355 = scalar_lea.vmem %s292, 16
        %v356 = vld [vmem:[%s355] sm:$0xff]
        %v357 = vld [vmem:[%s355 + $0x8] sm:$0xff]
        %v358 = vld [vmem:[%s355 + $0x10] sm:$0xff]
        %v359 = vld [vmem:[%s355 + $0x18] sm:$0xff]
        %v360 = vld [vmem:[%s355 + $0x20] sm:$0xff]
        %v361 = vld [vmem:[%s355 + $0x28] sm:$0xff]
        %v362 = vld [vmem:[%s355 + $0x30] sm:$0xff]
        %v363 = vld [vmem:[%s355 + $0x38] sm:$0xff]
        %v364 = vld [vmem:[%s355 + $0x40] sm:$0xff]
        %v365 = vld [vmem:[%s355 + $0x48] sm:$0xff]
        %v366 = vld [vmem:[%s355 + $0x50] sm:$0xff]
        %v367 = vld [vmem:[%s355 + $0x58] sm:$0xff]
        %v368 = vld [vmem:[%s355 + $0x60] sm:$0xff]
        %v369 = vld [vmem:[%s355 + $0x68] sm:$0xff]
        %v370 = vld [vmem:[%s355 + $0x70] sm:$0xff]
        %v371 = vld [vmem:[%s355 + $0x78] sm:$0xff]
        %v372 = vld [vmem:[%s355 + $0x80] sm:$0xff]
        %v373 = vld [vmem:[%s355 + $0x88] sm:$0xff]
        %v374 = vld [vmem:[%s355 + $0x90] sm:$0xff]
        %v375 = vld [vmem:[%s355 + $0x98] sm:$0xff]
        %v376 = vld [vmem:[%s355 + $0xa0] sm:$0xff]
        %v377 = vld [vmem:[%s355 + $0xa8] sm:$0xff]
        %v378 = vld [vmem:[%s355 + $0xb0] sm:$0xff]
        %v379 = vld [vmem:[%s355 + $0xb8] sm:$0xff]
        %v380 = vld [vmem:[%s355 + $0xc0] sm:$0xff]
        %v381 = vld [vmem:[%s355 + $0xc8] sm:$0xff]
        %v382 = vld [vmem:[%s355 + $0xd0] sm:$0xff]
        %v383 = vld [vmem:[%s355 + $0xd8] sm:$0xff]
        %v384 = vld [vmem:[%s355 + $0xe0] sm:$0xff]
        %v385 = vld [vmem:[%s355 + $0xe8] sm:$0xff]
        %v386 = vld [vmem:[%s355 + $0xf0] sm:$0xff]
        %v387 = vld [vmem:[%s355 + $0xf8] sm:$0xff]
        %s388 = scalar_lea.vmem %s2, 96
        %v389 = vld [vmem:[%s388] sm:$0xf]
        %v390 = vld [vmem:[%s388 + $0x4] sm:$0xf]
        %v391 = vld [vmem:[%s388 + $0x8] sm:$0xf]
        %v392 = vld [vmem:[%s388 + $0xc] sm:$0xf]
        %v393 = vld [vmem:[%s388 + $0x10] sm:$0xf]
        %v394 = vld [vmem:[%s388 + $0x14] sm:$0xf]
        %v395 = vld [vmem:[%s388 + $0x18] sm:$0xf]
        %v396 = vld [vmem:[%s388 + $0x1c] sm:$0xf]
        %v397 = vld [vmem:[%s388 + $0x20] sm:$0xf]
        %v398 = vld [vmem:[%s388 + $0x24] sm:$0xf]
        %v399 = vld [vmem:[%s388 + $0x28] sm:$0xf]
        %v400 = vld [vmem:[%s388 + $0x2c] sm:$0xf]
        %v401 = vld [vmem:[%s388 + $0x30] sm:$0xf]
        %v402 = vld [vmem:[%s388 + $0x34] sm:$0xf]
        %v403 = vld [vmem:[%s388 + $0x38] sm:$0xf]
        %v404 = vld [vmem:[%s388 + $0x3c] sm:$0xf]
        %v405 = vld [vmem:[%s388 + $0x40] sm:$0xf]
        %v406 = vld [vmem:[%s388 + $0x44] sm:$0xf]
        %v407 = vld [vmem:[%s388 + $0x48] sm:$0xf]
        %v408 = vld [vmem:[%s388 + $0x4c] sm:$0xf]
        %v409 = vld [vmem:[%s388 + $0x50] sm:$0xf]
        %v410 = vld [vmem:[%s388 + $0x54] sm:$0xf]
        %v411 = vld [vmem:[%s388 + $0x58] sm:$0xf]
        %v412 = vld [vmem:[%s388 + $0x5c] sm:$0xf]
        %v445 = vunpack.c.l.b16 %v356
        %v446 = vunpack.c.h.b16 %v356
        %v447 = vunpack.c.l.b16 %v357
        %v448 = vunpack.c.h.b16 %v357
        %v449 = vunpack.c.l.b16 %v358
        %v450 = vunpack.c.h.b16 %v358
        %v451 = vunpack.c.l.b16 %v359
        %v452 = vunpack.c.h.b16 %v359
        %v453 = vunpack.c.l.b16 %v360
        %v454 = vunpack.c.h.b16 %v360
        %v455 = vunpack.c.l.b16 %v361
        %v456 = vunpack.c.h.b16 %v361
        %v457 = vunpack.c.l.b16 %v362
        %v458 = vunpack.c.h.b16 %v362
        %v459 = vunpack.c.l.b16 %v363
        %v460 = vunpack.c.h.b16 %v363
        %v461 = vunpack.c.l.b16 %v364
        %v462 = vunpack.c.h.b16 %v364
        %v463 = vunpack.c.l.b16 %v365
        %v464 = vunpack.c.h.b16 %v365
        %v465 = vunpack.c.l.b16 %v366
        %v466 = vunpack.c.h.b16 %v366
        %v467 = vunpack.c.l.b16 %v367
        %v468 = vunpack.c.h.b16 %v367
        %v469 = vunpack.c.l.b16 %v368
        %v470 = vunpack.c.h.b16 %v368
        %v471 = vunpack.c.l.b16 %v369
        %v472 = vunpack.c.h.b16 %v369
        %v473 = vunpack.c.l.b16 %v370
        %v474 = vunpack.c.h.b16 %v370
        %v475 = vunpack.c.l.b16 %v371
        %v476 = vunpack.c.h.b16 %v371
        %v477 = vunpack.c.l.b16 %v372
        %v478 = vunpack.c.h.b16 %v372
        %v479 = vunpack.c.l.b16 %v373
        %v480 = vunpack.c.h.b16 %v373
        %v481 = vunpack.c.l.b16 %v374
        %v482 = vunpack.c.h.b16 %v374
        %v483 = vunpack.c.l.b16 %v375
        %v484 = vunpack.c.h.b16 %v375
        %v485 = vunpack.c.l.b16 %v376
        %v486 = vunpack.c.h.b16 %v376
        %v487 = vunpack.c.l.b16 %v377
        %v488 = vunpack.c.h.b16 %v377
        %v489 = vunpack.c.l.b16 %v378
        %v490 = vunpack.c.h.b16 %v378
        %v491 = vunpack.c.l.b16 %v379
        %v492 = vunpack.c.h.b16 %v379
        %v493 = vunpack.c.l.b16 %v380
        %v494 = vunpack.c.h.b16 %v380
        %v495 = vunpack.c.l.b16 %v381
        %v496 = vunpack.c.h.b16 %v381
        %v497 = vunpack.c.l.b16 %v382
        %v498 = vunpack.c.h.b16 %v382
        %v499 = vunpack.c.l.b16 %v383
        %v500 = vunpack.c.h.b16 %v383
        %v501 = vunpack.c.l.b16 %v384
        %v502 = vunpack.c.h.b16 %v384
        %v503 = vunpack.c.l.b16 %v385
        %v504 = vunpack.c.h.b16 %v385
        %v505 = vunpack.c.l.b16 %v386
        %v506 = vunpack.c.h.b16 %v386
        %v507 = vunpack.c.l.b16 %v387
        %v508 = vunpack.c.h.b16 %v387
        %v509 = vpack.c.b16 %v447, %v445
        %v510 = vpack.c.b16 %v448, %v446
        %v511 = vpack.c.b16 %v451, %v449
        %v512 = vpack.c.b16 %v452, %v450
        %v513 = vpack.c.b16 %v455, %v453
        %v514 = vpack.c.b16 %v456, %v454
        %v515 = vpack.c.b16 %v459, %v457
        %v516 = vpack.c.b16 %v460, %v458
        %v517 = vpack.c.b16 %v463, %v461
        %v518 = vpack.c.b16 %v464, %v462
        %v519 = vpack.c.b16 %v467, %v465
        %v520 = vpack.c.b16 %v468, %v466
        %v521 = vpack.c.b16 %v471, %v469
        %v522 = vpack.c.b16 %v472, %v470
        %v523 = vpack.c.b16 %v475, %v473
        %v524 = vpack.c.b16 %v476, %v474
        %v525 = vpack.c.b16 %v479, %v477
        %v526 = vpack.c.b16 %v480, %v478
        %v527 = vpack.c.b16 %v483, %v481
        %v528 = vpack.c.b16 %v484, %v482
        %v529 = vpack.c.b16 %v487, %v485
        %v530 = vpack.c.b16 %v488, %v486
        %v531 = vpack.c.b16 %v491, %v489
        %v532 = vpack.c.b16 %v492, %v490
        %v533 = vpack.c.b16 %v495, %v493
        %v534 = vpack.c.b16 %v496, %v494
        %v535 = vpack.c.b16 %v499, %v497
        %v536 = vpack.c.b16 %v500, %v498
        %v537 = vpack.c.b16 %v503, %v501
        %v538 = vpack.c.b16 %v504, %v502
        %v539 = vpack.c.b16 %v507, %v505
        %v540 = vpack.c.b16 %v508, %v506
        %v581 = vunpack.c.l.b16 %v389
        %v582 = vunpack.c.l.b16 %v390
        %v583 = vunpack.c.l.b16 %v391
        %v584 = vunpack.c.l.b16 %v392
        %v585 = vunpack.c.l.b16 %v393
        %v586 = vunpack.c.l.b16 %v394
        %v587 = vunpack.c.l.b16 %v395
        %v588 = vunpack.c.l.b16 %v396
        %v589 = vunpack.c.l.b16 %v397
        %v590 = vunpack.c.l.b16 %v398
        %v591 = vunpack.c.l.b16 %v399
        %v592 = vunpack.c.l.b16 %v400
        %v593 = vunpack.c.l.b16 %v401
        %v594 = vunpack.c.l.b16 %v402
        %v595 = vunpack.c.l.b16 %v403
        %v596 = vunpack.c.l.b16 %v404
        %v597 = vunpack.c.l.b16 %v405
        %v598 = vunpack.c.l.b16 %v406
        %v599 = vunpack.c.l.b16 %v407
        %v600 = vunpack.c.l.b16 %v408
        %v601 = vunpack.c.l.b16 %v409
        %v602 = vunpack.c.l.b16 %v410
        %v603 = vunpack.c.l.b16 %v411
        %v604 = vunpack.c.l.b16 %v412
        %v605 = vpack.c.b16 %v582, %v581
        %v606 = vpack.c.b16 %v584, %v583
        %v607 = vpack.c.b16 %v586, %v585
        %v608 = vpack.c.b16 %v588, %v587
        %v609 = vpack.c.b16 %v590, %v589
        %v610 = vpack.c.b16 %v592, %v591
        %v611 = vpack.c.b16 %v594, %v593
        %v612 = vpack.c.b16 %v596, %v595
        %v613 = vpack.c.b16 %v598, %v597
        %v614 = vpack.c.b16 %v600, %v599
        %v615 = vpack.c.b16 %v602, %v601
        %v616 = vpack.c.b16 %v604, %v603
        %vm629 = vcmask 523264
        %v631 = vsel %vm629, %v510, 0
        %v634 = vsel %vm629, %v512, 0
        %v637 = vsel %vm629, %v514, 0
        %v640 = vsel %vm629, %v516, 0
        %v643 = vsel %vm629, %v518, 0
        %v646 = vsel %vm629, %v520, 0
        %v649 = vsel %vm629, %v522, 0
        %v652 = vsel %vm629, %v524, 0
        %v655 = vsel %vm629, %v526, 0
        %v658 = vsel %vm629, %v528, 0
        %v661 = vsel %vm629, %v530, 0
        %v664 = vsel %vm629, %v532, 0
        %v667 = vsel %vm629, %v534, 0
        %v670 = vsel %vm629, %v536, 0
        %v673 = vsel %vm629, %v538, 0
        %v676 = vsel %vm629, %v540, 0
        %678 = vmatprep.subr.bf16.mxu0 0
        %679 = vmatpush1.bf16.msra.mxu0 %v612
        %680 = vmatprep.subr.bf16.mxu0 0
        %681 = vmatpush1.bf16.msra.mxu0 %v611
        %682 = vmatprep.subr.bf16.mxu0 0
        %683 = vmatpush1.bf16.msra.mxu0 %v610
        %684 = vmatprep.subr.bf16.mxu0 0
        %685 = vmatpush1.bf16.msra.mxu0 %v609
        %686 = vmatprep.subr.bf16.mxu0 0
        %687 = vmatpush1.bf16.msra.mxu0 %v608
        %688 = vmatprep.subr.bf16.mxu0 0
        %689 = vmatpush1.bf16.msra.mxu0 %v607
        %690 = vmatprep.subr.bf16.mxu0 0
        %691 = vmatpush1.bf16.msra.mxu0 %v606
        %692 = vmatprep.subr.bf16.mxu0 0
        %693 = vmatpush1.bf16.msra.mxu0 %v605
        %694 = vmatprep.subr.bf16.mxu0 0
        %695 = vmatpush2.bf16.msra.mxu0 0
        %696 = vmatprep.subr.bf16.mxu0 0
        %697 = vmatpush2.bf16.msra.mxu0 0
        %698 = vmatprep.subr.bf16.mxu0 0
        %699 = vmatpush2.bf16.msra.mxu0 0
        %700 = vmatprep.subr.bf16.mxu0 0
        %701 = vmatpush2.bf16.msra.mxu0 0
        %702 = vmatprep.subr.bf16.mxu0 0
        %703 = vmatpush2.bf16.msra.mxu0 %v616
        %704 = vmatprep.subr.bf16.mxu0 0
        %705 = vmatpush2.bf16.msra.mxu0 %v615
        %706 = vmatprep.subr.bf16.mxu0 0
        %707 = vmatpush2.bf16.msra.mxu0 %v614
        %708 = vmatprep.subr.bf16.mxu0 0
        %709 = vmatpush2.bf16.msra.mxu0 %v613
        %710 = vmatprep.mubr.bf16.mxu0 %v631
        %711 = vmatmul.mubr.bf16.gmra.mxu0 %v509
        %v712 = vpop.f32.mrf.mxu0
        %v713 = vadd.f32 0.0, %v712
        %v714 = vpop.f32.mrf.mxu0
        %v715 = vpop.f32.mrf.mxu0
        %v716 = vadd.f32 0.0, %v715
        %v717 = vpop.f32.mrf.mxu0
        %718 = vmatprep.mubr.bf16.mxu0 %v634
        %719 = vmatmul.mubr.bf16.gmra.mxu0 %v511
        %v720 = vpop.f32.mrf.mxu0
        %v721 = vadd.f32 0.0, %v720
        %v722 = vpop.f32.mrf.mxu0
        %v723 = vpop.f32.mrf.mxu0
        %v724 = vadd.f32 0.0, %v723
        %v725 = vpop.f32.mrf.mxu0
        %726 = vmatprep.mubr.bf16.mxu0 %v637
        %727 = vmatmul.mubr.bf16.gmra.mxu0 %v513
        %v728 = vpop.f32.mrf.mxu0
        %v729 = vadd.f32 0.0, %v728
        %v730 = vpop.f32.mrf.mxu0
        %v731 = vpop.f32.mrf.mxu0
        %v732 = vadd.f32 0.0, %v731
        %v733 = vpop.f32.mrf.mxu0
        %734 = vmatprep.mubr.bf16.mxu0 %v640
        %735 = vmatmul.mubr.bf16.gmra.mxu0 %v515
        %v736 = vpop.f32.mrf.mxu0
        %v737 = vadd.f32 0.0, %v736
        %v738 = vpop.f32.mrf.mxu0
        %v739 = vpop.f32.mrf.mxu0
        %v740 = vadd.f32 0.0, %v739
        %v741 = vpop.f32.mrf.mxu0
        %742 = vmatprep.mubr.bf16.mxu0 %v643
        %743 = vmatmul.mubr.bf16.gmra.mxu0 %v517
        %v744 = vpop.f32.mrf.mxu0
        %v745 = vadd.f32 0.0, %v744
        %v746 = vpop.f32.mrf.mxu0
        %v747 = vpop.f32.mrf.mxu0
        %v748 = vadd.f32 0.0, %v747
        %v749 = vpop.f32.mrf.mxu0
        %750 = vmatprep.mubr.bf16.mxu0 %v646
        %751 = vmatmul.mubr.bf16.gmra.mxu0 %v519
        %v752 = vpop.f32.mrf.mxu0
        %v753 = vadd.f32 0.0, %v752
        %v754 = vpop.f32.mrf.mxu0
        %v755 = vpop.f32.mrf.mxu0
        %v756 = vadd.f32 0.0, %v755
        %v757 = vpop.f32.mrf.mxu0
        %758 = vmatprep.mubr.bf16.mxu0 %v649
        %759 = vmatmul.mubr.bf16.gmra.mxu0 %v521
        %v760 = vpop.f32.mrf.mxu0
        %v761 = vadd.f32 0.0, %v760
        %v762 = vpop.f32.mrf.mxu0
        %v763 = vpop.f32.mrf.mxu0
        %v764 = vadd.f32 0.0, %v763
        %v765 = vpop.f32.mrf.mxu0
        %766 = vmatprep.mubr.bf16.mxu0 %v652
        %767 = vmatmul.mubr.bf16.gmra.mxu0 %v523
        %v768 = vpop.f32.mrf.mxu0
        %v769 = vadd.f32 0.0, %v768
        %v770 = vpop.f32.mrf.mxu0
        %v771 = vpop.f32.mrf.mxu0
        %v772 = vadd.f32 0.0, %v771
        %v773 = vpop.f32.mrf.mxu0
        %774 = vmatprep.mubr.bf16.mxu0 %v655
        %775 = vmatmul.mubr.bf16.gmra.mxu0 %v525
        %v776 = vpop.f32.mrf.mxu0
        %v777 = vadd.f32 0.0, %v776
        %v778 = vpop.f32.mrf.mxu0
        %v779 = vpop.f32.mrf.mxu0
        %v780 = vadd.f32 0.0, %v779
        %v781 = vpop.f32.mrf.mxu0
        %782 = vmatprep.mubr.bf16.mxu0 %v658
        %783 = vmatmul.mubr.bf16.gmra.mxu0 %v527
        %v784 = vpop.f32.mrf.mxu0
        %v785 = vadd.f32 0.0, %v784
        %v786 = vpop.f32.mrf.mxu0
        %v787 = vpop.f32.mrf.mxu0
        %v788 = vadd.f32 0.0, %v787
        %v789 = vpop.f32.mrf.mxu0
        %790 = vmatprep.mubr.bf16.mxu0 %v661
        %791 = vmatmul.mubr.bf16.gmra.mxu0 %v529
        %v792 = vpop.f32.mrf.mxu0
        %v793 = vadd.f32 0.0, %v792
        %v794 = vpop.f32.mrf.mxu0
        %v795 = vpop.f32.mrf.mxu0
        %v796 = vadd.f32 0.0, %v795
        %v797 = vpop.f32.mrf.mxu0
        %798 = vmatprep.mubr.bf16.mxu0 %v664
        %799 = vmatmul.mubr.bf16.gmra.mxu0 %v531
        %v800 = vpop.f32.mrf.mxu0
        %v801 = vadd.f32 0.0, %v800
        %v802 = vpop.f32.mrf.mxu0
        %v803 = vpop.f32.mrf.mxu0
        %v804 = vadd.f32 0.0, %v803
        %v805 = vpop.f32.mrf.mxu0
        %806 = vmatprep.mubr.bf16.mxu0 %v667
        %807 = vmatmul.mubr.bf16.gmra.mxu0 %v533
        %v808 = vpop.f32.mrf.mxu0
        %v809 = vadd.f32 0.0, %v808
        %v810 = vpop.f32.mrf.mxu0
        %v811 = vpop.f32.mrf.mxu0
        %v812 = vadd.f32 0.0, %v811
        %v813 = vpop.f32.mrf.mxu0
        %814 = vmatprep.mubr.bf16.mxu0 %v670
        %815 = vmatmul.mubr.bf16.gmra.mxu0 %v535
        %v816 = vpop.f32.mrf.mxu0
        %v817 = vadd.f32 0.0, %v816
        %v818 = vpop.f32.mrf.mxu0
        %v819 = vpop.f32.mrf.mxu0
        %v820 = vadd.f32 0.0, %v819
        %v821 = vpop.f32.mrf.mxu0
        %822 = vmatprep.mubr.bf16.mxu0 %v673
        %823 = vmatmul.mubr.bf16.gmra.mxu0 %v537
        %v824 = vpop.f32.mrf.mxu0
        %v825 = vadd.f32 0.0, %v824
        %v826 = vpop.f32.mrf.mxu0
        %v827 = vpop.f32.mrf.mxu0
        %v828 = vadd.f32 0.0, %v827
        %v829 = vpop.f32.mrf.mxu0
        %830 = vmatprep.mubr.bf16.mxu0 %v676
        %831 = vmatmul.mubr.bf16.gmra.mxu0 %v539
        %v832 = vpop.f32.mrf.mxu0
        %v833 = vadd.f32 0.0, %v832
        %v834 = vpop.f32.mrf.mxu0
        %v835 = vpop.f32.mrf.mxu0
        %v836 = vadd.f32 0.0, %v835
        %v837 = vpop.f32.mrf.mxu0
        %838 = vdwg.mxu0
        %v871 = vunpack.c.l.b16 %v299
        %v872 = vunpack.c.h.b16 %v299
        %v873 = vunpack.c.l.b16 %v300
        %v874 = vunpack.c.h.b16 %v300
        %v875 = vunpack.c.l.b16 %v301
        %v876 = vunpack.c.h.b16 %v301
        %v877 = vunpack.c.l.b16 %v302
        %v878 = vunpack.c.h.b16 %v302
        %v879 = vunpack.c.l.b16 %v303
        %v880 = vunpack.c.h.b16 %v303
        %v881 = vunpack.c.l.b16 %v304
        %v882 = vunpack.c.h.b16 %v304
        %v883 = vunpack.c.l.b16 %v305
        %v884 = vunpack.c.h.b16 %v305
        %v885 = vunpack.c.l.b16 %v306
        %v886 = vunpack.c.h.b16 %v306
        %v887 = vunpack.c.l.b16 %v307
        %v888 = vunpack.c.h.b16 %v307
        %v889 = vunpack.c.l.b16 %v308
        %v890 = vunpack.c.h.b16 %v308
        %v891 = vunpack.c.l.b16 %v309
        %v892 = vunpack.c.h.b16 %v309
        %v893 = vunpack.c.l.b16 %v310
        %v894 = vunpack.c.h.b16 %v310
        %v895 = vunpack.c.l.b16 %v311
        %v896 = vunpack.c.h.b16 %v311
        %v897 = vunpack.c.l.b16 %v312
        %v898 = vunpack.c.h.b16 %v312
        %v899 = vunpack.c.l.b16 %v313
        %v900 = vunpack.c.h.b16 %v313
        %v901 = vunpack.c.l.b16 %v314
        %v902 = vunpack.c.h.b16 %v314
        %v903 = vunpack.c.l.b16 %v315
        %v904 = vunpack.c.h.b16 %v315
        %v905 = vunpack.c.l.b16 %v316
        %v906 = vunpack.c.h.b16 %v316
        %v907 = vunpack.c.l.b16 %v317
        %v908 = vunpack.c.h.b16 %v317
        %v909 = vunpack.c.l.b16 %v318
        %v910 = vunpack.c.h.b16 %v318
        %v911 = vunpack.c.l.b16 %v319
        %v912 = vunpack.c.h.b16 %v319
        %v913 = vunpack.c.l.b16 %v320
        %v914 = vunpack.c.h.b16 %v320
        %v915 = vunpack.c.l.b16 %v321
        %v916 = vunpack.c.h.b16 %v321
        %v917 = vunpack.c.l.b16 %v322
        %v918 = vunpack.c.h.b16 %v322
        %v919 = vunpack.c.l.b16 %v323
        %v920 = vunpack.c.h.b16 %v323
        %v921 = vunpack.c.l.b16 %v324
        %v922 = vunpack.c.h.b16 %v324
        %v923 = vunpack.c.l.b16 %v325
        %v924 = vunpack.c.h.b16 %v325
        %v925 = vunpack.c.l.b16 %v326
        %v926 = vunpack.c.h.b16 %v326
        %v927 = vunpack.c.l.b16 %v327
        %v928 = vunpack.c.h.b16 %v327
        %v929 = vunpack.c.l.b16 %v328
        %v930 = vunpack.c.h.b16 %v328
        %v931 = vunpack.c.l.b16 %v329
        %v932 = vunpack.c.h.b16 %v329
        %v933 = vunpack.c.l.b16 %v330
        %v934 = vunpack.c.h.b16 %v330
        %v935 = vpack.c.b16 %v873, %v871
        %v936 = vpack.c.b16 %v874, %v872
        %v937 = vpack.c.b16 %v877, %v875
        %v938 = vpack.c.b16 %v878, %v876
        %v939 = vpack.c.b16 %v881, %v879
        %v940 = vpack.c.b16 %v882, %v880
        %v941 = vpack.c.b16 %v885, %v883
        %v942 = vpack.c.b16 %v886, %v884
        %v943 = vpack.c.b16 %v889, %v887
        %v944 = vpack.c.b16 %v890, %v888
        %v945 = vpack.c.b16 %v893, %v891
        %v946 = vpack.c.b16 %v894, %v892
        %v947 = vpack.c.b16 %v897, %v895
        %v948 = vpack.c.b16 %v898, %v896
        %v949 = vpack.c.b16 %v901, %v899
        %v950 = vpack.c.b16 %v902, %v900
        %v951 = vpack.c.b16 %v905, %v903
        %v952 = vpack.c.b16 %v906, %v904
        %v953 = vpack.c.b16 %v909, %v907
        %v954 = vpack.c.b16 %v910, %v908
        %v955 = vpack.c.b16 %v913, %v911
        %v956 = vpack.c.b16 %v914, %v912
        %v957 = vpack.c.b16 %v917, %v915
        %v958 = vpack.c.b16 %v918, %v916
        %v959 = vpack.c.b16 %v921, %v919
        %v960 = vpack.c.b16 %v922, %v920
        %v961 = vpack.c.b16 %v925, %v923
        %v962 = vpack.c.b16 %v926, %v924
        %v963 = vpack.c.b16 %v929, %v927
        %v964 = vpack.c.b16 %v930, %v928
        %v965 = vpack.c.b16 %v933, %v931
        %v966 = vpack.c.b16 %v934, %v932
        %v1007 = vunpack.c.l.b16 %v331
        %v1008 = vunpack.c.l.b16 %v332
        %v1009 = vunpack.c.l.b16 %v333
        %v1010 = vunpack.c.l.b16 %v334
        %v1011 = vunpack.c.l.b16 %v335
        %v1012 = vunpack.c.l.b16 %v336
        %v1013 = vunpack.c.l.b16 %v337
        %v1014 = vunpack.c.l.b16 %v338
        %v1015 = vunpack.c.l.b16 %v339
        %v1016 = vunpack.c.l.b16 %v340
        %v1017 = vunpack.c.l.b16 %v341
        %v1018 = vunpack.c.l.b16 %v342
        %v1019 = vunpack.c.l.b16 %v343
        %v1020 = vunpack.c.l.b16 %v344
        %v1021 = vunpack.c.l.b16 %v345
        %v1022 = vunpack.c.l.b16 %v346
        %v1023 = vunpack.c.l.b16 %v347
        %v1024 = vunpack.c.l.b16 %v348
        %v1025 = vunpack.c.l.b16 %v349
        %v1026 = vunpack.c.l.b16 %v350
        %v1027 = vunpack.c.l.b16 %v351
        %v1028 = vunpack.c.l.b16 %v352
        %v1029 = vunpack.c.l.b16 %v353
        %v1030 = vunpack.c.l.b16 %v354
        %v1031 = vpack.c.b16 %v1008, %v1007
        %v1032 = vpack.c.b16 %v1010, %v1009
        %v1033 = vpack.c.b16 %v1012, %v1011
        %v1034 = vpack.c.b16 %v1014, %v1013
        %v1035 = vpack.c.b16 %v1016, %v1015
        %v1036 = vpack.c.b16 %v1018, %v1017
        %v1037 = vpack.c.b16 %v1020, %v1019
        %v1038 = vpack.c.b16 %v1022, %v1021
        %v1039 = vpack.c.b16 %v1024, %v1023
        %v1040 = vpack.c.b16 %v1026, %v1025
        %v1041 = vpack.c.b16 %v1028, %v1027
        %v1042 = vpack.c.b16 %v1030, %v1029
        %v1056 = vsel %vm629, %v936, 0
        %v1059 = vsel %vm629, %v938, 0
        %v1062 = vsel %vm629, %v940, 0
        %v1065 = vsel %vm629, %v942, 0
        %v1068 = vsel %vm629, %v944, 0
        %v1071 = vsel %vm629, %v946, 0
        %v1074 = vsel %vm629, %v948, 0
        %v1077 = vsel %vm629, %v950, 0
        %v1080 = vsel %vm629, %v952, 0
        %v1083 = vsel %vm629, %v954, 0
        %v1086 = vsel %vm629, %v956, 0
        %v1089 = vsel %vm629, %v958, 0
        %v1092 = vsel %vm629, %v960, 0
        %v1095 = vsel %vm629, %v962, 0
        %v1098 = vsel %vm629, %v964, 0
        %v1101 = vsel %vm629, %v966, 0
        %1103 = vmatprep.subr.bf16.mxu0 0
        %1104 = vmatpush1.bf16.msra.mxu0 %v1038
        %1105 = vmatprep.subr.bf16.mxu0 0
        %1106 = vmatpush1.bf16.msra.mxu0 %v1037
        %1107 = vmatprep.subr.bf16.mxu0 0
        %1108 = vmatpush1.bf16.msra.mxu0 %v1036
        %1109 = vmatprep.subr.bf16.mxu0 0
        %1110 = vmatpush1.bf16.msra.mxu0 %v1035
        %1111 = vmatprep.subr.bf16.mxu0 0
        %1112 = vmatpush1.bf16.msra.mxu0 %v1034
        %1113 = vmatprep.subr.bf16.mxu0 0
        %1114 = vmatpush1.bf16.msra.mxu0 %v1033
        %1115 = vmatprep.subr.bf16.mxu0 0
        %1116 = vmatpush1.bf16.msra.mxu0 %v1032
        %1117 = vmatprep.subr.bf16.mxu0 0
        %1118 = vmatpush1.bf16.msra.mxu0 %v1031
        %1119 = vmatprep.subr.bf16.mxu0 0
        %1120 = vmatpush2.bf16.msra.mxu0 0
        %1121 = vmatprep.subr.bf16.mxu0 0
        %1122 = vmatpush2.bf16.msra.mxu0 0
        %1123 = vmatprep.subr.bf16.mxu0 0
        %1124 = vmatpush2.bf16.msra.mxu0 0
        %1125 = vmatprep.subr.bf16.mxu0 0
        %1126 = vmatpush2.bf16.msra.mxu0 0
        %1127 = vmatprep.subr.bf16.mxu0 0
        %1128 = vmatpush2.bf16.msra.mxu0 %v1042
        %1129 = vmatprep.subr.bf16.mxu0 0
        %1130 = vmatpush2.bf16.msra.mxu0 %v1041
        %1131 = vmatprep.subr.bf16.mxu0 0
        %1132 = vmatpush2.bf16.msra.mxu0 %v1040
        %1133 = vmatprep.subr.bf16.mxu0 0
        %1134 = vmatpush2.bf16.msra.mxu0 %v1039
        %1135 = vmatprep.mubr.bf16.mxu0 %v1056
        %1136 = vmatmul.mubr.bf16.gmra.mxu0 %v935
        %v1137 = vpop.f32.mrf.mxu0
        %v1138 = vadd.f32 %v713, %v1137
        %v1139 = vpop.f32.mrf.mxu0
        %v1140 = vpop.f32.mrf.mxu0
        %v1141 = vadd.f32 %v716, %v1140
        %v1142 = vpop.f32.mrf.mxu0
        %1143 = vmatprep.mubr.bf16.mxu0 %v1059
        %1144 = vmatmul.mubr.bf16.gmra.mxu0 %v937
        %v1145 = vpop.f32.mrf.mxu0
        %v1146 = vadd.f32 %v721, %v1145
        %v1147 = vpop.f32.mrf.mxu0
        %v1148 = vpop.f32.mrf.mxu0
        %v1149 = vadd.f32 %v724, %v1148
        %v1150 = vpop.f32.mrf.mxu0
        %1151 = vmatprep.mubr.bf16.mxu0 %v1062
        %1152 = vmatmul.mubr.bf16.gmra.mxu0 %v939
        %v1153 = vpop.f32.mrf.mxu0
        %v1154 = vadd.f32 %v729, %v1153
        %v1155 = vpop.f32.mrf.mxu0
        %v1156 = vpop.f32.mrf.mxu0
        %v1157 = vadd.f32 %v732, %v1156
        %v1158 = vpop.f32.mrf.mxu0
        %1159 = vmatprep.mubr.bf16.mxu0 %v1065
        %1160 = vmatmul.mubr.bf16.gmra.mxu0 %v941
        %v1161 = vpop.f32.mrf.mxu0
        %v1162 = vadd.f32 %v737, %v1161
        %v1163 = vpop.f32.mrf.mxu0
        %v1164 = vpop.f32.mrf.mxu0
        %v1165 = vadd.f32 %v740, %v1164
        %v1166 = vpop.f32.mrf.mxu0
        %1167 = vmatprep.mubr.bf16.mxu0 %v1068
        %1168 = vmatmul.mubr.bf16.gmra.mxu0 %v943
        %v1169 = vpop.f32.mrf.mxu0
        %v1170 = vadd.f32 %v745, %v1169
        %v1171 = vpop.f32.mrf.mxu0
        %v1172 = vpop.f32.mrf.mxu0
        %v1173 = vadd.f32 %v748, %v1172
        %v1174 = vpop.f32.mrf.mxu0
        %1175 = vmatprep.mubr.bf16.mxu0 %v1071
        %1176 = vmatmul.mubr.bf16.gmra.mxu0 %v945
        %v1177 = vpop.f32.mrf.mxu0
        %v1178 = vadd.f32 %v753, %v1177
        %v1179 = vpop.f32.mrf.mxu0
        %v1180 = vpop.f32.mrf.mxu0
        %v1181 = vadd.f32 %v756, %v1180
        %v1182 = vpop.f32.mrf.mxu0
        %1183 = vmatprep.mubr.bf16.mxu0 %v1074
        %1184 = vmatmul.mubr.bf16.gmra.mxu0 %v947
        %v1185 = vpop.f32.mrf.mxu0
        %v1186 = vadd.f32 %v761, %v1185
        %v1187 = vpop.f32.mrf.mxu0
        %v1188 = vpop.f32.mrf.mxu0
        %v1189 = vadd.f32 %v764, %v1188
        %v1190 = vpop.f32.mrf.mxu0
        %1191 = vmatprep.mubr.bf16.mxu0 %v1077
        %1192 = vmatmul.mubr.bf16.gmra.mxu0 %v949
        %v1193 = vpop.f32.mrf.mxu0
        %v1194 = vadd.f32 %v769, %v1193
        %v1195 = vpop.f32.mrf.mxu0
        %v1196 = vpop.f32.mrf.mxu0
        %v1197 = vadd.f32 %v772, %v1196
        %v1198 = vpop.f32.mrf.mxu0
        %1199 = vmatprep.mubr.bf16.mxu0 %v1080
        %1200 = vmatmul.mubr.bf16.gmra.mxu0 %v951
        %v1201 = vpop.f32.mrf.mxu0
        %v1202 = vadd.f32 %v777, %v1201
        %v1203 = vpop.f32.mrf.mxu0
        %v1204 = vpop.f32.mrf.mxu0
        %v1205 = vadd.f32 %v780, %v1204
        %v1206 = vpop.f32.mrf.mxu0
        %1207 = vmatprep.mubr.bf16.mxu0 %v1083
        %1208 = vmatmul.mubr.bf16.gmra.mxu0 %v953
        %v1209 = vpop.f32.mrf.mxu0
        %v1210 = vadd.f32 %v785, %v1209
        %v1211 = vpop.f32.mrf.mxu0
        %v1212 = vpop.f32.mrf.mxu0
        %v1213 = vadd.f32 %v788, %v1212
        %v1214 = vpop.f32.mrf.mxu0
        %1215 = vmatprep.mubr.bf16.mxu0 %v1086
        %1216 = vmatmul.mubr.bf16.gmra.mxu0 %v955
        %v1217 = vpop.f32.mrf.mxu0
        %v1218 = vadd.f32 %v793, %v1217
        %v1219 = vpop.f32.mrf.mxu0
        %v1220 = vpop.f32.mrf.mxu0
        %v1221 = vadd.f32 %v796, %v1220
        %v1222 = vpop.f32.mrf.mxu0
        %1223 = vmatprep.mubr.bf16.mxu0 %v1089
        %1224 = vmatmul.mubr.bf16.gmra.mxu0 %v957
        %v1225 = vpop.f32.mrf.mxu0
        %v1226 = vadd.f32 %v801, %v1225
        %v1227 = vpop.f32.mrf.mxu0
        %v1228 = vpop.f32.mrf.mxu0
        %v1229 = vadd.f32 %v804, %v1228
        %v1230 = vpop.f32.mrf.mxu0
        %1231 = vmatprep.mubr.bf16.mxu0 %v1092
        %1232 = vmatmul.mubr.bf16.gmra.mxu0 %v959
        %v1233 = vpop.f32.mrf.mxu0
        %v1234 = vadd.f32 %v809, %v1233
        %v1235 = vpop.f32.mrf.mxu0
        %v1236 = vpop.f32.mrf.mxu0
        %v1237 = vadd.f32 %v812, %v1236
        %v1238 = vpop.f32.mrf.mxu0
        %1239 = vmatprep.mubr.bf16.mxu0 %v1095
        %1240 = vmatmul.mubr.bf16.gmra.mxu0 %v961
        %v1241 = vpop.f32.mrf.mxu0
        %v1242 = vadd.f32 %v817, %v1241
        %v1243 = vpop.f32.mrf.mxu0
        %v1244 = vpop.f32.mrf.mxu0
        %v1245 = vadd.f32 %v820, %v1244
        %v1246 = vpop.f32.mrf.mxu0
        %1247 = vmatprep.mubr.bf16.mxu0 %v1098
        %1248 = vmatmul.mubr.bf16.gmra.mxu0 %v963
        %v1249 = vpop.f32.mrf.mxu0
        %v1250 = vadd.f32 %v825, %v1249
        %v1251 = vpop.f32.mrf.mxu0
        %v1252 = vpop.f32.mrf.mxu0
        %v1253 = vadd.f32 %v828, %v1252
        %v1254 = vpop.f32.mrf.mxu0
        %1255 = vmatprep.mubr.bf16.mxu0 %v1101
        %1256 = vmatmul.mubr.bf16.gmra.mxu0 %v965
        %v1257 = vpop.f32.mrf.mxu0
        %v1258 = vadd.f32 %v833, %v1257
        %v1259 = vpop.f32.mrf.mxu0
        %v1260 = vpop.f32.mrf.mxu0
        %v1261 = vadd.f32 %v836, %v1260
        %v1262 = vpop.f32.mrf.mxu0
        %1263 = vdwg.mxu0
        %s1264 = scalar_lea.vmem %s292, 32
        %v1265 = vld [vmem:[%s1264] sm:$0xff]
        %v1266 = vld [vmem:[%s1264 + $0x8] sm:$0xff]
        %v1267 = vld [vmem:[%s1264 + $0x10] sm:$0xff]
        %v1268 = vld [vmem:[%s1264 + $0x18] sm:$0xff]
        %v1269 = vld [vmem:[%s1264 + $0x20] sm:$0xff]
        %v1270 = vld [vmem:[%s1264 + $0x28] sm:$0xff]
        %v1271 = vld [vmem:[%s1264 + $0x30] sm:$0xff]
        %v1272 = vld [vmem:[%s1264 + $0x38] sm:$0xff]
        %v1273 = vld [vmem:[%s1264 + $0x40] sm:$0xff]
        %v1274 = vld [vmem:[%s1264 + $0x48] sm:$0xff]
        %v1275 = vld [vmem:[%s1264 + $0x50] sm:$0xff]
        %v1276 = vld [vmem:[%s1264 + $0x58] sm:$0xff]
        %v1277 = vld [vmem:[%s1264 + $0x60] sm:$0xff]
        %v1278 = vld [vmem:[%s1264 + $0x68] sm:$0xff]
        %v1279 = vld [vmem:[%s1264 + $0x70] sm:$0xff]
        %v1280 = vld [vmem:[%s1264 + $0x78] sm:$0xff]
        %v1281 = vld [vmem:[%s1264 + $0x80] sm:$0xff]
        %v1282 = vld [vmem:[%s1264 + $0x88] sm:$0xff]
        %v1283 = vld [vmem:[%s1264 + $0x90] sm:$0xff]
        %v1284 = vld [vmem:[%s1264 + $0x98] sm:$0xff]
        %v1285 = vld [vmem:[%s1264 + $0xa0] sm:$0xff]
        %v1286 = vld [vmem:[%s1264 + $0xa8] sm:$0xff]
        %v1287 = vld [vmem:[%s1264 + $0xb0] sm:$0xff]
        %v1288 = vld [vmem:[%s1264 + $0xb8] sm:$0xff]
        %v1289 = vld [vmem:[%s1264 + $0xc0] sm:$0xff]
        %v1290 = vld [vmem:[%s1264 + $0xc8] sm:$0xff]
        %v1291 = vld [vmem:[%s1264 + $0xd0] sm:$0xff]
        %v1292 = vld [vmem:[%s1264 + $0xd8] sm:$0xff]
        %v1293 = vld [vmem:[%s1264 + $0xe0] sm:$0xff]
        %v1294 = vld [vmem:[%s1264 + $0xe8] sm:$0xff]
        %v1295 = vld [vmem:[%s1264 + $0xf0] sm:$0xff]
        %v1296 = vld [vmem:[%s1264 + $0xf8] sm:$0xff]
        %s1297 = scalar_lea.vmem %s2, 192
        %v1298 = vld [vmem:[%s1297] sm:$0xf]
        %v1299 = vld [vmem:[%s1297 + $0x4] sm:$0xf]
        %v1300 = vld [vmem:[%s1297 + $0x8] sm:$0xf]
        %v1301 = vld [vmem:[%s1297 + $0xc] sm:$0xf]
        %v1302 = vld [vmem:[%s1297 + $0x10] sm:$0xf]
        %v1303 = vld [vmem:[%s1297 + $0x14] sm:$0xf]
        %v1304 = vld [vmem:[%s1297 + $0x18] sm:$0xf]
        %v1305 = vld [vmem:[%s1297 + $0x1c] sm:$0xf]
        %v1306 = vld [vmem:[%s1297 + $0x20] sm:$0xf]
        %v1307 = vld [vmem:[%s1297 + $0x24] sm:$0xf]
        %v1308 = vld [vmem:[%s1297 + $0x28] sm:$0xf]
        %v1309 = vld [vmem:[%s1297 + $0x2c] sm:$0xf]
        %v1310 = vld [vmem:[%s1297 + $0x30] sm:$0xf]
        %v1311 = vld [vmem:[%s1297 + $0x34] sm:$0xf]
        %v1312 = vld [vmem:[%s1297 + $0x38] sm:$0xf]
        %v1313 = vld [vmem:[%s1297 + $0x3c] sm:$0xf]
        %v1314 = vld [vmem:[%s1297 + $0x40] sm:$0xf]
        %v1315 = vld [vmem:[%s1297 + $0x44] sm:$0xf]
        %v1316 = vld [vmem:[%s1297 + $0x48] sm:$0xf]
        %v1317 = vld [vmem:[%s1297 + $0x4c] sm:$0xf]
        %v1318 = vld [vmem:[%s1297 + $0x50] sm:$0xf]
        %v1319 = vld [vmem:[%s1297 + $0x54] sm:$0xf]
        %v1320 = vld [vmem:[%s1297 + $0x58] sm:$0xf]
        %v1321 = vld [vmem:[%s1297 + $0x5c] sm:$0xf]
        %v1354 = vunpack.c.l.b16 %v1265
        %v1355 = vunpack.c.h.b16 %v1265
        %v1356 = vunpack.c.l.b16 %v1266
        %v1357 = vunpack.c.h.b16 %v1266
        %v1358 = vunpack.c.l.b16 %v1267
        %v1359 = vunpack.c.h.b16 %v1267
        %v1360 = vunpack.c.l.b16 %v1268
        %v1361 = vunpack.c.h.b16 %v1268
        %v1362 = vunpack.c.l.b16 %v1269
        %v1363 = vunpack.c.h.b16 %v1269
        %v1364 = vunpack.c.l.b16 %v1270
        %v1365 = vunpack.c.h.b16 %v1270
        %v1366 = vunpack.c.l.b16 %v1271
        %v1367 = vunpack.c.h.b16 %v1271
        %v1368 = vunpack.c.l.b16 %v1272
        %v1369 = vunpack.c.h.b16 %v1272
        %v1370 = vunpack.c.l.b16 %v1273
        %v1371 = vunpack.c.h.b16 %v1273
        %v1372 = vunpack.c.l.b16 %v1274
        %v1373 = vunpack.c.h.b16 %v1274
        %v1374 = vunpack.c.l.b16 %v1275
        %v1375 = vunpack.c.h.b16 %v1275
        %v1376 = vunpack.c.l.b16 %v1276
        %v1377 = vunpack.c.h.b16 %v1276
        %v1378 = vunpack.c.l.b16 %v1277
        %v1379 = vunpack.c.h.b16 %v1277
        %v1380 = vunpack.c.l.b16 %v1278
        %v1381 = vunpack.c.h.b16 %v1278
        %v1382 = vunpack.c.l.b16 %v1279
        %v1383 = vunpack.c.h.b16 %v1279
        %v1384 = vunpack.c.l.b16 %v1280
        %v1385 = vunpack.c.h.b16 %v1280
        %v1386 = vunpack.c.l.b16 %v1281
        %v1387 = vunpack.c.h.b16 %v1281
        %v1388 = vunpack.c.l.b16 %v1282
        %v1389 = vunpack.c.h.b16 %v1282
        %v1390 = vunpack.c.l.b16 %v1283
        %v1391 = vunpack.c.h.b16 %v1283
        %v1392 = vunpack.c.l.b16 %v1284
        %v1393 = vunpack.c.h.b16 %v1284
        %v1394 = vunpack.c.l.b16 %v1285
        %v1395 = vunpack.c.h.b16 %v1285
        %v1396 = vunpack.c.l.b16 %v1286
        %v1397 = vunpack.c.h.b16 %v1286
        %v1398 = vunpack.c.l.b16 %v1287
        %v1399 = vunpack.c.h.b16 %v1287
        %v1400 = vunpack.c.l.b16 %v1288
        %v1401 = vunpack.c.h.b16 %v1288
        %v1402 = vunpack.c.l.b16 %v1289
        %v1403 = vunpack.c.h.b16 %v1289
        %v1404 = vunpack.c.l.b16 %v1290
        %v1405 = vunpack.c.h.b16 %v1290
        %v1406 = vunpack.c.l.b16 %v1291
        %v1407 = vunpack.c.h.b16 %v1291
        %v1408 = vunpack.c.l.b16 %v1292
        %v1409 = vunpack.c.h.b16 %v1292
        %v1410 = vunpack.c.l.b16 %v1293
        %v1411 = vunpack.c.h.b16 %v1293
        %v1412 = vunpack.c.l.b16 %v1294
        %v1413 = vunpack.c.h.b16 %v1294
        %v1414 = vunpack.c.l.b16 %v1295
        %v1415 = vunpack.c.h.b16 %v1295
        %v1416 = vunpack.c.l.b16 %v1296
        %v1417 = vunpack.c.h.b16 %v1296
        %v1418 = vpack.c.b16 %v1356, %v1354
        %v1419 = vpack.c.b16 %v1357, %v1355
        %v1420 = vpack.c.b16 %v1360, %v1358
        %v1421 = vpack.c.b16 %v1361, %v1359
        %v1422 = vpack.c.b16 %v1364, %v1362
        %v1423 = vpack.c.b16 %v1365, %v1363
        %v1424 = vpack.c.b16 %v1368, %v1366
        %v1425 = vpack.c.b16 %v1369, %v1367
        %v1426 = vpack.c.b16 %v1372, %v1370
        %v1427 = vpack.c.b16 %v1373, %v1371
        %v1428 = vpack.c.b16 %v1376, %v1374
        %v1429 = vpack.c.b16 %v1377, %v1375
        %v1430 = vpack.c.b16 %v1380, %v1378
        %v1431 = vpack.c.b16 %v1381, %v1379
        %v1432 = vpack.c.b16 %v1384, %v1382
        %v1433 = vpack.c.b16 %v1385, %v1383
        %v1434 = vpack.c.b16 %v1388, %v1386
        %v1435 = vpack.c.b16 %v1389, %v1387
        %v1436 = vpack.c.b16 %v1392, %v1390
        %v1437 = vpack.c.b16 %v1393, %v1391
        %v1438 = vpack.c.b16 %v1396, %v1394
        %v1439 = vpack.c.b16 %v1397, %v1395
        %v1440 = vpack.c.b16 %v1400, %v1398
        %v1441 = vpack.c.b16 %v1401, %v1399
        %v1442 = vpack.c.b16 %v1404, %v1402
        %v1443 = vpack.c.b16 %v1405, %v1403
        %v1444 = vpack.c.b16 %v1408, %v1406
        %v1445 = vpack.c.b16 %v1409, %v1407
        %v1446 = vpack.c.b16 %v1412, %v1410
        %v1447 = vpack.c.b16 %v1413, %v1411
        %v1448 = vpack.c.b16 %v1416, %v1414
        %v1449 = vpack.c.b16 %v1417, %v1415
        %v1490 = vunpack.c.l.b16 %v1298
        %v1491 = vunpack.c.l.b16 %v1299
        %v1492 = vunpack.c.l.b16 %v1300
        %v1493 = vunpack.c.l.b16 %v1301
        %v1494 = vunpack.c.l.b16 %v1302
        %v1495 = vunpack.c.l.b16 %v1303
        %v1496 = vunpack.c.l.b16 %v1304
        %v1497 = vunpack.c.l.b16 %v1305
        %v1498 = vunpack.c.l.b16 %v1306
        %v1499 = vunpack.c.l.b16 %v1307
        %v1500 = vunpack.c.l.b16 %v1308
        %v1501 = vunpack.c.l.b16 %v1309
        %v1502 = vunpack.c.l.b16 %v1310
        %v1503 = vunpack.c.l.b16 %v1311
        %v1504 = vunpack.c.l.b16 %v1312
        %v1505 = vunpack.c.l.b16 %v1313
        %v1506 = vunpack.c.l.b16 %v1314
        %v1507 = vunpack.c.l.b16 %v1315
        %v1508 = vunpack.c.l.b16 %v1316
        %v1509 = vunpack.c.l.b16 %v1317
        %v1510 = vunpack.c.l.b16 %v1318
        %v1511 = vunpack.c.l.b16 %v1319
        %v1512 = vunpack.c.l.b16 %v1320
        %v1513 = vunpack.c.l.b16 %v1321
        %v1514 = vpack.c.b16 %v1491, %v1490
        %v1515 = vpack.c.b16 %v1493, %v1492
        %v1516 = vpack.c.b16 %v1495, %v1494
        %v1517 = vpack.c.b16 %v1497, %v1496
        %v1518 = vpack.c.b16 %v1499, %v1498
        %v1519 = vpack.c.b16 %v1501, %v1500
        %v1520 = vpack.c.b16 %v1503, %v1502
        %v1521 = vpack.c.b16 %v1505, %v1504
        %v1522 = vpack.c.b16 %v1507, %v1506
        %v1523 = vpack.c.b16 %v1509, %v1508
        %v1524 = vpack.c.b16 %v1511, %v1510
        %v1525 = vpack.c.b16 %v1513, %v1512
        %v1539 = vsel %vm629, %v1419, 0
        %v1542 = vsel %vm629, %v1421, 0
        %v1545 = vsel %vm629, %v1423, 0
        %v1548 = vsel %vm629, %v1425, 0
        %v1551 = vsel %vm629, %v1427, 0
        %v1554 = vsel %vm629, %v1429, 0
        %v1557 = vsel %vm629, %v1431, 0
        %v1560 = vsel %vm629, %v1433, 0
        %v1563 = vsel %vm629, %v1435, 0
        %v1566 = vsel %vm629, %v1437, 0
        %v1569 = vsel %vm629, %v1439, 0
        %v1572 = vsel %vm629, %v1441, 0
        %v1575 = vsel %vm629, %v1443, 0
        %v1578 = vsel %vm629, %v1445, 0
        %v1581 = vsel %vm629, %v1447, 0
        %v1584 = vsel %vm629, %v1449, 0
        %1586 = vmatprep.subr.bf16.mxu0 0
        %1587 = vmatpush1.bf16.msra.mxu0 %v1521
        %1588 = vmatprep.subr.bf16.mxu0 0
        %1589 = vmatpush1.bf16.msra.mxu0 %v1520
        %1590 = vmatprep.subr.bf16.mxu0 0
        %1591 = vmatpush1.bf16.msra.mxu0 %v1519
        %1592 = vmatprep.subr.bf16.mxu0 0
        %1593 = vmatpush1.bf16.msra.mxu0 %v1518
        %1594 = vmatprep.subr.bf16.mxu0 0
        %1595 = vmatpush1.bf16.msra.mxu0 %v1517
        %1596 = vmatprep.subr.bf16.mxu0 0
        %1597 = vmatpush1.bf16.msra.mxu0 %v1516
        %1598 = vmatprep.subr.bf16.mxu0 0
        %1599 = vmatpush1.bf16.msra.mxu0 %v1515
        %1600 = vmatprep.subr.bf16.mxu0 0
        %1601 = vmatpush1.bf16.msra.mxu0 %v1514
        %1602 = vmatprep.subr.bf16.mxu0 0
        %1603 = vmatpush2.bf16.msra.mxu0 0
        %1604 = vmatprep.subr.bf16.mxu0 0
        %1605 = vmatpush2.bf16.msra.mxu0 0
        %1606 = vmatprep.subr.bf16.mxu0 0
        %1607 = vmatpush2.bf16.msra.mxu0 0
        %1608 = vmatprep.subr.bf16.mxu0 0
        %1609 = vmatpush2.bf16.msra.mxu0 0
        %1610 = vmatprep.subr.bf16.mxu0 0
        %1611 = vmatpush2.bf16.msra.mxu0 %v1525
        %1612 = vmatprep.subr.bf16.mxu0 0
        %1613 = vmatpush2.bf16.msra.mxu0 %v1524
        %1614 = vmatprep.subr.bf16.mxu0 0
        %1615 = vmatpush2.bf16.msra.mxu0 %v1523
        %1616 = vmatprep.subr.bf16.mxu0 0
        %1617 = vmatpush2.bf16.msra.mxu0 %v1522
        %1618 = vmatprep.mubr.bf16.mxu0 %v1539
        %1619 = vmatmul.mubr.bf16.gmra.mxu0 %v1418
        %v1620 = vpop.f32.mrf.mxu0
        %v1621 = vadd.f32 0.0, %v1620
        %v1622 = vpop.f32.mrf.mxu0
        %v1623 = vpop.f32.mrf.mxu0
        %v1624 = vadd.f32 0.0, %v1623
        %v1625 = vpop.f32.mrf.mxu0
        %1626 = vmatprep.mubr.bf16.mxu0 %v1542
        %1627 = vmatmul.mubr.bf16.gmra.mxu0 %v1420
        %v1628 = vpop.f32.mrf.mxu0
        %v1629 = vadd.f32 0.0, %v1628
        %v1630 = vpop.f32.mrf.mxu0
        %v1631 = vpop.f32.mrf.mxu0
        %v1632 = vadd.f32 0.0, %v1631
        %v1633 = vpop.f32.mrf.mxu0
        %1634 = vmatprep.mubr.bf16.mxu0 %v1545
        %1635 = vmatmul.mubr.bf16.gmra.mxu0 %v1422
        %v1636 = vpop.f32.mrf.mxu0
        %v1637 = vadd.f32 0.0, %v1636
        %v1638 = vpop.f32.mrf.mxu0
        %v1639 = vpop.f32.mrf.mxu0
        %v1640 = vadd.f32 0.0, %v1639
        %v1641 = vpop.f32.mrf.mxu0
        %1642 = vmatprep.mubr.bf16.mxu0 %v1548
        %1643 = vmatmul.mubr.bf16.gmra.mxu0 %v1424
        %v1644 = vpop.f32.mrf.mxu0
        %v1645 = vadd.f32 0.0, %v1644
        %v1646 = vpop.f32.mrf.mxu0
        %v1647 = vpop.f32.mrf.mxu0
        %v1648 = vadd.f32 0.0, %v1647
        %v1649 = vpop.f32.mrf.mxu0
        %1650 = vmatprep.mubr.bf16.mxu0 %v1551
        %1651 = vmatmul.mubr.bf16.gmra.mxu0 %v1426
        %v1652 = vpop.f32.mrf.mxu0
        %v1653 = vadd.f32 0.0, %v1652
        %v1654 = vpop.f32.mrf.mxu0
        %v1655 = vpop.f32.mrf.mxu0
        %v1656 = vadd.f32 0.0, %v1655
        %v1657 = vpop.f32.mrf.mxu0
        %1658 = vmatprep.mubr.bf16.mxu0 %v1554
        %1659 = vmatmul.mubr.bf16.gmra.mxu0 %v1428
        %v1660 = vpop.f32.mrf.mxu0
        %v1661 = vadd.f32 0.0, %v1660
        %v1662 = vpop.f32.mrf.mxu0
        %v1663 = vpop.f32.mrf.mxu0
        %v1664 = vadd.f32 0.0, %v1663
        %v1665 = vpop.f32.mrf.mxu0
        %1666 = vmatprep.mubr.bf16.mxu0 %v1557
        %1667 = vmatmul.mubr.bf16.gmra.mxu0 %v1430
        %v1668 = vpop.f32.mrf.mxu0
        %v1669 = vadd.f32 0.0, %v1668
        %v1670 = vpop.f32.mrf.mxu0
        %v1671 = vpop.f32.mrf.mxu0
        %v1672 = vadd.f32 0.0, %v1671
        %v1673 = vpop.f32.mrf.mxu0
        %1674 = vmatprep.mubr.bf16.mxu0 %v1560
        %1675 = vmatmul.mubr.bf16.gmra.mxu0 %v1432
        %v1676 = vpop.f32.mrf.mxu0
        %v1677 = vadd.f32 0.0, %v1676
        %v1678 = vpop.f32.mrf.mxu0
        %v1679 = vpop.f32.mrf.mxu0
        %v1680 = vadd.f32 0.0, %v1679
        %v1681 = vpop.f32.mrf.mxu0
        %1682 = vmatprep.mubr.bf16.mxu0 %v1563
        %1683 = vmatmul.mubr.bf16.gmra.mxu0 %v1434
        %v1684 = vpop.f32.mrf.mxu0
        %v1685 = vadd.f32 0.0, %v1684
        %v1686 = vpop.f32.mrf.mxu0
        %v1687 = vpop.f32.mrf.mxu0
        %v1688 = vadd.f32 0.0, %v1687
        %v1689 = vpop.f32.mrf.mxu0
        %1690 = vmatprep.mubr.bf16.mxu0 %v1566
        %1691 = vmatmul.mubr.bf16.gmra.mxu0 %v1436
        %v1692 = vpop.f32.mrf.mxu0
        %v1693 = vadd.f32 0.0, %v1692
        %v1694 = vpop.f32.mrf.mxu0
        %v1695 = vpop.f32.mrf.mxu0
        %v1696 = vadd.f32 0.0, %v1695
        %v1697 = vpop.f32.mrf.mxu0
        %1698 = vmatprep.mubr.bf16.mxu0 %v1569
        %1699 = vmatmul.mubr.bf16.gmra.mxu0 %v1438
        %v1700 = vpop.f32.mrf.mxu0
        %v1701 = vadd.f32 0.0, %v1700
        %v1702 = vpop.f32.mrf.mxu0
        %v1703 = vpop.f32.mrf.mxu0
        %v1704 = vadd.f32 0.0, %v1703
        %v1705 = vpop.f32.mrf.mxu0
        %1706 = vmatprep.mubr.bf16.mxu0 %v1572
        %1707 = vmatmul.mubr.bf16.gmra.mxu0 %v1440
        %v1708 = vpop.f32.mrf.mxu0
        %v1709 = vadd.f32 0.0, %v1708
        %v1710 = vpop.f32.mrf.mxu0
        %v1711 = vpop.f32.mrf.mxu0
        %v1712 = vadd.f32 0.0, %v1711
        %v1713 = vpop.f32.mrf.mxu0
        %1714 = vmatprep.mubr.bf16.mxu0 %v1575
        %1715 = vmatmul.mubr.bf16.gmra.mxu0 %v1442
        %v1716 = vpop.f32.mrf.mxu0
        %v1717 = vadd.f32 0.0, %v1716
        %v1718 = vpop.f32.mrf.mxu0
        %v1719 = vpop.f32.mrf.mxu0
        %v1720 = vadd.f32 0.0, %v1719
        %v1721 = vpop.f32.mrf.mxu0
        %1722 = vmatprep.mubr.bf16.mxu0 %v1578
        %1723 = vmatmul.mubr.bf16.gmra.mxu0 %v1444
        %v1724 = vpop.f32.mrf.mxu0
        %v1725 = vadd.f32 0.0, %v1724
        %v1726 = vpop.f32.mrf.mxu0
        %v1727 = vpop.f32.mrf.mxu0
        %v1728 = vadd.f32 0.0, %v1727
        %v1729 = vpop.f32.mrf.mxu0
        %1730 = vmatprep.mubr.bf16.mxu0 %v1581
        %1731 = vmatmul.mubr.bf16.gmra.mxu0 %v1446
        %v1732 = vpop.f32.mrf.mxu0
        %v1733 = vadd.f32 0.0, %v1732
        %v1734 = vpop.f32.mrf.mxu0
        %v1735 = vpop.f32.mrf.mxu0
        %v1736 = vadd.f32 0.0, %v1735
        %v1737 = vpop.f32.mrf.mxu0
        %1738 = vmatprep.mubr.bf16.mxu0 %v1584
        %1739 = vmatmul.mubr.bf16.gmra.mxu0 %v1448
        %v1740 = vpop.f32.mrf.mxu0
        %v1741 = vadd.f32 0.0, %v1740
        %v1742 = vpop.f32.mrf.mxu0
        %v1743 = vpop.f32.mrf.mxu0
        %v1744 = vadd.f32 0.0, %v1743
        %v1745 = vpop.f32.mrf.mxu0
        %1746 = vdwg.mxu0
        %v1747 = vadd.f32 %v1138, %v1621
        %v1748 = vadd.f32 %v1141, %v1624
        %v1749 = vadd.f32 %v1146, %v1629
        %v1750 = vadd.f32 %v1149, %v1632
        %v1751 = vadd.f32 %v1154, %v1637
        %v1752 = vadd.f32 %v1157, %v1640
        %v1753 = vadd.f32 %v1162, %v1645
        %v1754 = vadd.f32 %v1165, %v1648
        %v1755 = vadd.f32 %v1170, %v1653
        %v1756 = vadd.f32 %v1173, %v1656
        %v1757 = vadd.f32 %v1178, %v1661
        %v1758 = vadd.f32 %v1181, %v1664
        %v1759 = vadd.f32 %v1186, %v1669
        %v1760 = vadd.f32 %v1189, %v1672
        %v1761 = vadd.f32 %v1194, %v1677
        %v1762 = vadd.f32 %v1197, %v1680
        %v1763 = vadd.f32 %v1202, %v1685
        %v1764 = vadd.f32 %v1205, %v1688
        %v1765 = vadd.f32 %v1210, %v1693
        %v1766 = vadd.f32 %v1213, %v1696
        %v1767 = vadd.f32 %v1218, %v1701
        %v1768 = vadd.f32 %v1221, %v1704
        %v1769 = vadd.f32 %v1226, %v1709
        %v1770 = vadd.f32 %v1229, %v1712
        %v1771 = vadd.f32 %v1234, %v1717
        %v1772 = vadd.f32 %v1237, %v1720
        %v1773 = vadd.f32 %v1242, %v1725
        %v1774 = vadd.f32 %v1245, %v1728
        %v1775 = vadd.f32 %v1250, %v1733
        %v1776 = vadd.f32 %v1253, %v1736
        %v1777 = vadd.f32 %v1258, %v1741
        %v1778 = vadd.f32 %v1261, %v1744
        %v1779 = vld [vmem:[%s3] sm:$0x1]
        %v1781 = vlaneseq
        %v1782 = vshrl.u32 %v1781, 7
        %v1783 = vsub.s32 0, %v1782
        %v1784 = vrot.slane %v1779, %v1783
        %v1786 = vadd.f32 %v1747, %v1784
        %v1787 = vadd.f32 %v1748, %v1784
        %v1788 = vadd.f32 %v1749, %v1784
        %v1789 = vadd.f32 %v1750, %v1784
        %v1790 = vadd.f32 %v1751, %v1784
        %v1791 = vadd.f32 %v1752, %v1784
        %v1792 = vadd.f32 %v1753, %v1784
        %v1793 = vadd.f32 %v1754, %v1784
        %v1794 = vadd.f32 %v1755, %v1784
        %v1795 = vadd.f32 %v1756, %v1784
        %v1796 = vadd.f32 %v1757, %v1784
        %v1797 = vadd.f32 %v1758, %v1784
        %v1798 = vadd.f32 %v1759, %v1784
        %v1799 = vadd.f32 %v1760, %v1784
        %v1800 = vadd.f32 %v1761, %v1784
        %v1801 = vadd.f32 %v1762, %v1784
        %v1802 = vadd.f32 %v1763, %v1784
        %v1803 = vadd.f32 %v1764, %v1784
        %v1804 = vadd.f32 %v1765, %v1784
        %v1805 = vadd.f32 %v1766, %v1784
        %v1806 = vadd.f32 %v1767, %v1784
        %v1807 = vadd.f32 %v1768, %v1784
        %v1808 = vadd.f32 %v1769, %v1784
        %v1809 = vadd.f32 %v1770, %v1784
        %v1810 = vadd.f32 %v1771, %v1784
        %v1811 = vadd.f32 %v1772, %v1784
        %v1812 = vadd.f32 %v1773, %v1784
        %v1813 = vadd.f32 %v1774, %v1784
        %v1814 = vadd.f32 %v1775, %v1784
        %v1815 = vadd.f32 %v1776, %v1784
        %v1816 = vadd.f32 %v1777, %v1784
        %v1817 = vadd.f32 %v1778, %v1784
        %s1818 = sld [smem:[#allocation3]]
        %vm1819 = vcmp.gt.f32.partialorder %v1786, 0.0
        %vm1820 = vcmp.gt.f32.partialorder %v1787, 0.0
        %vm1821 = vcmp.gt.f32.partialorder %v1788, 0.0
        %vm1822 = vcmp.gt.f32.partialorder %v1789, 0.0
        %vm1823 = vcmp.gt.f32.partialorder %v1790, 0.0
        %vm1824 = vcmp.gt.f32.partialorder %v1791, 0.0
        %vm1825 = vcmp.gt.f32.partialorder %v1792, 0.0
        %vm1826 = vcmp.gt.f32.partialorder %v1793, 0.0
        %vm1827 = vcmp.gt.f32.partialorder %v1794, 0.0
        %vm1828 = vcmp.gt.f32.partialorder %v1795, 0.0
        %vm1829 = vcmp.gt.f32.partialorder %v1796, 0.0
        %vm1830 = vcmp.gt.f32.partialorder %v1797, 0.0
        %vm1831 = vcmp.gt.f32.partialorder %v1798, 0.0
        %vm1832 = vcmp.gt.f32.partialorder %v1799, 0.0
        %vm1833 = vcmp.gt.f32.partialorder %v1800, 0.0
        %vm1834 = vcmp.gt.f32.partialorder %v1801, 0.0
        %vm1835 = vcmp.gt.f32.partialorder %v1802, 0.0
        %vm1836 = vcmp.gt.f32.partialorder %v1803, 0.0
        %vm1837 = vcmp.gt.f32.partialorder %v1804, 0.0
        %vm1838 = vcmp.gt.f32.partialorder %v1805, 0.0
        %vm1839 = vcmp.gt.f32.partialorder %v1806, 0.0
        %vm1840 = vcmp.gt.f32.partialorder %v1807, 0.0
        %vm1841 = vcmp.gt.f32.partialorder %v1808, 0.0
        %vm1842 = vcmp.gt.f32.partialorder %v1809, 0.0
        %vm1843 = vcmp.gt.f32.partialorder %v1810, 0.0
        %vm1844 = vcmp.gt.f32.partialorder %v1811, 0.0
        %vm1845 = vcmp.gt.f32.partialorder %v1812, 0.0
        %vm1846 = vcmp.gt.f32.partialorder %v1813, 0.0
        %vm1847 = vcmp.gt.f32.partialorder %v1814, 0.0
        %vm1848 = vcmp.gt.f32.partialorder %v1815, 0.0
        %vm1849 = vcmp.gt.f32.partialorder %v1816, 0.0
        %vm1850 = vcmp.gt.f32.partialorder %v1817, 0.0
        %v1851 = vstv %s1818
        %v1852 = vmul.f32 %v1851, %v1786
        %v1853 = vmul.f32 %v1851, %v1787
        %v1854 = vmul.f32 %v1851, %v1788
        %v1855 = vmul.f32 %v1851, %v1789
        %v1856 = vmul.f32 %v1851, %v1790
        %v1857 = vmul.f32 %v1851, %v1791
        %v1858 = vmul.f32 %v1851, %v1792
        %v1859 = vmul.f32 %v1851, %v1793
        %v1860 = vmul.f32 %v1851, %v1794
        %v1861 = vmul.f32 %v1851, %v1795
        %v1862 = vmul.f32 %v1851, %v1796
        %v1863 = vmul.f32 %v1851, %v1797
        %v1864 = vmul.f32 %v1851, %v1798
        %v1865 = vmul.f32 %v1851, %v1799
        %v1866 = vmul.f32 %v1851, %v1800
        %v1867 = vmul.f32 %v1851, %v1801
        %v1868 = vmul.f32 %v1851, %v1802
        %v1869 = vmul.f32 %v1851, %v1803
        %v1870 = vmul.f32 %v1851, %v1804
        %v1871 = vmul.f32 %v1851, %v1805
        %v1872 = vmul.f32 %v1851, %v1806
        %v1873 = vmul.f32 %v1851, %v1807
        %v1874 = vmul.f32 %v1851, %v1808
        %v1875 = vmul.f32 %v1851, %v1809
        %v1876 = vmul.f32 %v1851, %v1810
        %v1877 = vmul.f32 %v1851, %v1811
        %v1878 = vmul.f32 %v1851, %v1812
        %v1879 = vmul.f32 %v1851, %v1813
        %v1880 = vmul.f32 %v1851, %v1814
        %v1881 = vmul.f32 %v1851, %v1815
        %v1882 = vmul.f32 %v1851, %v1816
        %v1883 = vmul.f32 %v1851, %v1817
        %v1884 = vsel %vm1819, %v1786, %v1852
        %v1885 = vsel %vm1820, %v1787, %v1853
        %v1886 = vsel %vm1821, %v1788, %v1854
        %v1887 = vsel %vm1822, %v1789, %v1855
        %v1888 = vsel %vm1823, %v1790, %v1856
        %v1889 = vsel %vm1824, %v1791, %v1857
        %v1890 = vsel %vm1825, %v1792, %v1858
        %v1891 = vsel %vm1826, %v1793, %v1859
        %v1892 = vsel %vm1827, %v1794, %v1860
        %v1893 = vsel %vm1828, %v1795, %v1861
        %v1894 = vsel %vm1829, %v1796, %v1862
        %v1895 = vsel %vm1830, %v1797, %v1863
        %v1896 = vsel %vm1831, %v1798, %v1864
        %v1897 = vsel %vm1832, %v1799, %v1865
        %v1898 = vsel %vm1833, %v1800, %v1866
        %v1899 = vsel %vm1834, %v1801, %v1867
        %v1900 = vsel %vm1835, %v1802, %v1868
        %v1901 = vsel %vm1836, %v1803, %v1869
        %v1902 = vsel %vm1837, %v1804, %v1870
        %v1903 = vsel %vm1838, %v1805, %v1871
        %v1904 = vsel %vm1839, %v1806, %v1872
        %v1905 = vsel %vm1840, %v1807, %v1873
        %v1906 = vsel %vm1841, %v1808, %v1874
        %v1907 = vsel %vm1842, %v1809, %v1875
        %v1908 = vsel %vm1843, %v1810, %v1876
        %v1909 = vsel %vm1844, %v1811, %v1877
        %v1910 = vsel %vm1845, %v1812, %v1878
        %v1911 = vsel %vm1846, %v1813, %v1879
        %v1912 = vsel %vm1847, %v1814, %v1880
        %v1913 = vsel %vm1848, %v1815, %v1881
        %v1914 = vsel %vm1849, %v1816, %v1882
        %v1915 = vsel %vm1850, %v1817, %v1883
        %vm1916 = vcmask 519168
        %1917 = vst.msk [vmem:[#allocation2] sm:$0xf] %vm1916, 0
        %1918 = vst.msk [vmem:[#allocation2 + $0x4] sm:$0xf] %vm1916, 0
        %vm1919 = vcmask 516096
        %1920 = vst.msk [vmem:[#allocation2 + $0x8] sm:$0x1] %vm1919, 0
        %1921 = vst.msk [vmem:[#allocation2 + $0xc] sm:$0xf] %vm1916, 0
        %1922 = vst.msk [vmem:[#allocation2 + $0x10] sm:$0xf] %vm1916, 0
        %1923 = vst.msk [vmem:[#allocation2 + $0x14] sm:$0x1] %vm1919, 0
        %1924 = vst.msk [vmem:[#allocation2 + $0x18] sm:$0xf] %vm1916, 0
        %1925 = vst.msk [vmem:[#allocation2 + $0x1c] sm:$0xf] %vm1916, 0
        %1926 = vst.msk [vmem:[#allocation2 + $0x20] sm:$0x1] %vm1919, 0
        %1927 = vst.msk [vmem:[#allocation2 + $0x24] sm:$0xf] %vm1916, 0
        %1928 = vst.msk [vmem:[#allocation2 + $0x28] sm:$0xf] %vm1916, 0
        %1929 = vst.msk [vmem:[#allocation2 + $0x2c] sm:$0x1] %vm1919, 0
        %1930 = vst.msk [vmem:[#allocation2 + $0x30] sm:$0xf] %vm1916, 0
        %1931 = vst.msk [vmem:[#allocation2 + $0x34] sm:$0xf] %vm1916, 0
        %1932 = vst.msk [vmem:[#allocation2 + $0x38] sm:$0x1] %vm1919, 0
        %1933 = vst.msk [vmem:[#allocation2 + $0x3c] sm:$0xf] %vm1916, 0
        %1934 = vst.msk [vmem:[#allocation2 + $0x40] sm:$0xf] %vm1916, 0
        %1935 = vst.msk [vmem:[#allocation2 + $0x44] sm:$0x1] %vm1919, 0
        %1936 = vst.msk [vmem:[#allocation2 + $0x48] sm:$0xf] %vm1916, 0
        %1937 = vst.msk [vmem:[#allocation2 + $0x4c] sm:$0xf] %vm1916, 0
        %1938 = vst.msk [vmem:[#allocation2 + $0x50] sm:$0x1] %vm1919, 0
        %1939 = vst.msk [vmem:[#allocation2 + $0x54] sm:$0xf] %vm1916, 0
        %1940 = vst.msk [vmem:[#allocation2 + $0x58] sm:$0xf] %vm1916, 0
        %1941 = vst.msk [vmem:[#allocation2 + $0x5c] sm:$0x1] %vm1919, 0
        %1942 = vst.msk [vmem:[#allocation2 + $0x60] sm:$0xf] %vm1916, 0
        %1943 = vst.msk [vmem:[#allocation2 + $0x64] sm:$0xf] %vm1916, 0
        %1944 = vst.msk [vmem:[#allocation2 + $0x68] sm:$0x1] %vm1919, 0
        %1945 = vst.msk [vmem:[#allocation2 + $0x6c] sm:$0xf] %vm1916, 0
        %1946 = vst.msk [vmem:[#allocation2 + $0x70] sm:$0xf] %vm1916, 0
        %1947 = vst.msk [vmem:[#allocation2 + $0x74] sm:$0x1] %vm1919, 0
        %1948 = vst.msk [vmem:[#allocation2 + $0x78] sm:$0xf] %vm1916, 0
        %1949 = vst.msk [vmem:[#allocation2 + $0x7c] sm:$0xf] %vm1916, 0
        %1950 = vst.msk [vmem:[#allocation2 + $0x80] sm:$0x1] %vm1919, 0
        %1951 = vst.msk [vmem:[#allocation2 + $0x84] sm:$0xf] %vm1916, 0
        %1952 = vst.msk [vmem:[#allocation2 + $0x88] sm:$0xf] %vm1916, 0
        %1953 = vst.msk [vmem:[#allocation2 + $0x8c] sm:$0x1] %vm1919, 0
        %1954 = vst.msk [vmem:[#allocation2 + $0x90] sm:$0xf] %vm1916, 0
        %1955 = vst.msk [vmem:[#allocation2 + $0x94] sm:$0xf] %vm1916, 0
        %1956 = vst.msk [vmem:[#allocation2 + $0x98] sm:$0x1] %vm1919, 0
        %1957 = vst.msk [vmem:[#allocation2 + $0x9c] sm:$0xf] %vm1916, 0
        %1958 = vst.msk [vmem:[#allocation2 + $0xa0] sm:$0xf] %vm1916, 0
        %1959 = vst.msk [vmem:[#allocation2 + $0xa4] sm:$0x1] %vm1919, 0
        %1960 = vst.msk [vmem:[#allocation2 + $0xa8] sm:$0xf] %vm1916, 0
        %1961 = vst.msk [vmem:[#allocation2 + $0xac] sm:$0xf] %vm1916, 0
        %1962 = vst.msk [vmem:[#allocation2 + $0xb0] sm:$0x1] %vm1919, 0
        %1963 = vst.msk [vmem:[#allocation2 + $0xb4] sm:$0xf] %vm1916, 0
        %1964 = vst.msk [vmem:[#allocation2 + $0xb8] sm:$0xf] %vm1916, 0
        %1965 = vst.msk [vmem:[#allocation2 + $0xbc] sm:$0x1] %vm1919, 0
        %1966 = vst.msk [vmem:[#allocation2 + $0xc0] sm:$0xf] %vm1916, 0
        %1967 = vst.msk [vmem:[#allocation2 + $0xc4] sm:$0xf] %vm1916, 0
        %1968 = vst.msk [vmem:[#allocation2 + $0xc8] sm:$0x1] %vm1919, 0
        %1969 = vst.msk [vmem:[#allocation2 + $0xcc] sm:$0xf] %vm1916, 0
        %1970 = vst.msk [vmem:[#allocation2 + $0xd0] sm:$0xf] %vm1916, 0
        %1971 = vst.msk [vmem:[#allocation2 + $0xd4] sm:$0x1] %vm1919, 0
        %v1972 = vpack.c.bf16 %v1885, %v1884
        %v1973 = vpack.c.bf16 %v1887, %v1886
        %v1974 = vpack.c.bf16 %v1889, %v1888
        %v1975 = vpack.c.bf16 %v1891, %v1890
        %v1976 = vpack.c.bf16 %v1893, %v1892
        %v1977 = vpack.c.bf16 %v1895, %v1894
        %v1978 = vpack.c.bf16 %v1897, %v1896
        %v1979 = vpack.c.bf16 %v1899, %v1898
        %v1980 = vpack.c.bf16 %v1901, %v1900
        %v1981 = vpack.c.bf16 %v1903, %v1902
        %v1982 = vpack.c.bf16 %v1905, %v1904
        %v1983 = vpack.c.bf16 %v1907, %v1906
        %v1984 = vpack.c.bf16 %v1909, %v1908
        %v1985 = vpack.c.bf16 %v1911, %v1910
        %v1986 = vpack.c.bf16 %v1913, %v1912
        %v1987 = vpack.c.bf16 %v1915, %v1914
        %v2004 = vunpack.c.l.b16 %v1972
        %v2005 = vunpack.c.h.b16 %v1972
        %v2006 = vunpack.c.l.b16 %v1973
        %v2007 = vunpack.c.h.b16 %v1973
        %v2008 = vunpack.c.l.b16 %v1974
        %v2009 = vunpack.c.h.b16 %v1974
        %v2010 = vunpack.c.l.b16 %v1975
        %v2011 = vunpack.c.h.b16 %v1975
        %v2012 = vunpack.c.l.b16 %v1976
        %v2013 = vunpack.c.h.b16 %v1976
        %v2014 = vunpack.c.l.b16 %v1977
        %v2015 = vunpack.c.h.b16 %v1977
        %v2016 = vunpack.c.l.b16 %v1978
        %v2017 = vunpack.c.h.b16 %v1978
        %v2018 = vunpack.c.l.b16 %v1979
        %v2019 = vunpack.c.h.b16 %v1979
        %v2020 = vunpack.c.l.b16 %v1980
        %v2021 = vunpack.c.h.b16 %v1980
        %v2022 = vunpack.c.l.b16 %v1981
        %v2023 = vunpack.c.h.b16 %v1981
        %v2024 = vunpack.c.l.b16 %v1982
        %v2025 = vunpack.c.h.b16 %v1982
        %v2026 = vunpack.c.l.b16 %v1983
        %v2027 = vunpack.c.h.b16 %v1983
        %v2028 = vunpack.c.l.b16 %v1984
        %v2029 = vunpack.c.h.b16 %v1984
        %v2030 = vunpack.c.l.b16 %v1985
        %v2031 = vunpack.c.h.b16 %v1985
        %v2032 = vunpack.c.l.b16 %v1986
        %v2033 = vunpack.c.h.b16 %v1986
        %v2034 = vunpack.c.l.b16 %v1987
        %v2035 = vunpack.c.h.b16 %v1987
        %v2036 = vpack.c.b16 %v2004, %v2004
        %v2037 = vpack.c.b16 %v2005, %v2005
        %v2038 = vpack.c.b16 %v2006, %v2006
        %v2039 = vpack.c.b16 %v2007, %v2007
        %v2040 = vpack.c.b16 %v2008, %v2008
        %v2041 = vpack.c.b16 %v2009, %v2009
        %v2042 = vpack.c.b16 %v2010, %v2010
        %v2043 = vpack.c.b16 %v2011, %v2011
        %v2044 = vpack.c.b16 %v2012, %v2012
        %v2045 = vpack.c.b16 %v2013, %v2013
        %v2046 = vpack.c.b16 %v2014, %v2014
        %v2047 = vpack.c.b16 %v2015, %v2015
        %v2048 = vpack.c.b16 %v2016, %v2016
        %v2049 = vpack.c.b16 %v2017, %v2017
        %v2050 = vpack.c.b16 %v2018, %v2018
        %v2051 = vpack.c.b16 %v2019, %v2019
        %v2052 = vpack.c.b16 %v2020, %v2020
        %v2053 = vpack.c.b16 %v2021, %v2021
        %v2054 = vpack.c.b16 %v2022, %v2022
        %v2055 = vpack.c.b16 %v2023, %v2023
        %v2056 = vpack.c.b16 %v2024, %v2024
        %v2057 = vpack.c.b16 %v2025, %v2025
        %v2058 = vpack.c.b16 %v2026, %v2026
        %v2059 = vpack.c.b16 %v2027, %v2027
        %v2060 = vpack.c.b16 %v2028, %v2028
        %v2061 = vpack.c.b16 %v2029, %v2029
        %v2062 = vpack.c.b16 %v2030, %v2030
        %v2063 = vpack.c.b16 %v2031, %v2031
        %v2064 = vpack.c.b16 %v2032, %v2032
        %v2065 = vpack.c.b16 %v2033, %v2033
        %v2066 = vpack.c.b16 %v2034, %v2034
        %v2067 = vpack.c.b16 %v2035, %v2035
        %vm2068 = vsmask.f32 256
        %vm2069 = vsmask.f32 4368
        %vm2070 = vmor %vm2068, %vm2069
        %v2072 = vshrl.u32 %v2036, 16
        %v2074 = vrot.slane %v2072, 7
        %v2075 = vshll.u32 %v2036, 16
        %v2077 = vor.u32 %v2074, %v2075
        %v2078 = vrot.slane %v2074, 4
        %v2080 = vshrl.u32 %v2037, 16
        %v2082 = vrot.slane %v2080, 7
        %v2083 = vshll.u32 %v2037, 16
        %v2085 = vor.u32 %v2082, %v2083
        %v2086 = vsel %vm2070, %v2078, %v2085
        %v2087 = vrot.slane %v2082, 4
        %v2089 = vshrl.u32 %v2038, 16
        %v2091 = vrot.slane %v2089, 7
        %v2092 = vshll.u32 %v2038, 16
        %v2094 = vor.u32 %v2091, %v2092
        %v2095 = vrot.slane %v2091, 4
        %v2097 = vshrl.u32 %v2039, 16
        %v2099 = vrot.slane %v2097, 7
        %v2100 = vshll.u32 %v2039, 16
        %v2102 = vor.u32 %v2099, %v2100
        %v2103 = vsel %vm2070, %v2095, %v2102
        %v2104 = vrot.slane %v2099, 4
        %v2106 = vshrl.u32 %v2040, 16
        %v2108 = vrot.slane %v2106, 7
        %v2109 = vshll.u32 %v2040, 16
        %v2111 = vor.u32 %v2108, %v2109
        %v2112 = vrot.slane %v2108, 4
        %v2114 = vshrl.u32 %v2041, 16
        %v2116 = vrot.slane %v2114, 7
        %v2117 = vshll.u32 %v2041, 16
        %v2119 = vor.u32 %v2116, %v2117
        %v2120 = vsel %vm2070, %v2112, %v2119
        %v2121 = vrot.slane %v2116, 4
        %v2123 = vshrl.u32 %v2042, 16
        %v2125 = vrot.slane %v2123, 7
        %v2126 = vshll.u32 %v2042, 16
        %v2128 = vor.u32 %v2125, %v2126
        %v2129 = vrot.slane %v2125, 4
        %v2131 = vshrl.u32 %v2043, 16
        %v2133 = vrot.slane %v2131, 7
        %v2134 = vshll.u32 %v2043, 16
        %v2136 = vor.u32 %v2133, %v2134
        %v2137 = vsel %vm2070, %v2129, %v2136
        %v2138 = vrot.slane %v2133, 4
        %v2140 = vshrl.u32 %v2044, 16
        %v2142 = vrot.slane %v2140, 7
        %v2143 = vshll.u32 %v2044, 16
        %v2145 = vor.u32 %v2142, %v2143
        %v2146 = vrot.slane %v2142, 4
        %v2148 = vshrl.u32 %v2045, 16
        %v2150 = vrot.slane %v2148, 7
        %v2151 = vshll.u32 %v2045, 16
        %v2153 = vor.u32 %v2150, %v2151
        %v2154 = vsel %vm2070, %v2146, %v2153
        %v2155 = vrot.slane %v2150, 4
        %v2157 = vshrl.u32 %v2046, 16
        %v2159 = vrot.slane %v2157, 7
        %v2160 = vshll.u32 %v2046, 16
        %v2162 = vor.u32 %v2159, %v2160
        %v2163 = vrot.slane %v2159, 4
        %v2165 = vshrl.u32 %v2047, 16
        %v2167 = vrot.slane %v2165, 7
        %v2168 = vshll.u32 %v2047, 16
        %v2170 = vor.u32 %v2167, %v2168
        %v2171 = vsel %vm2070, %v2163, %v2170
        %v2172 = vrot.slane %v2167, 4
        %v2174 = vshrl.u32 %v2048, 16
        %v2176 = vrot.slane %v2174, 7
        %v2177 = vshll.u32 %v2048, 16
        %v2179 = vor.u32 %v2176, %v2177
        %v2180 = vrot.slane %v2176, 4
        %v2182 = vshrl.u32 %v2049, 16
        %v2184 = vrot.slane %v2182, 7
        %v2185 = vshll.u32 %v2049, 16
        %v2187 = vor.u32 %v2184, %v2185
        %v2188 = vsel %vm2070, %v2180, %v2187
        %v2189 = vrot.slane %v2184, 4
        %v2191 = vshrl.u32 %v2050, 16
        %v2193 = vrot.slane %v2191, 7
        %v2194 = vshll.u32 %v2050, 16
        %v2196 = vor.u32 %v2193, %v2194
        %v2197 = vrot.slane %v2193, 4
        %v2199 = vshrl.u32 %v2051, 16
        %v2201 = vrot.slane %v2199, 7
        %v2202 = vshll.u32 %v2051, 16
        %v2204 = vor.u32 %v2201, %v2202
        %v2205 = vsel %vm2070, %v2197, %v2204
        %v2206 = vrot.slane %v2201, 4
        %v2208 = vshrl.u32 %v2052, 16
        %v2210 = vrot.slane %v2208, 7
        %v2211 = vshll.u32 %v2052, 16
        %v2213 = vor.u32 %v2210, %v2211
        %v2214 = vrot.slane %v2210, 4
        %v2216 = vshrl.u32 %v2053, 16
        %v2218 = vrot.slane %v2216, 7
        %v2219 = vshll.u32 %v2053, 16
        %v2221 = vor.u32 %v2218, %v2219
        %v2222 = vsel %vm2070, %v2214, %v2221
        %v2223 = vrot.slane %v2218, 4
        %v2225 = vshrl.u32 %v2054, 16
        %v2227 = vrot.slane %v2225, 7
        %v2228 = vshll.u32 %v2054, 16
        %v2230 = vor.u32 %v2227, %v2228
        %v2231 = vrot.slane %v2227, 4
        %v2233 = vshrl.u32 %v2055, 16
        %v2235 = vrot.slane %v2233, 7
        %v2236 = vshll.u32 %v2055, 16
        %v2238 = vor.u32 %v2235, %v2236
        %v2239 = vsel %vm2070, %v2231, %v2238
        %v2240 = vrot.slane %v2235, 4
        %v2242 = vshrl.u32 %v2056, 16
        %v2244 = vrot.slane %v2242, 7
        %v2245 = vshll.u32 %v2056, 16
        %v2247 = vor.u32 %v2244, %v2245
        %v2248 = vrot.slane %v2244, 4
        %v2250 = vshrl.u32 %v2057, 16
        %v2252 = vrot.slane %v2250, 7
        %v2253 = vshll.u32 %v2057, 16
        %v2255 = vor.u32 %v2252, %v2253
        %v2256 = vsel %vm2070, %v2248, %v2255
        %v2257 = vrot.slane %v2252, 4
        %v2259 = vshrl.u32 %v2058, 16
        %v2261 = vrot.slane %v2259, 7
        %v2262 = vshll.u32 %v2058, 16
        %v2264 = vor.u32 %v2261, %v2262
        %v2265 = vrot.slane %v2261, 4
        %v2267 = vshrl.u32 %v2059, 16
        %v2269 = vrot.slane %v2267, 7
        %v2270 = vshll.u32 %v2059, 16
        %v2272 = vor.u32 %v2269, %v2270
        %v2273 = vsel %vm2070, %v2265, %v2272
        %v2274 = vrot.slane %v2269, 4
        %v2276 = vshrl.u32 %v2060, 16
        %v2278 = vrot.slane %v2276, 7
        %v2279 = vshll.u32 %v2060, 16
        %v2281 = vor.u32 %v2278, %v2279
        %v2282 = vrot.slane %v2278, 4
        %v2284 = vshrl.u32 %v2061, 16
        %v2286 = vrot.slane %v2284, 7
        %v2287 = vshll.u32 %v2061, 16
        %v2289 = vor.u32 %v2286, %v2287
        %v2290 = vsel %vm2070, %v2282, %v2289
        %v2291 = vrot.slane %v2286, 4
        %v2293 = vshrl.u32 %v2062, 16
        %v2295 = vrot.slane %v2293, 7
        %v2296 = vshll.u32 %v2062, 16
        %v2298 = vor.u32 %v2295, %v2296
        %v2299 = vrot.slane %v2295, 4
        %v2301 = vshrl.u32 %v2063, 16
        %v2303 = vrot.slane %v2301, 7
        %v2304 = vshll.u32 %v2063, 16
        %v2306 = vor.u32 %v2303, %v2304
        %v2307 = vsel %vm2070, %v2299, %v2306
        %v2308 = vrot.slane %v2303, 4
        %v2310 = vshrl.u32 %v2064, 16
        %v2312 = vrot.slane %v2310, 7
        %v2313 = vshll.u32 %v2064, 16
        %v2315 = vor.u32 %v2312, %v2313
        %v2316 = vrot.slane %v2312, 4
        %v2318 = vshrl.u32 %v2065, 16
        %v2320 = vrot.slane %v2318, 7
        %v2321 = vshll.u32 %v2065, 16
        %v2323 = vor.u32 %v2320, %v2321
        %v2324 = vsel %vm2070, %v2316, %v2323
        %v2325 = vrot.slane %v2320, 4
        %v2327 = vshrl.u32 %v2066, 16
        %v2329 = vrot.slane %v2327, 7
        %v2330 = vshll.u32 %v2066, 16
        %v2332 = vor.u32 %v2329, %v2330
        %v2333 = vrot.slane %v2329, 4
        %v2335 = vshrl.u32 %v2067, 16
        %v2337 = vrot.slane %v2335, 7
        %v2338 = vshll.u32 %v2067, 16
        %v2340 = vor.u32 %v2337, %v2338
        %v2341 = vsel %vm2070, %v2333, %v2340
        %v2342 = vrot.slane %v2337, 4
        %s2391 = scalar_lea.vmem [#allocation2], 12
        %vm2392 = vcmask 519168
        %vm2393 = vsmask.f32 7938
        %vm2394 = vmand %vm2392, %vm2393
        %v2395 = vld [vmem:[%s2391] sm:$0xf]
        %v2396 = vsel %vm2394, %v2077, %v2395
        %2397 = vst [vmem:[%s2391] sm:$0xf] %v2396
        %2398 = vst.msk [vmem:[%s2391 + $0x4] sm:$0xf] %vm1916, %v2086
        %vm2399 = vcmask 516096
        %vm2400 = vmand %vm2399, %vm2068
        %v2401 = vld [vmem:[%s2391 + $0x8] sm:$0x1]
        %v2402 = vsel %vm2400, %v2087, %v2401
        %2403 = vst [vmem:[%s2391 + $0x8] sm:$0x1] %v2402
        %v2404 = vld [vmem:[%s2391 + $0xc] sm:$0xf]
        %v2405 = vsel %vm2394, %v2094, %v2404
        %2406 = vst [vmem:[%s2391 + $0xc] sm:$0xf] %v2405
        %2407 = vst.msk [vmem:[%s2391 + $0x10] sm:$0xf] %vm1916, %v2103
        %v2408 = vld [vmem:[%s2391 + $0x14] sm:$0x1]
        %v2409 = vsel %vm2400, %v2104, %v2408
        %2410 = vst [vmem:[%s2391 + $0x14] sm:$0x1] %v2409
        %v2411 = vld [vmem:[%s2391 + $0x18] sm:$0xf]
        %v2412 = vsel %vm2394, %v2111, %v2411
        %2413 = vst [vmem:[%s2391 + $0x18] sm:$0xf] %v2412
        %2414 = vst.msk [vmem:[%s2391 + $0x1c] sm:$0xf] %vm1916, %v2120
        %v2415 = vld [vmem:[%s2391 + $0x20] sm:$0x1]
        %v2416 = vsel %vm2400, %v2121, %v2415
        %2417 = vst [vmem:[%s2391 + $0x20] sm:$0x1] %v2416
        %v2418 = vld [vmem:[%s2391 + $0x24] sm:$0xf]
        %v2419 = vsel %vm2394, %v2128, %v2418
        %2420 = vst [vmem:[%s2391 + $0x24] sm:$0xf] %v2419
        %2421 = vst.msk [vmem:[%s2391 + $0x28] sm:$0xf] %vm1916, %v2137
        %v2422 = vld [vmem:[%s2391 + $0x2c] sm:$0x1]
        %v2423 = vsel %vm2400, %v2138, %v2422
        %2424 = vst [vmem:[%s2391 + $0x2c] sm:$0x1] %v2423
        %v2425 = vld [vmem:[%s2391 + $0x30] sm:$0xf]
        %v2426 = vsel %vm2394, %v2145, %v2425
        %2427 = vst [vmem:[%s2391 + $0x30] sm:$0xf] %v2426
        %2428 = vst.msk [vmem:[%s2391 + $0x34] sm:$0xf] %vm1916, %v2154
        %v2429 = vld [vmem:[%s2391 + $0x38] sm:$0x1]
        %v2430 = vsel %vm2400, %v2155, %v2429
        %2431 = vst [vmem:[%s2391 + $0x38] sm:$0x1] %v2430
        %v2432 = vld [vmem:[%s2391 + $0x3c] sm:$0xf]
        %v2433 = vsel %vm2394, %v2162, %v2432
        %2434 = vst [vmem:[%s2391 + $0x3c] sm:$0xf] %v2433
        %2435 = vst.msk [vmem:[%s2391 + $0x40] sm:$0xf] %vm1916, %v2171
        %v2436 = vld [vmem:[%s2391 + $0x44] sm:$0x1]
        %v2437 = vsel %vm2400, %v2172, %v2436
        %2438 = vst [vmem:[%s2391 + $0x44] sm:$0x1] %v2437
        %v2439 = vld [vmem:[%s2391 + $0x48] sm:$0xf]
        %v2440 = vsel %vm2394, %v2179, %v2439
        %2441 = vst [vmem:[%s2391 + $0x48] sm:$0xf] %v2440
        %2442 = vst.msk [vmem:[%s2391 + $0x4c] sm:$0xf] %vm1916, %v2188
        %v2443 = vld [vmem:[%s2391 + $0x50] sm:$0x1]
        %v2444 = vsel %vm2400, %v2189, %v2443
        %2445 = vst [vmem:[%s2391 + $0x50] sm:$0x1] %v2444
        %v2446 = vld [vmem:[%s2391 + $0x54] sm:$0xf]
        %v2447 = vsel %vm2394, %v2196, %v2446
        %2448 = vst [vmem:[%s2391 + $0x54] sm:$0xf] %v2447
        %2449 = vst.msk [vmem:[%s2391 + $0x58] sm:$0xf] %vm1916, %v2205
        %v2450 = vld [vmem:[%s2391 + $0x5c] sm:$0x1]
        %v2451 = vsel %vm2400, %v2206, %v2450
        %2452 = vst [vmem:[%s2391 + $0x5c] sm:$0x1] %v2451
        %v2453 = vld [vmem:[%s2391 + $0x60] sm:$0xf]
        %v2454 = vsel %vm2394, %v2213, %v2453
        %2455 = vst [vmem:[%s2391 + $0x60] sm:$0xf] %v2454
        %2456 = vst.msk [vmem:[%s2391 + $0x64] sm:$0xf] %vm1916, %v2222
        %v2457 = vld [vmem:[%s2391 + $0x68] sm:$0x1]
        %v2458 = vsel %vm2400, %v2223, %v2457
        %2459 = vst [vmem:[%s2391 + $0x68] sm:$0x1] %v2458
        %v2460 = vld [vmem:[%s2391 + $0x6c] sm:$0xf]
        %v2461 = vsel %vm2394, %v2230, %v2460
        %2462 = vst [vmem:[%s2391 + $0x6c] sm:$0xf] %v2461
        %2463 = vst.msk [vmem:[%s2391 + $0x70] sm:$0xf] %vm1916, %v2239
        %v2464 = vld [vmem:[%s2391 + $0x74] sm:$0x1]
        %v2465 = vsel %vm2400, %v2240, %v2464
        %2466 = vst [vmem:[%s2391 + $0x74] sm:$0x1] %v2465
        %v2467 = vld [vmem:[%s2391 + $0x78] sm:$0xf]
        %v2468 = vsel %vm2394, %v2247, %v2467
        %2469 = vst [vmem:[%s2391 + $0x78] sm:$0xf] %v2468
        %2470 = vst.msk [vmem:[%s2391 + $0x7c] sm:$0xf] %vm1916, %v2256
        %v2471 = vld [vmem:[%s2391 + $0x80] sm:$0x1]
        %v2472 = vsel %vm2400, %v2257, %v2471
        %2473 = vst [vmem:[%s2391 + $0x80] sm:$0x1] %v2472
        %v2474 = vld [vmem:[%s2391 + $0x84] sm:$0xf]
        %v2475 = vsel %vm2394, %v2264, %v2474
        %2476 = vst [vmem:[%s2391 + $0x84] sm:$0xf] %v2475
        %2477 = vst.msk [vmem:[%s2391 + $0x88] sm:$0xf] %vm1916, %v2273
        %v2478 = vld [vmem:[%s2391 + $0x8c] sm:$0x1]
        %v2479 = vsel %vm2400, %v2274, %v2478
        %2480 = vst [vmem:[%s2391 + $0x8c] sm:$0x1] %v2479
        %v2481 = vld [vmem:[%s2391 + $0x90] sm:$0xf]
        %v2482 = vsel %vm2394, %v2281, %v2481
        %2483 = vst [vmem:[%s2391 + $0x90] sm:$0xf] %v2482
        %2484 = vst.msk [vmem:[%s2391 + $0x94] sm:$0xf] %vm1916, %v2290
        %v2485 = vld [vmem:[%s2391 + $0x98] sm:$0x1]
        %v2486 = vsel %vm2400, %v2291, %v2485
        %2487 = vst [vmem:[%s2391 + $0x98] sm:$0x1] %v2486
        %v2488 = vld [vmem:[%s2391 + $0x9c] sm:$0xf]
        %v2489 = vsel %vm2394, %v2298, %v2488
        %2490 = vst [vmem:[%s2391 + $0x9c] sm:$0xf] %v2489
        %2491 = vst.msk [vmem:[%s2391 + $0xa0] sm:$0xf] %vm1916, %v2307
        %v2492 = vld [vmem:[%s2391 + $0xa4] sm:$0x1]
        %v2493 = vsel %vm2400, %v2308, %v2492
        %2494 = vst [vmem:[%s2391 + $0xa4] sm:$0x1] %v2493
        %v2495 = vld [vmem:[%s2391 + $0xa8] sm:$0xf]
        %v2496 = vsel %vm2394, %v2315, %v2495
        %2497 = vst [vmem:[%s2391 + $0xa8] sm:$0xf] %v2496
        %2498 = vst.msk [vmem:[%s2391 + $0xac] sm:$0xf] %vm1916, %v2324
        %v2499 = vld [vmem:[%s2391 + $0xb0] sm:$0x1]
        %v2500 = vsel %vm2400, %v2325, %v2499
        %2501 = vst [vmem:[%s2391 + $0xb0] sm:$0x1] %v2500
        %v2502 = vld [vmem:[%s2391 + $0xb4] sm:$0xf]
        %v2503 = vsel %vm2394, %v2332, %v2502
        %2504 = vst [vmem:[%s2391 + $0xb4] sm:$0xf] %v2503
        %2505 = vst.msk [vmem:[%s2391 + $0xb8] sm:$0xf] %vm1916, %v2341
        %v2506 = vld [vmem:[%s2391 + $0xbc] sm:$0x1]
        %v2507 = vsel %vm2400, %v2342, %v2506
        %2508 = vst [vmem:[%s2391 + $0xbc] sm:$0x1] %v2507
        %v2509 = vld [vmem:[#allocation2] sm:$0xf]
        %v2510 = vld [vmem:[#allocation2 + $0x4] sm:$0xf]
        %v2511 = vld [vmem:[#allocation2 + $0xc] sm:$0xf]
        %v2512 = vld [vmem:[#allocation2 + $0x10] sm:$0xf]
        %v2513 = vld [vmem:[#allocation2 + $0x18] sm:$0xf]
        %v2514 = vld [vmem:[#allocation2 + $0x1c] sm:$0xf]
        %v2515 = vld [vmem:[#allocation2 + $0x24] sm:$0xf]
        %v2516 = vld [vmem:[#allocation2 + $0x28] sm:$0xf]
        %v2517 = vld [vmem:[#allocation2 + $0x30] sm:$0xf]
        %v2518 = vld [vmem:[#allocation2 + $0x34] sm:$0xf]
        %v2519 = vld [vmem:[#allocation2 + $0x3c] sm:$0xf]
        %v2520 = vld [vmem:[#allocation2 + $0x40] sm:$0xf]
        %v2521 = vld [vmem:[#allocation2 + $0x48] sm:$0xf]
        %v2522 = vld [vmem:[#allocation2 + $0x4c] sm:$0xf]
        %v2523 = vld [vmem:[#allocation2 + $0x54] sm:$0xf]
        %v2524 = vld [vmem:[#allocation2 + $0x58] sm:$0xf]
        %v2525 = vld [vmem:[#allocation2 + $0x60] sm:$0xf]
        %v2526 = vld [vmem:[#allocation2 + $0x64] sm:$0xf]
        %v2527 = vld [vmem:[#allocation2 + $0x6c] sm:$0xf]
        %v2528 = vld [vmem:[#allocation2 + $0x70] sm:$0xf]
        %v2529 = vld [vmem:[#allocation2 + $0x78] sm:$0xf]
        %v2530 = vld [vmem:[#allocation2 + $0x7c] sm:$0xf]
        %v2531 = vld [vmem:[#allocation2 + $0x84] sm:$0xf]
        %v2532 = vld [vmem:[#allocation2 + $0x88] sm:$0xf]
        %v2533 = vld [vmem:[#allocation2 + $0x90] sm:$0xf]
        %v2534 = vld [vmem:[#allocation2 + $0x94] sm:$0xf]
        %v2535 = vld [vmem:[#allocation2 + $0x9c] sm:$0xf]
        %v2536 = vld [vmem:[#allocation2 + $0xa0] sm:$0xf]
        %v2537 = vld [vmem:[#allocation2 + $0xa8] sm:$0xf]
        %v2538 = vld [vmem:[#allocation2 + $0xac] sm:$0xf]
        %v2539 = vld [vmem:[#allocation2 + $0xb4] sm:$0xf]
        %v2540 = vld [vmem:[#allocation2 + $0xb8] sm:$0xf]
        %v2541 = vld [vmem:[#allocation2 + $0xc0] sm:$0xf]
        %v2542 = vld [vmem:[#allocation2 + $0xc4] sm:$0xf]
        %v2543 = vld [vmem:[#allocation2 + $0xcc] sm:$0xf]
        %v2544 = vld [vmem:[#allocation2 + $0xd0] sm:$0xf]
        %v2545 = vld [vmem:[#allocation2 + $0x8] sm:$0x1]
        %v2546 = vld [vmem:[#allocation2 + $0x14] sm:$0x1]
        %v2547 = vld [vmem:[#allocation2 + $0x20] sm:$0x1]
        %v2548 = vld [vmem:[#allocation2 + $0x2c] sm:$0x1]
        %v2549 = vld [vmem:[#allocation2 + $0x38] sm:$0x1]
        %v2550 = vld [vmem:[#allocation2 + $0x44] sm:$0x1]
        %v2551 = vld [vmem:[#allocation2 + $0x50] sm:$0x1]
        %v2552 = vld [vmem:[#allocation2 + $0x5c] sm:$0x1]
        %v2553 = vld [vmem:[#allocation2 + $0x68] sm:$0x1]
        %v2554 = vld [vmem:[#allocation2 + $0x74] sm:$0x1]
        %v2555 = vld [vmem:[#allocation2 + $0x80] sm:$0x1]
        %v2556 = vld [vmem:[#allocation2 + $0x8c] sm:$0x1]
        %v2557 = vld [vmem:[#allocation2 + $0x98] sm:$0x1]
        %v2558 = vld [vmem:[#allocation2 + $0xa4] sm:$0x1]
        %v2559 = vld [vmem:[#allocation2 + $0xb0] sm:$0x1]
        %v2560 = vld [vmem:[#allocation2 + $0xbc] sm:$0x1]
        %v2561 = vld [vmem:[#allocation2 + $0xc8] sm:$0x1]
        %v2562 = vld [vmem:[#allocation2 + $0xd4] sm:$0x1]
        %v2563 = vld [vmem:[#allocation2] sm:$0xe]
        %v2564 = vld [vmem:[#allocation2 + $0xc] sm:$0xe]
        %v2565 = vld [vmem:[#allocation2 + $0x18] sm:$0xe]
        %v2566 = vld [vmem:[#allocation2 + $0x24] sm:$0xe]
        %v2567 = vld [vmem:[#allocation2 + $0x30] sm:$0xe]
        %v2568 = vld [vmem:[#allocation2 + $0x3c] sm:$0xe]
        %v2569 = vld [vmem:[#allocation2 + $0x48] sm:$0xe]
        %v2570 = vld [vmem:[#allocation2 + $0x54] sm:$0xe]
        %v2571 = vld [vmem:[#allocation2 + $0x60] sm:$0xe]
        %v2572 = vld [vmem:[#allocation2 + $0x6c] sm:$0xe]
        %v2573 = vld [vmem:[#allocation2 + $0x78] sm:$0xe]
        %v2574 = vld [vmem:[#allocation2 + $0x84] sm:$0xe]
        %v2575 = vld [vmem:[#allocation2 + $0x90] sm:$0xe]
        %v2576 = vld [vmem:[#allocation2 + $0x9c] sm:$0xe]
        %v2577 = vld [vmem:[#allocation2 + $0xa8] sm:$0xe]
        %v2578 = vld [vmem:[#allocation2 + $0xb4] sm:$0xe]
        %v2579 = vld [vmem:[#allocation2 + $0xc0] sm:$0xe]
        %v2580 = vld [vmem:[#allocation2 + $0xcc] sm:$0xe]
        %v2617 = vunpack.c.l.b16 %v2509
        %v2618 = vunpack.c.l.b16 %v2510
        %v2619 = vunpack.c.l.b16 %v2511
        %v2620 = vunpack.c.l.b16 %v2512
        %v2621 = vunpack.c.l.b16 %v2513
        %v2622 = vunpack.c.l.b16 %v2514
        %v2623 = vunpack.c.l.b16 %v2515
        %v2624 = vunpack.c.l.b16 %v2516
        %v2625 = vunpack.c.l.b16 %v2517
        %v2626 = vunpack.c.l.b16 %v2518
        %v2627 = vunpack.c.l.b16 %v2519
        %v2628 = vunpack.c.l.b16 %v2520
        %v2629 = vunpack.c.l.b16 %v2521
        %v2630 = vunpack.c.l.b16 %v2522
        %v2631 = vunpack.c.l.b16 %v2523
        %v2632 = vunpack.c.l.b16 %v2524
        %v2633 = vunpack.c.l.b16 %v2525
        %v2634 = vunpack.c.l.b16 %v2526
        %v2635 = vunpack.c.l.b16 %v2527
        %v2636 = vunpack.c.l.b16 %v2528
        %v2637 = vunpack.c.l.b16 %v2529
        %v2638 = vunpack.c.l.b16 %v2530
        %v2639 = vunpack.c.l.b16 %v2531
        %v2640 = vunpack.c.l.b16 %v2532
        %v2641 = vunpack.c.l.b16 %v2533
        %v2642 = vunpack.c.l.b16 %v2534
        %v2643 = vunpack.c.l.b16 %v2535
        %v2644 = vunpack.c.l.b16 %v2536
        %v2645 = vunpack.c.l.b16 %v2537
        %v2646 = vunpack.c.l.b16 %v2538
        %v2647 = vunpack.c.l.b16 %v2539
        %v2648 = vunpack.c.l.b16 %v2540
        %v2649 = vunpack.c.l.b16 %v2541
        %v2650 = vunpack.c.l.b16 %v2542
        %v2651 = vunpack.c.l.b16 %v2543
        %v2652 = vunpack.c.l.b16 %v2544
        %v2653 = vpack.c.b16 %v2618, %v2617
        %v2654 = vpack.c.b16 %v2620, %v2619
        %v2655 = vpack.c.b16 %v2622, %v2621
        %v2656 = vpack.c.b16 %v2624, %v2623
        %v2657 = vpack.c.b16 %v2626, %v2625
        %v2658 = vpack.c.b16 %v2628, %v2627
        %v2659 = vpack.c.b16 %v2630, %v2629
        %v2660 = vpack.c.b16 %v2632, %v2631
        %v2661 = vpack.c.b16 %v2634, %v2633
        %v2662 = vpack.c.b16 %v2636, %v2635
        %v2663 = vpack.c.b16 %v2638, %v2637
        %v2664 = vpack.c.b16 %v2640, %v2639
        %v2665 = vpack.c.b16 %v2642, %v2641
        %v2666 = vpack.c.b16 %v2644, %v2643
        %v2667 = vpack.c.b16 %v2646, %v2645
        %v2668 = vpack.c.b16 %v2648, %v2647
        %v2669 = vpack.c.b16 %v2650, %v2649
        %v2670 = vpack.c.b16 %v2652, %v2651
        %v2689 = vunpack.c.l.b16 %v2545
        %v2690 = vunpack.c.l.b16 %v2546
        %v2691 = vunpack.c.l.b16 %v2547
        %v2692 = vunpack.c.l.b16 %v2548
        %v2693 = vunpack.c.l.b16 %v2549
        %v2694 = vunpack.c.l.b16 %v2550
        %v2695 = vunpack.c.l.b16 %v2551
        %v2696 = vunpack.c.l.b16 %v2552
        %v2697 = vunpack.c.l.b16 %v2553
        %v2698 = vunpack.c.l.b16 %v2554
        %v2699 = vunpack.c.l.b16 %v2555
        %v2700 = vunpack.c.l.b16 %v2556
        %v2701 = vunpack.c.l.b16 %v2557
        %v2702 = vunpack.c.l.b16 %v2558
        %v2703 = vunpack.c.l.b16 %v2559
        %v2704 = vunpack.c.l.b16 %v2560
        %v2705 = vunpack.c.l.b16 %v2561
        %v2706 = vunpack.c.l.b16 %v2562
        %v2707 = vpack.c.b16 %v2689, %v2689
        %v2708 = vpack.c.b16 %v2690, %v2690
        %v2709 = vpack.c.b16 %v2691, %v2691
        %v2710 = vpack.c.b16 %v2692, %v2692
        %v2711 = vpack.c.b16 %v2693, %v2693
        %v2712 = vpack.c.b16 %v2694, %v2694
        %v2713 = vpack.c.b16 %v2695, %v2695
        %v2714 = vpack.c.b16 %v2696, %v2696
        %v2715 = vpack.c.b16 %v2697, %v2697
        %v2716 = vpack.c.b16 %v2698, %v2698
        %v2717 = vpack.c.b16 %v2699, %v2699
        %v2718 = vpack.c.b16 %v2700, %v2700
        %v2719 = vpack.c.b16 %v2701, %v2701
        %v2720 = vpack.c.b16 %v2702, %v2702
        %v2721 = vpack.c.b16 %v2703, %v2703
        %v2722 = vpack.c.b16 %v2704, %v2704
        %v2723 = vpack.c.b16 %v2705, %v2705
        %v2724 = vpack.c.b16 %v2706, %v2706
        %vm2725 = vsmask.f32 7424
        %v2727 = vshrl.u32 %v2653, 16
        %v2729 = vshll.u32 %v2653, 16
        %v2731 = vrot.slane %v2729, 1
        %v2732 = vor.u32 %v2727, %v2731
        %v2734 = vshll.u32 %v2707, 16
        %v2736 = vrot.slane %v2734, 1
        %v2737 = vsel %vm2725, %v2732, %v2736
        %v2739 = vshrl.u32 %v2654, 16
        %v2741 = vshll.u32 %v2654, 16
        %v2743 = vrot.slane %v2741, 1
        %v2744 = vor.u32 %v2739, %v2743
        %v2746 = vshll.u32 %v2708, 16
        %v2748 = vrot.slane %v2746, 1
        %v2749 = vsel %vm2725, %v2744, %v2748
        %v2751 = vshrl.u32 %v2655, 16
        %v2753 = vshll.u32 %v2655, 16
        %v2755 = vrot.slane %v2753, 1
        %v2756 = vor.u32 %v2751, %v2755
        %v2758 = vshll.u32 %v2709, 16
        %v2760 = vrot.slane %v2758, 1
        %v2761 = vsel %vm2725, %v2756, %v2760
        %v2763 = vshrl.u32 %v2656, 16
        %v2765 = vshll.u32 %v2656, 16
        %v2767 = vrot.slane %v2765, 1
        %v2768 = vor.u32 %v2763, %v2767
        %v2770 = vshll.u32 %v2710, 16
        %v2772 = vrot.slane %v2770, 1
        %v2773 = vsel %vm2725, %v2768, %v2772
        %v2775 = vshrl.u32 %v2657, 16
        %v2777 = vshll.u32 %v2657, 16
        %v2779 = vrot.slane %v2777, 1
        %v2780 = vor.u32 %v2775, %v2779
        %v2782 = vshll.u32 %v2711, 16
        %v2784 = vrot.slane %v2782, 1
        %v2785 = vsel %vm2725, %v2780, %v2784
        %v2787 = vshrl.u32 %v2658, 16
        %v2789 = vshll.u32 %v2658, 16
        %v2791 = vrot.slane %v2789, 1
        %v2792 = vor.u32 %v2787, %v2791
        %v2794 = vshll.u32 %v2712, 16
        %v2796 = vrot.slane %v2794, 1
        %v2797 = vsel %vm2725, %v2792, %v2796
        %v2799 = vshrl.u32 %v2659, 16
        %v2801 = vshll.u32 %v2659, 16
        %v2803 = vrot.slane %v2801, 1
        %v2804 = vor.u32 %v2799, %v2803
        %v2806 = vshll.u32 %v2713, 16
        %v2808 = vrot.slane %v2806, 1
        %v2809 = vsel %vm2725, %v2804, %v2808
        %v2811 = vshrl.u32 %v2660, 16
        %v2813 = vshll.u32 %v2660, 16
        %v2815 = vrot.slane %v2813, 1
        %v2816 = vor.u32 %v2811, %v2815
        %v2818 = vshll.u32 %v2714, 16
        %v2820 = vrot.slane %v2818, 1
        %v2821 = vsel %vm2725, %v2816, %v2820
        %v2823 = vshrl.u32 %v2661, 16
        %v2825 = vshll.u32 %v2661, 16
        %v2827 = vrot.slane %v2825, 1
        %v2828 = vor.u32 %v2823, %v2827
        %v2830 = vshll.u32 %v2715, 16
        %v2832 = vrot.slane %v2830, 1
        %v2833 = vsel %vm2725, %v2828, %v2832
        %v2835 = vshrl.u32 %v2662, 16
        %v2837 = vshll.u32 %v2662, 16
        %v2839 = vrot.slane %v2837, 1
        %v2840 = vor.u32 %v2835, %v2839
        %v2842 = vshll.u32 %v2716, 16
        %v2844 = vrot.slane %v2842, 1
        %v2845 = vsel %vm2725, %v2840, %v2844
        %v2847 = vshrl.u32 %v2663, 16
        %v2849 = vshll.u32 %v2663, 16
        %v2851 = vrot.slane %v2849, 1
        %v2852 = vor.u32 %v2847, %v2851
        %v2854 = vshll.u32 %v2717, 16
        %v2856 = vrot.slane %v2854, 1
        %v2857 = vsel %vm2725, %v2852, %v2856
        %v2859 = vshrl.u32 %v2664, 16
        %v2861 = vshll.u32 %v2664, 16
        %v2863 = vrot.slane %v2861, 1
        %v2864 = vor.u32 %v2859, %v2863
        %v2866 = vshll.u32 %v2718, 16
        %v2868 = vrot.slane %v2866, 1
        %v2869 = vsel %vm2725, %v2864, %v2868
        %v2871 = vshrl.u32 %v2665, 16
        %v2873 = vshll.u32 %v2665, 16
        %v2875 = vrot.slane %v2873, 1
        %v2876 = vor.u32 %v2871, %v2875
        %v2878 = vshll.u32 %v2719, 16
        %v2880 = vrot.slane %v2878, 1
        %v2881 = vsel %vm2725, %v2876, %v2880
        %v2883 = vshrl.u32 %v2666, 16
        %v2885 = vshll.u32 %v2666, 16
        %v2887 = vrot.slane %v2885, 1
        %v2888 = vor.u32 %v2883, %v2887
        %v2890 = vshll.u32 %v2720, 16
        %v2892 = vrot.slane %v2890, 1
        %v2893 = vsel %vm2725, %v2888, %v2892
        %v2895 = vshrl.u32 %v2667, 16
        %v2897 = vshll.u32 %v2667, 16
        %v2899 = vrot.slane %v2897, 1
        %v2900 = vor.u32 %v2895, %v2899
        %v2902 = vshll.u32 %v2721, 16
        %v2904 = vrot.slane %v2902, 1
        %v2905 = vsel %vm2725, %v2900, %v2904
        %v2907 = vshrl.u32 %v2668, 16
        %v2909 = vshll.u32 %v2668, 16
        %v2911 = vrot.slane %v2909, 1
        %v2912 = vor.u32 %v2907, %v2911
        %v2914 = vshll.u32 %v2722, 16
        %v2916 = vrot.slane %v2914, 1
        %v2917 = vsel %vm2725, %v2912, %v2916
        %v2919 = vshrl.u32 %v2669, 16
        %v2921 = vshll.u32 %v2669, 16
        %v2923 = vrot.slane %v2921, 1
        %v2924 = vor.u32 %v2919, %v2923
        %v2926 = vshll.u32 %v2723, 16
        %v2928 = vrot.slane %v2926, 1
        %v2929 = vsel %vm2725, %v2924, %v2928
        %v2931 = vshrl.u32 %v2670, 16
        %v2933 = vshll.u32 %v2670, 16
        %v2935 = vrot.slane %v2933, 1
        %v2936 = vor.u32 %v2931, %v2935
        %v2938 = vshll.u32 %v2724, 16
        %v2940 = vrot.slane %v2938, 1
        %v2941 = vsel %vm2725, %v2936, %v2940
        %2942 = vrot.lane.b32.xlu0 %v2737, 64
        %v2943 = vpop.permute.xlu0 %2942
        %2944 = vrot.lane.b32.xlu0 %v2749, 64
        %v2945 = vpop.permute.xlu0 %2944
        %2946 = vrot.lane.b32.xlu0 %v2761, 64
        %v2947 = vpop.permute.xlu0 %2946
        %2948 = vrot.lane.b32.xlu0 %v2773, 64
        %v2949 = vpop.permute.xlu0 %2948
        %2950 = vrot.lane.b32.xlu0 %v2785, 64
        %v2951 = vpop.permute.xlu0 %2950
        %2952 = vrot.lane.b32.xlu0 %v2797, 64
        %v2953 = vpop.permute.xlu0 %2952
        %2954 = vrot.lane.b32.xlu0 %v2809, 64
        %v2955 = vpop.permute.xlu0 %2954
        %2956 = vrot.lane.b32.xlu0 %v2821, 64
        %v2957 = vpop.permute.xlu0 %2956
        %2958 = vrot.lane.b32.xlu0 %v2833, 64
        %v2959 = vpop.permute.xlu0 %2958
        %2960 = vrot.lane.b32.xlu0 %v2845, 64
        %v2961 = vpop.permute.xlu0 %2960
        %2962 = vrot.lane.b32.xlu0 %v2857, 64
        %v2963 = vpop.permute.xlu0 %2962
        %2964 = vrot.lane.b32.xlu0 %v2869, 64
        %v2965 = vpop.permute.xlu0 %2964
        %2966 = vrot.lane.b32.xlu0 %v2881, 64
        %v2967 = vpop.permute.xlu0 %2966
        %2968 = vrot.lane.b32.xlu0 %v2893, 64
        %v2969 = vpop.permute.xlu0 %2968
        %2970 = vrot.lane.b32.xlu0 %v2905, 64
        %v2971 = vpop.permute.xlu0 %2970
        %2972 = vrot.lane.b32.xlu0 %v2917, 64
        %v2973 = vpop.permute.xlu0 %2972
        %2974 = vrot.lane.b32.xlu0 %v2929, 64
        %v2975 = vpop.permute.xlu0 %2974
        %2976 = vrot.lane.b32.xlu0 %v2941, 64
        %v2977 = vpop.permute.xlu0 %2976
        %v2996 = vunpack.c.l.b16 %v2563
        %v2997 = vunpack.c.l.b16 %v2564
        %v2998 = vunpack.c.l.b16 %v2565
        %v2999 = vunpack.c.l.b16 %v2566
        %v3000 = vunpack.c.l.b16 %v2567
        %v3001 = vunpack.c.l.b16 %v2568
        %v3002 = vunpack.c.l.b16 %v2569
        %v3003 = vunpack.c.l.b16 %v2570
        %v3004 = vunpack.c.l.b16 %v2571
        %v3005 = vunpack.c.l.b16 %v2572
        %v3006 = vunpack.c.l.b16 %v2573
        %v3007 = vunpack.c.l.b16 %v2574
        %v3008 = vunpack.c.l.b16 %v2575
        %v3009 = vunpack.c.l.b16 %v2576
        %v3010 = vunpack.c.l.b16 %v2577
        %v3011 = vunpack.c.l.b16 %v2578
        %v3012 = vunpack.c.l.b16 %v2579
        %v3013 = vunpack.c.l.b16 %v2580
        %v3014 = vpack.c.b16 %v2618, %v2996
        %v3015 = vpack.c.b16 %v2620, %v2997
        %v3016 = vpack.c.b16 %v2622, %v2998
        %v3017 = vpack.c.b16 %v2624, %v2999
        %v3018 = vpack.c.b16 %v2626, %v3000
        %v3019 = vpack.c.b16 %v2628, %v3001
        %v3020 = vpack.c.b16 %v2630, %v3002
        %v3021 = vpack.c.b16 %v2632, %v3003
        %v3022 = vpack.c.b16 %v2634, %v3004
        %v3023 = vpack.c.b16 %v2636, %v3005
        %v3024 = vpack.c.b16 %v2638, %v3006
        %v3025 = vpack.c.b16 %v2640, %v3007
        %v3026 = vpack.c.b16 %v2642, %v3008
        %v3027 = vpack.c.b16 %v2644, %v3009
        %v3028 = vpack.c.b16 %v2646, %v3010
        %v3029 = vpack.c.b16 %v2648, %v3011
        %v3030 = vpack.c.b16 %v2650, %v3012
        %v3031 = vpack.c.b16 %v2652, %v3013
        %vm3032 = vcmask 1046528
        %v3033 = vrot.slane %v3014, 1
        %v3034 = vrot.slane %v2707, 1
        %v3035 = vsel %vm3032, %v3033, %v3034
        %v3036 = vrot.slane %v3015, 1
        %v3037 = vrot.slane %v2708, 1
        %v3038 = vsel %vm3032, %v3036, %v3037
        %v3039 = vrot.slane %v3016, 1
        %v3040 = vrot.slane %v2709, 1
        %v3041 = vsel %vm3032, %v3039, %v3040
        %v3042 = vrot.slane %v3017, 1
        %v3043 = vrot.slane %v2710, 1
        %v3044 = vsel %vm3032, %v3042, %v3043
        %v3045 = vrot.slane %v3018, 1
        %v3046 = vrot.slane %v2711, 1
        %v3047 = vsel %vm3032, %v3045, %v3046
        %v3048 = vrot.slane %v3019, 1
        %v3049 = vrot.slane %v2712, 1
        %v3050 = vsel %vm3032, %v3048, %v3049
        %v3051 = vrot.slane %v3020, 1
        %v3052 = vrot.slane %v2713, 1
        %v3053 = vsel %vm3032, %v3051, %v3052
        %v3054 = vrot.slane %v3021, 1
        %v3055 = vrot.slane %v2714, 1
        %v3056 = vsel %vm3032, %v3054, %v3055
        %v3057 = vrot.slane %v3022, 1
        %v3058 = vrot.slane %v2715, 1
        %v3059 = vsel %vm3032, %v3057, %v3058
        %v3060 = vrot.slane %v3023, 1
        %v3061 = vrot.slane %v2716, 1
        %v3062 = vsel %vm3032, %v3060, %v3061
        %v3063 = vrot.slane %v3024, 1
        %v3064 = vrot.slane %v2717, 1
        %v3065 = vsel %vm3032, %v3063, %v3064
        %v3066 = vrot.slane %v3025, 1
        %v3067 = vrot.slane %v2718, 1
        %v3068 = vsel %vm3032, %v3066, %v3067
        %v3069 = vrot.slane %v3026, 1
        %v3070 = vrot.slane %v2719, 1
        %v3071 = vsel %vm3032, %v3069, %v3070
        %v3072 = vrot.slane %v3027, 1
        %v3073 = vrot.slane %v2720, 1
        %v3074 = vsel %vm3032, %v3072, %v3073
        %v3075 = vrot.slane %v3028, 1
        %v3076 = vrot.slane %v2721, 1
        %v3077 = vsel %vm3032, %v3075, %v3076
        %v3078 = vrot.slane %v3029, 1
        %v3079 = vrot.slane %v2722, 1
        %v3080 = vsel %vm3032, %v3078, %v3079
        %v3081 = vrot.slane %v3030, 1
        %v3082 = vrot.slane %v2723, 1
        %v3083 = vsel %vm3032, %v3081, %v3082
        %v3084 = vrot.slane %v3031, 1
        %v3085 = vrot.slane %v2724, 1
        %v3086 = vsel %vm3032, %v3084, %v3085
        %v3088 = vsel %vm629, %v2653, %v2943
        %v3091 = vsel %vm629, %v2654, %v2945
        %v3094 = vsel %vm629, %v2655, %v2947
        %v3097 = vsel %vm629, %v2656, %v2949
        %v3100 = vsel %vm629, %v2657, %v2951
        %v3103 = vsel %vm629, %v2658, %v2953
        %v3106 = vsel %vm629, %v2659, %v2955
        %v3109 = vsel %vm629, %v2660, %v2957
        %v3112 = vsel %vm629, %v2661, %v2959
        %v3115 = vsel %vm629, %v2662, %v2961
        %v3118 = vsel %vm629, %v2663, %v2963
        %v3121 = vsel %vm629, %v2664, %v2965
        %v3124 = vsel %vm629, %v2665, %v2967
        %v3127 = vsel %vm629, %v2666, %v2969
        %v3130 = vsel %vm629, %v2667, %v2971
        %v3133 = vsel %vm629, %v2668, %v2973
        %v3136 = vsel %vm629, %v2669, %v2975
        %v3139 = vsel %vm629, %v2670, %v2977
        %v3141 = vld [vmem:[%s4] sm:$0xf]
        %v3142 = vld [vmem:[%s4 + $0x4] sm:$0xf]
        %v3143 = vld [vmem:[%s4 + $0x8] sm:$0xf]
        %v3144 = vld [vmem:[%s4 + $0xc] sm:$0xf]
        %v3145 = vld [vmem:[%s4 + $0x10] sm:$0xf]
        %v3146 = vld [vmem:[%s4 + $0x14] sm:$0xf]
        %v3147 = vld [vmem:[%s4 + $0x18] sm:$0xf]
        %v3148 = vld [vmem:[%s4 + $0x1c] sm:$0xf]
        %v3149 = vld [vmem:[%s4 + $0x20] sm:$0xf]
        %v3150 = vld [vmem:[%s4 + $0x24] sm:$0xf]
        %v3151 = vld [vmem:[%s4 + $0x28] sm:$0xf]
        %v3152 = vld [vmem:[%s4 + $0x2c] sm:$0xf]
        %v3153 = vld [vmem:[%s4 + $0x30] sm:$0xf]
        %v3154 = vld [vmem:[%s4 + $0x34] sm:$0xf]
        %v3155 = vld [vmem:[%s4 + $0x38] sm:$0xf]
        %v3156 = vld [vmem:[%s4 + $0x3c] sm:$0xf]
        %v3157 = vld [vmem:[%s4 + $0x40] sm:$0xf]
        %v3158 = vld [vmem:[%s4 + $0x44] sm:$0xf]
        %v3159 = vld [vmem:[%s4 + $0x48] sm:$0xf]
        %v3160 = vld [vmem:[%s4 + $0x4c] sm:$0xf]
        %v3161 = vld [vmem:[%s4 + $0x50] sm:$0xf]
        %v3162 = vld [vmem:[%s4 + $0x54] sm:$0xf]
        %v3163 = vld [vmem:[%s4 + $0x58] sm:$0xf]
        %v3164 = vld [vmem:[%s4 + $0x5c] sm:$0xf]
        %s3165 = scalar_lea.vmem %s4, 96
        %v3166 = vld [vmem:[%s3165] sm:$0xf]
        %v3167 = vld [vmem:[%s3165 + $0x4] sm:$0xf]
        %v3168 = vld [vmem:[%s3165 + $0x8] sm:$0xf]
        %v3169 = vld [vmem:[%s3165 + $0xc] sm:$0xf]
        %v3170 = vld [vmem:[%s3165 + $0x10] sm:$0xf]
        %v3171 = vld [vmem:[%s3165 + $0x14] sm:$0xf]
        %v3172 = vld [vmem:[%s3165 + $0x18] sm:$0xf]
        %v3173 = vld [vmem:[%s3165 + $0x1c] sm:$0xf]
        %v3174 = vld [vmem:[%s3165 + $0x20] sm:$0xf]
        %v3175 = vld [vmem:[%s3165 + $0x24] sm:$0xf]
        %v3176 = vld [vmem:[%s3165 + $0x28] sm:$0xf]
        %v3177 = vld [vmem:[%s3165 + $0x2c] sm:$0xf]
        %v3178 = vld [vmem:[%s3165 + $0x30] sm:$0xf]
        %v3179 = vld [vmem:[%s3165 + $0x34] sm:$0xf]
        %v3180 = vld [vmem:[%s3165 + $0x38] sm:$0xf]
        %v3181 = vld [vmem:[%s3165 + $0x3c] sm:$0xf]
        %v3182 = vld [vmem:[%s3165 + $0x40] sm:$0xf]
        %v3183 = vld [vmem:[%s3165 + $0x44] sm:$0xf]
        %v3184 = vld [vmem:[%s3165 + $0x48] sm:$0xf]
        %v3185 = vld [vmem:[%s3165 + $0x4c] sm:$0xf]
        %v3186 = vld [vmem:[%s3165 + $0x50] sm:$0xf]
        %v3187 = vld [vmem:[%s3165 + $0x54] sm:$0xf]
        %v3188 = vld [vmem:[%s3165 + $0x58] sm:$0xf]
        %v3189 = vld [vmem:[%s3165 + $0x5c] sm:$0xf]
        %v3214 = vunpack.c.l.b16 %v3166
        %v3215 = vunpack.c.l.b16 %v3167
        %v3216 = vunpack.c.l.b16 %v3168
        %v3217 = vunpack.c.l.b16 %v3169
        %v3218 = vunpack.c.l.b16 %v3170
        %v3219 = vunpack.c.l.b16 %v3171
        %v3220 = vunpack.c.l.b16 %v3172
        %v3221 = vunpack.c.l.b16 %v3173
        %v3222 = vunpack.c.l.b16 %v3174
        %v3223 = vunpack.c.l.b16 %v3175
        %v3224 = vunpack.c.l.b16 %v3176
        %v3225 = vunpack.c.l.b16 %v3177
        %v3226 = vunpack.c.l.b16 %v3178
        %v3227 = vunpack.c.l.b16 %v3179
        %v3228 = vunpack.c.l.b16 %v3180
        %v3229 = vunpack.c.l.b16 %v3181
        %v3230 = vunpack.c.l.b16 %v3182
        %v3231 = vunpack.c.l.b16 %v3183
        %v3232 = vunpack.c.l.b16 %v3184
        %v3233 = vunpack.c.l.b16 %v3185
        %v3234 = vunpack.c.l.b16 %v3186
        %v3235 = vunpack.c.l.b16 %v3187
        %v3236 = vunpack.c.l.b16 %v3188
        %v3237 = vunpack.c.l.b16 %v3189
        %v3238 = vpack.c.b16 %v3215, %v3214
        %v3239 = vpack.c.b16 %v3217, %v3216
        %v3240 = vpack.c.b16 %v3219, %v3218
        %v3241 = vpack.c.b16 %v3221, %v3220
        %v3242 = vpack.c.b16 %v3223, %v3222
        %v3243 = vpack.c.b16 %v3225, %v3224
        %v3244 = vpack.c.b16 %v3227, %v3226
        %v3245 = vpack.c.b16 %v3229, %v3228
        %v3246 = vpack.c.b16 %v3231, %v3230
        %v3247 = vpack.c.b16 %v3233, %v3232
        %v3248 = vpack.c.b16 %v3235, %v3234
        %v3249 = vpack.c.b16 %v3237, %v3236
        %v3263 = vsel %vm629, %v3038, 0
        %v3266 = vsel %vm629, %v3041, 0
        %v3269 = vsel %vm629, %v3044, 0
        %v3272 = vsel %vm629, %v3047, 0
        %v3275 = vsel %vm629, %v3050, 0
        %v3278 = vsel %vm629, %v3053, 0
        %v3281 = vsel %vm629, %v3056, 0
        %v3284 = vsel %vm629, %v3059, 0
        %v3287 = vsel %vm629, %v3062, 0
        %v3290 = vsel %vm629, %v3065, 0
        %v3293 = vsel %vm629, %v3068, 0
        %v3296 = vsel %vm629, %v3071, 0
        %v3299 = vsel %vm629, %v3074, 0
        %v3302 = vsel %vm629, %v3077, 0
        %v3305 = vsel %vm629, %v3080, 0
        %v3308 = vsel %vm629, %v3083, 0
        %3310 = vmatprep.subr.bf16.mxu0 0
        %3311 = vmatpush1.bf16.msra.mxu0 %v3245
        %3312 = vmatprep.subr.bf16.mxu0 0
        %3313 = vmatpush1.bf16.msra.mxu0 %v3244
        %3314 = vmatprep.subr.bf16.mxu0 0
        %3315 = vmatpush1.bf16.msra.mxu0 %v3243
        %3316 = vmatprep.subr.bf16.mxu0 0
        %3317 = vmatpush1.bf16.msra.mxu0 %v3242
        %3318 = vmatprep.subr.bf16.mxu0 0
        %3319 = vmatpush1.bf16.msra.mxu0 %v3241
        %3320 = vmatprep.subr.bf16.mxu0 0
        %3321 = vmatpush1.bf16.msra.mxu0 %v3240
        %3322 = vmatprep.subr.bf16.mxu0 0
        %3323 = vmatpush1.bf16.msra.mxu0 %v3239
        %3324 = vmatprep.subr.bf16.mxu0 0
        %3325 = vmatpush1.bf16.msra.mxu0 %v3238
        %3326 = vmatprep.subr.bf16.mxu0 0
        %3327 = vmatpush2.bf16.msra.mxu0 0
        %3328 = vmatprep.subr.bf16.mxu0 0
        %3329 = vmatpush2.bf16.msra.mxu0 0
        %3330 = vmatprep.subr.bf16.mxu0 0
        %3331 = vmatpush2.bf16.msra.mxu0 0
        %3332 = vmatprep.subr.bf16.mxu0 0
        %3333 = vmatpush2.bf16.msra.mxu0 0
        %3334 = vmatprep.subr.bf16.mxu0 0
        %3335 = vmatpush2.bf16.msra.mxu0 %v3249
        %3336 = vmatprep.subr.bf16.mxu0 0
        %3337 = vmatpush2.bf16.msra.mxu0 %v3248
        %3338 = vmatprep.subr.bf16.mxu0 0
        %3339 = vmatpush2.bf16.msra.mxu0 %v3247
        %3340 = vmatprep.subr.bf16.mxu0 0
        %3341 = vmatpush2.bf16.msra.mxu0 %v3246
        %3342 = vmatprep.mubr.bf16.mxu0 %v3263
        %3343 = vmatmul.mubr.bf16.gmra.mxu0 %v3091
        %v3344 = vpop.f32.mrf.mxu0
        %v3345 = vadd.f32 0.0, %v3344
        %v3346 = vpop.f32.mrf.mxu0
        %v3347 = vpop.f32.mrf.mxu0
        %v3348 = vadd.f32 0.0, %v3347
        %v3349 = vpop.f32.mrf.mxu0
        %3350 = vmatprep.mubr.bf16.mxu0 %v3266
        %3351 = vmatmul.mubr.bf16.gmra.mxu0 %v3094
        %v3352 = vpop.f32.mrf.mxu0
        %v3353 = vadd.f32 0.0, %v3352
        %v3354 = vpop.f32.mrf.mxu0
        %v3355 = vpop.f32.mrf.mxu0
        %v3356 = vadd.f32 0.0, %v3355
        %v3357 = vpop.f32.mrf.mxu0
        %3358 = vmatprep.mubr.bf16.mxu0 %v3269
        %3359 = vmatmul.mubr.bf16.gmra.mxu0 %v3097
        %v3360 = vpop.f32.mrf.mxu0
        %v3361 = vadd.f32 0.0, %v3360
        %v3362 = vpop.f32.mrf.mxu0
        %v3363 = vpop.f32.mrf.mxu0
        %v3364 = vadd.f32 0.0, %v3363
        %v3365 = vpop.f32.mrf.mxu0
        %3366 = vmatprep.mubr.bf16.mxu0 %v3272
        %3367 = vmatmul.mubr.bf16.gmra.mxu0 %v3100
        %v3368 = vpop.f32.mrf.mxu0
        %v3369 = vadd.f32 0.0, %v3368
        %v3370 = vpop.f32.mrf.mxu0
        %v3371 = vpop.f32.mrf.mxu0
        %v3372 = vadd.f32 0.0, %v3371
        %v3373 = vpop.f32.mrf.mxu0
        %3374 = vmatprep.mubr.bf16.mxu0 %v3275
        %3375 = vmatmul.mubr.bf16.gmra.mxu0 %v3103
        %v3376 = vpop.f32.mrf.mxu0
        %v3377 = vadd.f32 0.0, %v3376
        %v3378 = vpop.f32.mrf.mxu0
        %v3379 = vpop.f32.mrf.mxu0
        %v3380 = vadd.f32 0.0, %v3379
        %v3381 = vpop.f32.mrf.mxu0
        %3382 = vmatprep.mubr.bf16.mxu0 %v3278
        %3383 = vmatmul.mubr.bf16.gmra.mxu0 %v3106
        %v3384 = vpop.f32.mrf.mxu0
        %v3385 = vadd.f32 0.0, %v3384
        %v3386 = vpop.f32.mrf.mxu0
        %v3387 = vpop.f32.mrf.mxu0
        %v3388 = vadd.f32 0.0, %v3387
        %v3389 = vpop.f32.mrf.mxu0
        %3390 = vmatprep.mubr.bf16.mxu0 %v3281
        %3391 = vmatmul.mubr.bf16.gmra.mxu0 %v3109
        %v3392 = vpop.f32.mrf.mxu0
        %v3393 = vadd.f32 0.0, %v3392
        %v3394 = vpop.f32.mrf.mxu0
        %v3395 = vpop.f32.mrf.mxu0
        %v3396 = vadd.f32 0.0, %v3395
        %v3397 = vpop.f32.mrf.mxu0
        %3398 = vmatprep.mubr.bf16.mxu0 %v3284
        %3399 = vmatmul.mubr.bf16.gmra.mxu0 %v3112
        %v3400 = vpop.f32.mrf.mxu0
        %v3401 = vadd.f32 0.0, %v3400
        %v3402 = vpop.f32.mrf.mxu0
        %v3403 = vpop.f32.mrf.mxu0
        %v3404 = vadd.f32 0.0, %v3403
        %v3405 = vpop.f32.mrf.mxu0
        %3406 = vmatprep.mubr.bf16.mxu0 %v3287
        %3407 = vmatmul.mubr.bf16.gmra.mxu0 %v3115
        %v3408 = vpop.f32.mrf.mxu0
        %v3409 = vadd.f32 0.0, %v3408
        %v3410 = vpop.f32.mrf.mxu0
        %v3411 = vpop.f32.mrf.mxu0
        %v3412 = vadd.f32 0.0, %v3411
        %v3413 = vpop.f32.mrf.mxu0
        %3414 = vmatprep.mubr.bf16.mxu0 %v3290
        %3415 = vmatmul.mubr.bf16.gmra.mxu0 %v3118
        %v3416 = vpop.f32.mrf.mxu0
        %v3417 = vadd.f32 0.0, %v3416
        %v3418 = vpop.f32.mrf.mxu0
        %v3419 = vpop.f32.mrf.mxu0
        %v3420 = vadd.f32 0.0, %v3419
        %v3421 = vpop.f32.mrf.mxu0
        %3422 = vmatprep.mubr.bf16.mxu0 %v3293
        %3423 = vmatmul.mubr.bf16.gmra.mxu0 %v3121
        %v3424 = vpop.f32.mrf.mxu0
        %v3425 = vadd.f32 0.0, %v3424
        %v3426 = vpop.f32.mrf.mxu0
        %v3427 = vpop.f32.mrf.mxu0
        %v3428 = vadd.f32 0.0, %v3427
        %v3429 = vpop.f32.mrf.mxu0
        %3430 = vmatprep.mubr.bf16.mxu0 %v3296
        %3431 = vmatmul.mubr.bf16.gmra.mxu0 %v3124
        %v3432 = vpop.f32.mrf.mxu0
        %v3433 = vadd.f32 0.0, %v3432
        %v3434 = vpop.f32.mrf.mxu0
        %v3435 = vpop.f32.mrf.mxu0
        %v3436 = vadd.f32 0.0, %v3435
        %v3437 = vpop.f32.mrf.mxu0
        %3438 = vmatprep.mubr.bf16.mxu0 %v3299
        %3439 = vmatmul.mubr.bf16.gmra.mxu0 %v3127
        %v3440 = vpop.f32.mrf.mxu0
        %v3441 = vadd.f32 0.0, %v3440
        %v3442 = vpop.f32.mrf.mxu0
        %v3443 = vpop.f32.mrf.mxu0
        %v3444 = vadd.f32 0.0, %v3443
        %v3445 = vpop.f32.mrf.mxu0
        %3446 = vmatprep.mubr.bf16.mxu0 %v3302
        %3447 = vmatmul.mubr.bf16.gmra.mxu0 %v3130
        %v3448 = vpop.f32.mrf.mxu0
        %v3449 = vadd.f32 0.0, %v3448
        %v3450 = vpop.f32.mrf.mxu0
        %v3451 = vpop.f32.mrf.mxu0
        %v3452 = vadd.f32 0.0, %v3451
        %v3453 = vpop.f32.mrf.mxu0
        %3454 = vmatprep.mubr.bf16.mxu0 %v3305
        %3455 = vmatmul.mubr.bf16.gmra.mxu0 %v3133
        %v3456 = vpop.f32.mrf.mxu0
        %v3457 = vadd.f32 0.0, %v3456
        %v3458 = vpop.f32.mrf.mxu0
        %v3459 = vpop.f32.mrf.mxu0
        %v3460 = vadd.f32 0.0, %v3459
        %v3461 = vpop.f32.mrf.mxu0
        %3462 = vmatprep.mubr.bf16.mxu0 %v3308
        %3463 = vmatmul.mubr.bf16.gmra.mxu0 %v3136
        %v3464 = vpop.f32.mrf.mxu0
        %v3465 = vadd.f32 0.0, %v3464
        %v3466 = vpop.f32.mrf.mxu0
        %v3467 = vpop.f32.mrf.mxu0
        %v3468 = vadd.f32 0.0, %v3467
        %v3469 = vpop.f32.mrf.mxu0
        %3470 = vdwg.mxu0
        %v3495 = vunpack.c.l.b16 %v3141
        %v3496 = vunpack.c.l.b16 %v3142
        %v3497 = vunpack.c.l.b16 %v3143
        %v3498 = vunpack.c.l.b16 %v3144
        %v3499 = vunpack.c.l.b16 %v3145
        %v3500 = vunpack.c.l.b16 %v3146
        %v3501 = vunpack.c.l.b16 %v3147
        %v3502 = vunpack.c.l.b16 %v3148
        %v3503 = vunpack.c.l.b16 %v3149
        %v3504 = vunpack.c.l.b16 %v3150
        %v3505 = vunpack.c.l.b16 %v3151
        %v3506 = vunpack.c.l.b16 %v3152
        %v3507 = vunpack.c.l.b16 %v3153
        %v3508 = vunpack.c.l.b16 %v3154
        %v3509 = vunpack.c.l.b16 %v3155
        %v3510 = vunpack.c.l.b16 %v3156
        %v3511 = vunpack.c.l.b16 %v3157
        %v3512 = vunpack.c.l.b16 %v3158
        %v3513 = vunpack.c.l.b16 %v3159
        %v3514 = vunpack.c.l.b16 %v3160
        %v3515 = vunpack.c.l.b16 %v3161
        %v3516 = vunpack.c.l.b16 %v3162
        %v3517 = vunpack.c.l.b16 %v3163
        %v3518 = vunpack.c.l.b16 %v3164
        %v3519 = vpack.c.b16 %v3496, %v3495
        %v3520 = vpack.c.b16 %v3498, %v3497
        %v3521 = vpack.c.b16 %v3500, %v3499
        %v3522 = vpack.c.b16 %v3502, %v3501
        %v3523 = vpack.c.b16 %v3504, %v3503
        %v3524 = vpack.c.b16 %v3506, %v3505
        %v3525 = vpack.c.b16 %v3508, %v3507
        %v3526 = vpack.c.b16 %v3510, %v3509
        %v3527 = vpack.c.b16 %v3512, %v3511
        %v3528 = vpack.c.b16 %v3514, %v3513
        %v3529 = vpack.c.b16 %v3516, %v3515
        %v3530 = vpack.c.b16 %v3518, %v3517
        %v3544 = vsel %vm629, %v3035, 0
        %3546 = vmatprep.subr.bf16.mxu0 0
        %3547 = vmatpush1.bf16.msra.mxu0 %v3526
        %3548 = vmatprep.subr.bf16.mxu0 0
        %3549 = vmatpush1.bf16.msra.mxu0 %v3525
        %3550 = vmatprep.subr.bf16.mxu0 0
        %3551 = vmatpush1.bf16.msra.mxu0 %v3524
        %3552 = vmatprep.subr.bf16.mxu0 0
        %3553 = vmatpush1.bf16.msra.mxu0 %v3523
        %3554 = vmatprep.subr.bf16.mxu0 0
        %3555 = vmatpush1.bf16.msra.mxu0 %v3522
        %3556 = vmatprep.subr.bf16.mxu0 0
        %3557 = vmatpush1.bf16.msra.mxu0 %v3521
        %3558 = vmatprep.subr.bf16.mxu0 0
        %3559 = vmatpush1.bf16.msra.mxu0 %v3520
        %3560 = vmatprep.subr.bf16.mxu0 0
        %3561 = vmatpush1.bf16.msra.mxu0 %v3519
        %3562 = vmatprep.subr.bf16.mxu0 0
        %3563 = vmatpush2.bf16.msra.mxu0 0
        %3564 = vmatprep.subr.bf16.mxu0 0
        %3565 = vmatpush2.bf16.msra.mxu0 0
        %3566 = vmatprep.subr.bf16.mxu0 0
        %3567 = vmatpush2.bf16.msra.mxu0 0
        %3568 = vmatprep.subr.bf16.mxu0 0
        %3569 = vmatpush2.bf16.msra.mxu0 0
        %3570 = vmatprep.subr.bf16.mxu0 0
        %3571 = vmatpush2.bf16.msra.mxu0 %v3530
        %3572 = vmatprep.subr.bf16.mxu0 0
        %3573 = vmatpush2.bf16.msra.mxu0 %v3529
        %3574 = vmatprep.subr.bf16.mxu0 0
        %3575 = vmatpush2.bf16.msra.mxu0 %v3528
        %3576 = vmatprep.subr.bf16.mxu0 0
        %3577 = vmatpush2.bf16.msra.mxu0 %v3527
        %3578 = vmatprep.mubr.bf16.mxu0 %v3544
        %3579 = vmatmul.mubr.bf16.gmra.mxu0 %v3088
        %v3580 = vpop.f32.mrf.mxu0
        %v3581 = vadd.f32 %v3345, %v3580
        %v3582 = vpop.f32.mrf.mxu0
        %v3583 = vpop.f32.mrf.mxu0
        %v3584 = vadd.f32 %v3348, %v3583
        %v3585 = vpop.f32.mrf.mxu0
        %3586 = vmatprep.mubr.bf16.mxu0 %v3263
        %3587 = vmatmul.mubr.bf16.gmra.mxu0 %v3091
        %v3588 = vpop.f32.mrf.mxu0
        %v3589 = vadd.f32 %v3353, %v3588
        %v3590 = vpop.f32.mrf.mxu0
        %v3591 = vpop.f32.mrf.mxu0
        %v3592 = vadd.f32 %v3356, %v3591
        %v3593 = vpop.f32.mrf.mxu0
        %3594 = vmatprep.mubr.bf16.mxu0 %v3266
        %3595 = vmatmul.mubr.bf16.gmra.mxu0 %v3094
        %v3596 = vpop.f32.mrf.mxu0
        %v3597 = vadd.f32 %v3361, %v3596
        %v3598 = vpop.f32.mrf.mxu0
        %v3599 = vpop.f32.mrf.mxu0
        %v3600 = vadd.f32 %v3364, %v3599
        %v3601 = vpop.f32.mrf.mxu0
        %3602 = vmatprep.mubr.bf16.mxu0 %v3269
        %3603 = vmatmul.mubr.bf16.gmra.mxu0 %v3097
        %v3604 = vpop.f32.mrf.mxu0
        %v3605 = vadd.f32 %v3369, %v3604
        %v3606 = vpop.f32.mrf.mxu0
        %v3607 = vpop.f32.mrf.mxu0
        %v3608 = vadd.f32 %v3372, %v3607
        %v3609 = vpop.f32.mrf.mxu0
        %3610 = vmatprep.mubr.bf16.mxu0 %v3272
        %3611 = vmatmul.mubr.bf16.gmra.mxu0 %v3100
        %v3612 = vpop.f32.mrf.mxu0
        %v3613 = vadd.f32 %v3377, %v3612
        %v3614 = vpop.f32.mrf.mxu0
        %v3615 = vpop.f32.mrf.mxu0
        %v3616 = vadd.f32 %v3380, %v3615
        %v3617 = vpop.f32.mrf.mxu0
        %3618 = vmatprep.mubr.bf16.mxu0 %v3275
        %3619 = vmatmul.mubr.bf16.gmra.mxu0 %v3103
        %v3620 = vpop.f32.mrf.mxu0
        %v3621 = vadd.f32 %v3385, %v3620
        %v3622 = vpop.f32.mrf.mxu0
        %v3623 = vpop.f32.mrf.mxu0
        %v3624 = vadd.f32 %v3388, %v3623
        %v3625 = vpop.f32.mrf.mxu0
        %3626 = vmatprep.mubr.bf16.mxu0 %v3278
        %3627 = vmatmul.mubr.bf16.gmra.mxu0 %v3106
        %v3628 = vpop.f32.mrf.mxu0
        %v3629 = vadd.f32 %v3393, %v3628
        %v3630 = vpop.f32.mrf.mxu0
        %v3631 = vpop.f32.mrf.mxu0
        %v3632 = vadd.f32 %v3396, %v3631
        %v3633 = vpop.f32.mrf.mxu0
        %3634 = vmatprep.mubr.bf16.mxu0 %v3281
        %3635 = vmatmul.mubr.bf16.gmra.mxu0 %v3109
        %v3636 = vpop.f32.mrf.mxu0
        %v3637 = vadd.f32 %v3401, %v3636
        %v3638 = vpop.f32.mrf.mxu0
        %v3639 = vpop.f32.mrf.mxu0
        %v3640 = vadd.f32 %v3404, %v3639
        %v3641 = vpop.f32.mrf.mxu0
        %3642 = vmatprep.mubr.bf16.mxu0 %v3284
        %3643 = vmatmul.mubr.bf16.gmra.mxu0 %v3112
        %v3644 = vpop.f32.mrf.mxu0
        %v3645 = vadd.f32 %v3409, %v3644
        %v3646 = vpop.f32.mrf.mxu0
        %v3647 = vpop.f32.mrf.mxu0
        %v3648 = vadd.f32 %v3412, %v3647
        %v3649 = vpop.f32.mrf.mxu0
        %3650 = vmatprep.mubr.bf16.mxu0 %v3287
        %3651 = vmatmul.mubr.bf16.gmra.mxu0 %v3115
        %v3652 = vpop.f32.mrf.mxu0
        %v3653 = vadd.f32 %v3417, %v3652
        %v3654 = vpop.f32.mrf.mxu0
        %v3655 = vpop.f32.mrf.mxu0
        %v3656 = vadd.f32 %v3420, %v3655
        %v3657 = vpop.f32.mrf.mxu0
        %3658 = vmatprep.mubr.bf16.mxu0 %v3290
        %3659 = vmatmul.mubr.bf16.gmra.mxu0 %v3118
        %v3660 = vpop.f32.mrf.mxu0
        %v3661 = vadd.f32 %v3425, %v3660
        %v3662 = vpop.f32.mrf.mxu0
        %v3663 = vpop.f32.mrf.mxu0
        %v3664 = vadd.f32 %v3428, %v3663
        %v3665 = vpop.f32.mrf.mxu0
        %3666 = vmatprep.mubr.bf16.mxu0 %v3293
        %3667 = vmatmul.mubr.bf16.gmra.mxu0 %v3121
        %v3668 = vpop.f32.mrf.mxu0
        %v3669 = vadd.f32 %v3433, %v3668
        %v3670 = vpop.f32.mrf.mxu0
        %v3671 = vpop.f32.mrf.mxu0
        %v3672 = vadd.f32 %v3436, %v3671
        %v3673 = vpop.f32.mrf.mxu0
        %3674 = vmatprep.mubr.bf16.mxu0 %v3296
        %3675 = vmatmul.mubr.bf16.gmra.mxu0 %v3124
        %v3676 = vpop.f32.mrf.mxu0
        %v3677 = vadd.f32 %v3441, %v3676
        %v3678 = vpop.f32.mrf.mxu0
        %v3679 = vpop.f32.mrf.mxu0
        %v3680 = vadd.f32 %v3444, %v3679
        %v3681 = vpop.f32.mrf.mxu0
        %3682 = vmatprep.mubr.bf16.mxu0 %v3299
        %3683 = vmatmul.mubr.bf16.gmra.mxu0 %v3127
        %v3684 = vpop.f32.mrf.mxu0
        %v3685 = vadd.f32 %v3449, %v3684
        %v3686 = vpop.f32.mrf.mxu0
        %v3687 = vpop.f32.mrf.mxu0
        %v3688 = vadd.f32 %v3452, %v3687
        %v3689 = vpop.f32.mrf.mxu0
        %3690 = vmatprep.mubr.bf16.mxu0 %v3302
        %3691 = vmatmul.mubr.bf16.gmra.mxu0 %v3130
        %v3692 = vpop.f32.mrf.mxu0
        %v3693 = vadd.f32 %v3457, %v3692
        %v3694 = vpop.f32.mrf.mxu0
        %v3695 = vpop.f32.mrf.mxu0
        %v3696 = vadd.f32 %v3460, %v3695
        %v3697 = vpop.f32.mrf.mxu0
        %3698 = vmatprep.mubr.bf16.mxu0 %v3305
        %3699 = vmatmul.mubr.bf16.gmra.mxu0 %v3133
        %v3700 = vpop.f32.mrf.mxu0
        %v3701 = vadd.f32 %v3465, %v3700
        %v3702 = vpop.f32.mrf.mxu0
        %v3703 = vpop.f32.mrf.mxu0
        %v3704 = vadd.f32 %v3468, %v3703
        %v3705 = vpop.f32.mrf.mxu0
        %3706 = vdwg.mxu0
        %s3707 = scalar_lea.vmem %s4, 192
        %v3708 = vld [vmem:[%s3707] sm:$0xf]
        %v3709 = vld [vmem:[%s3707 + $0x4] sm:$0xf]
        %v3710 = vld [vmem:[%s3707 + $0x8] sm:$0xf]
        %v3711 = vld [vmem:[%s3707 + $0xc] sm:$0xf]
        %v3712 = vld [vmem:[%s3707 + $0x10] sm:$0xf]
        %v3713 = vld [vmem:[%s3707 + $0x14] sm:$0xf]
        %v3714 = vld [vmem:[%s3707 + $0x18] sm:$0xf]
        %v3715 = vld [vmem:[%s3707 + $0x1c] sm:$0xf]
        %v3716 = vld [vmem:[%s3707 + $0x20] sm:$0xf]
        %v3717 = vld [vmem:[%s3707 + $0x24] sm:$0xf]
        %v3718 = vld [vmem:[%s3707 + $0x28] sm:$0xf]
        %v3719 = vld [vmem:[%s3707 + $0x2c] sm:$0xf]
        %v3720 = vld [vmem:[%s3707 + $0x30] sm:$0xf]
        %v3721 = vld [vmem:[%s3707 + $0x34] sm:$0xf]
        %v3722 = vld [vmem:[%s3707 + $0x38] sm:$0xf]
        %v3723 = vld [vmem:[%s3707 + $0x3c] sm:$0xf]
        %v3724 = vld [vmem:[%s3707 + $0x40] sm:$0xf]
        %v3725 = vld [vmem:[%s3707 + $0x44] sm:$0xf]
        %v3726 = vld [vmem:[%s3707 + $0x48] sm:$0xf]
        %v3727 = vld [vmem:[%s3707 + $0x4c] sm:$0xf]
        %v3728 = vld [vmem:[%s3707 + $0x50] sm:$0xf]
        %v3729 = vld [vmem:[%s3707 + $0x54] sm:$0xf]
        %v3730 = vld [vmem:[%s3707 + $0x58] sm:$0xf]
        %v3731 = vld [vmem:[%s3707 + $0x5c] sm:$0xf]
        %v3756 = vunpack.c.l.b16 %v3708
        %v3757 = vunpack.c.l.b16 %v3709
        %v3758 = vunpack.c.l.b16 %v3710
        %v3759 = vunpack.c.l.b16 %v3711
        %v3760 = vunpack.c.l.b16 %v3712
        %v3761 = vunpack.c.l.b16 %v3713
        %v3762 = vunpack.c.l.b16 %v3714
        %v3763 = vunpack.c.l.b16 %v3715
        %v3764 = vunpack.c.l.b16 %v3716
        %v3765 = vunpack.c.l.b16 %v3717
        %v3766 = vunpack.c.l.b16 %v3718
        %v3767 = vunpack.c.l.b16 %v3719
        %v3768 = vunpack.c.l.b16 %v3720
        %v3769 = vunpack.c.l.b16 %v3721
        %v3770 = vunpack.c.l.b16 %v3722
        %v3771 = vunpack.c.l.b16 %v3723
        %v3772 = vunpack.c.l.b16 %v3724
        %v3773 = vunpack.c.l.b16 %v3725
        %v3774 = vunpack.c.l.b16 %v3726
        %v3775 = vunpack.c.l.b16 %v3727
        %v3776 = vunpack.c.l.b16 %v3728
        %v3777 = vunpack.c.l.b16 %v3729
        %v3778 = vunpack.c.l.b16 %v3730
        %v3779 = vunpack.c.l.b16 %v3731
        %v3780 = vpack.c.b16 %v3757, %v3756
        %v3781 = vpack.c.b16 %v3759, %v3758
        %v3782 = vpack.c.b16 %v3761, %v3760
        %v3783 = vpack.c.b16 %v3763, %v3762
        %v3784 = vpack.c.b16 %v3765, %v3764
        %v3785 = vpack.c.b16 %v3767, %v3766
        %v3786 = vpack.c.b16 %v3769, %v3768
        %v3787 = vpack.c.b16 %v3771, %v3770
        %v3788 = vpack.c.b16 %v3773, %v3772
        %v3789 = vpack.c.b16 %v3775, %v3774
        %v3790 = vpack.c.b16 %v3777, %v3776
        %v3791 = vpack.c.b16 %v3779, %v3778
        %v3805 = vsel %vm629, %v3086, 0
        %3807 = vmatprep.subr.bf16.mxu0 0
        %3808 = vmatpush1.bf16.msra.mxu0 %v3787
        %3809 = vmatprep.subr.bf16.mxu0 0
        %3810 = vmatpush1.bf16.msra.mxu0 %v3786
        %3811 = vmatprep.subr.bf16.mxu0 0
        %3812 = vmatpush1.bf16.msra.mxu0 %v3785
        %3813 = vmatprep.subr.bf16.mxu0 0
        %3814 = vmatpush1.bf16.msra.mxu0 %v3784
        %3815 = vmatprep.subr.bf16.mxu0 0
        %3816 = vmatpush1.bf16.msra.mxu0 %v3783
        %3817 = vmatprep.subr.bf16.mxu0 0
        %3818 = vmatpush1.bf16.msra.mxu0 %v3782
        %3819 = vmatprep.subr.bf16.mxu0 0
        %3820 = vmatpush1.bf16.msra.mxu0 %v3781
        %3821 = vmatprep.subr.bf16.mxu0 0
        %3822 = vmatpush1.bf16.msra.mxu0 %v3780
        %3823 = vmatprep.subr.bf16.mxu0 0
        %3824 = vmatpush2.bf16.msra.mxu0 0
        %3825 = vmatprep.subr.bf16.mxu0 0
        %3826 = vmatpush2.bf16.msra.mxu0 0
        %3827 = vmatprep.subr.bf16.mxu0 0
        %3828 = vmatpush2.bf16.msra.mxu0 0
        %3829 = vmatprep.subr.bf16.mxu0 0
        %3830 = vmatpush2.bf16.msra.mxu0 0
        %3831 = vmatprep.subr.bf16.mxu0 0
        %3832 = vmatpush2.bf16.msra.mxu0 %v3791
        %3833 = vmatprep.subr.bf16.mxu0 0
        %3834 = vmatpush2.bf16.msra.mxu0 %v3790
        %3835 = vmatprep.subr.bf16.mxu0 0
        %3836 = vmatpush2.bf16.msra.mxu0 %v3789
        %3837 = vmatprep.subr.bf16.mxu0 0
        %3838 = vmatpush2.bf16.msra.mxu0 %v3788
        %3839 = vmatprep.mubr.bf16.mxu0 %v3266
        %3840 = vmatmul.mubr.bf16.gmra.mxu0 %v3094
        %v3841 = vpop.f32.mrf.mxu0
        %v3842 = vadd.f32 0.0, %v3841
        %v3843 = vpop.f32.mrf.mxu0
        %v3844 = vpop.f32.mrf.mxu0
        %v3845 = vadd.f32 0.0, %v3844
        %v3846 = vpop.f32.mrf.mxu0
        %3847 = vmatprep.mubr.bf16.mxu0 %v3269
        %3848 = vmatmul.mubr.bf16.gmra.mxu0 %v3097
        %v3849 = vpop.f32.mrf.mxu0
        %v3850 = vadd.f32 0.0, %v3849
        %v3851 = vpop.f32.mrf.mxu0
        %v3852 = vpop.f32.mrf.mxu0
        %v3853 = vadd.f32 0.0, %v3852
        %v3854 = vpop.f32.mrf.mxu0
        %3855 = vmatprep.mubr.bf16.mxu0 %v3272
        %3856 = vmatmul.mubr.bf16.gmra.mxu0 %v3100
        %v3857 = vpop.f32.mrf.mxu0
        %v3858 = vadd.f32 0.0, %v3857
        %v3859 = vpop.f32.mrf.mxu0
        %v3860 = vpop.f32.mrf.mxu0
        %v3861 = vadd.f32 0.0, %v3860
        %v3862 = vpop.f32.mrf.mxu0
        %3863 = vmatprep.mubr.bf16.mxu0 %v3275
        %3864 = vmatmul.mubr.bf16.gmra.mxu0 %v3103
        %v3865 = vpop.f32.mrf.mxu0
        %v3866 = vadd.f32 0.0, %v3865
        %v3867 = vpop.f32.mrf.mxu0
        %v3868 = vpop.f32.mrf.mxu0
        %v3869 = vadd.f32 0.0, %v3868
        %v3870 = vpop.f32.mrf.mxu0
        %3871 = vmatprep.mubr.bf16.mxu0 %v3278
        %3872 = vmatmul.mubr.bf16.gmra.mxu0 %v3106
        %v3873 = vpop.f32.mrf.mxu0
        %v3874 = vadd.f32 0.0, %v3873
        %v3875 = vpop.f32.mrf.mxu0
        %v3876 = vpop.f32.mrf.mxu0
        %v3877 = vadd.f32 0.0, %v3876
        %v3878 = vpop.f32.mrf.mxu0
        %3879 = vmatprep.mubr.bf16.mxu0 %v3281
        %3880 = vmatmul.mubr.bf16.gmra.mxu0 %v3109
        %v3881 = vpop.f32.mrf.mxu0
        %v3882 = vadd.f32 0.0, %v3881
        %v3883 = vpop.f32.mrf.mxu0
        %v3884 = vpop.f32.mrf.mxu0
        %v3885 = vadd.f32 0.0, %v3884
        %v3886 = vpop.f32.mrf.mxu0
        %3887 = vmatprep.mubr.bf16.mxu0 %v3284
        %3888 = vmatmul.mubr.bf16.gmra.mxu0 %v3112
        %v3889 = vpop.f32.mrf.mxu0
        %v3890 = vadd.f32 0.0, %v3889
        %v3891 = vpop.f32.mrf.mxu0
        %v3892 = vpop.f32.mrf.mxu0
        %v3893 = vadd.f32 0.0, %v3892
        %v3894 = vpop.f32.mrf.mxu0
        %3895 = vmatprep.mubr.bf16.mxu0 %v3287
        %3896 = vmatmul.mubr.bf16.gmra.mxu0 %v3115
        %v3897 = vpop.f32.mrf.mxu0
        %v3898 = vadd.f32 0.0, %v3897
        %v3899 = vpop.f32.mrf.mxu0
        %v3900 = vpop.f32.mrf.mxu0
        %v3901 = vadd.f32 0.0, %v3900
        %v3902 = vpop.f32.mrf.mxu0
        %3903 = vmatprep.mubr.bf16.mxu0 %v3290
        %3904 = vmatmul.mubr.bf16.gmra.mxu0 %v3118
        %v3905 = vpop.f32.mrf.mxu0
        %v3906 = vadd.f32 0.0, %v3905
        %v3907 = vpop.f32.mrf.mxu0
        %v3908 = vpop.f32.mrf.mxu0
        %v3909 = vadd.f32 0.0, %v3908
        %v3910 = vpop.f32.mrf.mxu0
        %3911 = vmatprep.mubr.bf16.mxu0 %v3293
        %3912 = vmatmul.mubr.bf16.gmra.mxu0 %v3121
        %v3913 = vpop.f32.mrf.mxu0
        %v3914 = vadd.f32 0.0, %v3913
        %v3915 = vpop.f32.mrf.mxu0
        %v3916 = vpop.f32.mrf.mxu0
        %v3917 = vadd.f32 0.0, %v3916
        %v3918 = vpop.f32.mrf.mxu0
        %3919 = vmatprep.mubr.bf16.mxu0 %v3296
        %3920 = vmatmul.mubr.bf16.gmra.mxu0 %v3124
        %v3921 = vpop.f32.mrf.mxu0
        %v3922 = vadd.f32 0.0, %v3921
        %v3923 = vpop.f32.mrf.mxu0
        %v3924 = vpop.f32.mrf.mxu0
        %v3925 = vadd.f32 0.0, %v3924
        %v3926 = vpop.f32.mrf.mxu0
        %3927 = vmatprep.mubr.bf16.mxu0 %v3299
        %3928 = vmatmul.mubr.bf16.gmra.mxu0 %v3127
        %v3929 = vpop.f32.mrf.mxu0
        %v3930 = vadd.f32 0.0, %v3929
        %v3931 = vpop.f32.mrf.mxu0
        %v3932 = vpop.f32.mrf.mxu0
        %v3933 = vadd.f32 0.0, %v3932
        %v3934 = vpop.f32.mrf.mxu0
        %3935 = vmatprep.mubr.bf16.mxu0 %v3302
        %3936 = vmatmul.mubr.bf16.gmra.mxu0 %v3130
        %v3937 = vpop.f32.mrf.mxu0
        %v3938 = vadd.f32 0.0, %v3937
        %v3939 = vpop.f32.mrf.mxu0
        %v3940 = vpop.f32.mrf.mxu0
        %v3941 = vadd.f32 0.0, %v3940
        %v3942 = vpop.f32.mrf.mxu0
        %3943 = vmatprep.mubr.bf16.mxu0 %v3305
        %3944 = vmatmul.mubr.bf16.gmra.mxu0 %v3133
        %v3945 = vpop.f32.mrf.mxu0
        %v3946 = vadd.f32 0.0, %v3945
        %v3947 = vpop.f32.mrf.mxu0
        %v3948 = vpop.f32.mrf.mxu0
        %v3949 = vadd.f32 0.0, %v3948
        %v3950 = vpop.f32.mrf.mxu0
        %3951 = vmatprep.mubr.bf16.mxu0 %v3308
        %3952 = vmatmul.mubr.bf16.gmra.mxu0 %v3136
        %v3953 = vpop.f32.mrf.mxu0
        %v3954 = vadd.f32 0.0, %v3953
        %v3955 = vpop.f32.mrf.mxu0
        %v3956 = vpop.f32.mrf.mxu0
        %v3957 = vadd.f32 0.0, %v3956
        %v3958 = vpop.f32.mrf.mxu0
        %3959 = vmatprep.mubr.bf16.mxu0 %v3805
        %3960 = vmatmul.mubr.bf16.gmra.mxu0 %v3139
        %v3961 = vpop.f32.mrf.mxu0
        %v3962 = vadd.f32 0.0, %v3961
        %v3963 = vpop.f32.mrf.mxu0
        %v3964 = vpop.f32.mrf.mxu0
        %v3965 = vadd.f32 0.0, %v3964
        %v3966 = vpop.f32.mrf.mxu0
        %3967 = vdwg.mxu0
        %v3968 = vadd.f32 %v3581, %v3842
        %v3969 = vadd.f32 %v3584, %v3845
        %v3970 = vadd.f32 %v3589, %v3850
        %v3971 = vadd.f32 %v3592, %v3853
        %v3972 = vadd.f32 %v3597, %v3858
        %v3973 = vadd.f32 %v3600, %v3861
        %v3974 = vadd.f32 %v3605, %v3866
        %v3975 = vadd.f32 %v3608, %v3869
        %v3976 = vadd.f32 %v3613, %v3874
        %v3977 = vadd.f32 %v3616, %v3877
        %v3978 = vadd.f32 %v3621, %v3882
        %v3979 = vadd.f32 %v3624, %v3885
        %v3980 = vadd.f32 %v3629, %v3890
        %v3981 = vadd.f32 %v3632, %v3893
        %v3982 = vadd.f32 %v3637, %v3898
        %v3983 = vadd.f32 %v3640, %v3901
        %v3984 = vadd.f32 %v3645, %v3906
        %v3985 = vadd.f32 %v3648, %v3909
        %v3986 = vadd.f32 %v3653, %v3914
        %v3987 = vadd.f32 %v3656, %v3917
        %v3988 = vadd.f32 %v3661, %v3922
        %v3989 = vadd.f32 %v3664, %v3925
        %v3990 = vadd.f32 %v3669, %v3930
        %v3991 = vadd.f32 %v3672, %v3933
        %v3992 = vadd.f32 %v3677, %v3938
        %v3993 = vadd.f32 %v3680, %v3941
        %v3994 = vadd.f32 %v3685, %v3946
        %v3995 = vadd.f32 %v3688, %v3949
        %v3996 = vadd.f32 %v3693, %v3954
        %v3997 = vadd.f32 %v3696, %v3957
        %v3998 = vadd.f32 %v3701, %v3962
        %v3999 = vadd.f32 %v3704, %v3965
        %v4000 = vld [vmem:[%s5] sm:$0x1]
        %v4002 = vlaneseq
        %v4003 = vshrl.u32 %v4002, 7
        %v4004 = vsub.s32 0, %v4003
        %v4005 = vrot.slane %v4000, %v4004
        %v4007 = vadd.f32 %v3968, %v4005
        %v4008 = vadd.f32 %v3969, %v4005
        %v4009 = vadd.f32 %v3970, %v4005
        %v4010 = vadd.f32 %v3971, %v4005
        %v4011 = vadd.f32 %v3972, %v4005
        %v4012 = vadd.f32 %v3973, %v4005
        %v4013 = vadd.f32 %v3974, %v4005
        %v4014 = vadd.f32 %v3975, %v4005
        %v4015 = vadd.f32 %v3976, %v4005
        %v4016 = vadd.f32 %v3977, %v4005
        %v4017 = vadd.f32 %v3978, %v4005
        %v4018 = vadd.f32 %v3979, %v4005
        %v4019 = vadd.f32 %v3980, %v4005
        %v4020 = vadd.f32 %v3981, %v4005
        %v4021 = vadd.f32 %v3982, %v4005
        %v4022 = vadd.f32 %v3983, %v4005
        %v4023 = vadd.f32 %v3984, %v4005
        %v4024 = vadd.f32 %v3985, %v4005
        %v4025 = vadd.f32 %v3986, %v4005
        %v4026 = vadd.f32 %v3987, %v4005
        %v4027 = vadd.f32 %v3988, %v4005
        %v4028 = vadd.f32 %v3989, %v4005
        %v4029 = vadd.f32 %v3990, %v4005
        %v4030 = vadd.f32 %v3991, %v4005
        %v4031 = vadd.f32 %v3992, %v4005
        %v4032 = vadd.f32 %v3993, %v4005
        %v4033 = vadd.f32 %v3994, %v4005
        %v4034 = vadd.f32 %v3995, %v4005
        %v4035 = vadd.f32 %v3996, %v4005
        %v4036 = vadd.f32 %v3997, %v4005
        %v4037 = vadd.f32 %v3998, %v4005
        %v4038 = vadd.f32 %v3999, %v4005
        %v4039 = vld [vmem:[%s297] sm:$0xff]
        %v4040 = vld [vmem:[%s297 + $0x8] sm:$0xff]
        %v4041 = vld [vmem:[%s297 + $0x10] sm:$0xff]
        %v4042 = vld [vmem:[%s297 + $0x18] sm:$0xff]
        %v4043 = vld [vmem:[%s297 + $0x20] sm:$0xff]
        %v4044 = vld [vmem:[%s297 + $0x28] sm:$0xff]
        %v4045 = vld [vmem:[%s297 + $0x30] sm:$0xff]
        %v4046 = vld [vmem:[%s297 + $0x38] sm:$0xff]
        %v4047 = vld [vmem:[%s297 + $0x40] sm:$0xff]
        %v4048 = vld [vmem:[%s297 + $0x48] sm:$0xff]
        %v4049 = vld [vmem:[%s297 + $0x50] sm:$0xff]
        %v4050 = vld [vmem:[%s297 + $0x58] sm:$0xff]
        %v4051 = vld [vmem:[%s297 + $0x60] sm:$0xff]
        %v4052 = vld [vmem:[%s297 + $0x68] sm:$0xff]
        %v4053 = vld [vmem:[%s297 + $0x70] sm:$0xff]
        %v4054 = vld [vmem:[%s297 + $0x78] sm:$0xff]
        %v4055 = vld [vmem:[%s297 + $0x80] sm:$0xff]
        %v4056 = vld [vmem:[%s297 + $0x88] sm:$0xff]
        %v4057 = vld [vmem:[%s297 + $0x90] sm:$0xff]
        %v4058 = vld [vmem:[%s297 + $0x98] sm:$0xff]
        %v4059 = vld [vmem:[%s297 + $0xa0] sm:$0xff]
        %v4060 = vld [vmem:[%s297 + $0xa8] sm:$0xff]
        %v4061 = vld [vmem:[%s297 + $0xb0] sm:$0xff]
        %v4062 = vld [vmem:[%s297 + $0xb8] sm:$0xff]
        %v4063 = vld [vmem:[%s297 + $0xc0] sm:$0xff]
        %v4064 = vld [vmem:[%s297 + $0xc8] sm:$0xff]
        %v4065 = vld [vmem:[%s297 + $0xd0] sm:$0xff]
        %v4066 = vld [vmem:[%s297 + $0xd8] sm:$0xff]
        %v4067 = vld [vmem:[%s297 + $0xe0] sm:$0xff]
        %v4068 = vld [vmem:[%s297 + $0xe8] sm:$0xff]
        %v4069 = vld [vmem:[%s297 + $0xf0] sm:$0xff]
        %v4070 = vld [vmem:[%s297 + $0xf8] sm:$0xff]
        %v4071 = vadd.f32 %v4039, %v4007
        %v4072 = vadd.f32 %v4040, %v4008
        %v4073 = vadd.f32 %v4041, %v4009
        %v4074 = vadd.f32 %v4042, %v4010
        %v4075 = vadd.f32 %v4043, %v4011
        %v4076 = vadd.f32 %v4044, %v4012
        %v4077 = vadd.f32 %v4045, %v4013
        %v4078 = vadd.f32 %v4046, %v4014
        %v4079 = vadd.f32 %v4047, %v4015
        %v4080 = vadd.f32 %v4048, %v4016
        %v4081 = vadd.f32 %v4049, %v4017
        %v4082 = vadd.f32 %v4050, %v4018
        %v4083 = vadd.f32 %v4051, %v4019
        %v4084 = vadd.f32 %v4052, %v4020
        %v4085 = vadd.f32 %v4053, %v4021
        %v4086 = vadd.f32 %v4054, %v4022
        %v4087 = vadd.f32 %v4055, %v4023
        %v4088 = vadd.f32 %v4056, %v4024
        %v4089 = vadd.f32 %v4057, %v4025
        %v4090 = vadd.f32 %v4058, %v4026
        %v4091 = vadd.f32 %v4059, %v4027
        %v4092 = vadd.f32 %v4060, %v4028
        %v4093 = vadd.f32 %v4061, %v4029
        %v4094 = vadd.f32 %v4062, %v4030
        %v4095 = vadd.f32 %v4063, %v4031
        %v4096 = vadd.f32 %v4064, %v4032
        %v4097 = vadd.f32 %v4065, %v4033
        %v4098 = vadd.f32 %v4066, %v4034
        %v4099 = vadd.f32 %v4067, %v4035
        %v4100 = vadd.f32 %v4068, %v4036
        %v4101 = vadd.f32 %v4069, %v4037
        %v4102 = vadd.f32 %v4070, %v4038
        %4103 = vst.msk [vmem:[%s287] sm:$0xff] %vm629, %v4071
        %4104 = vst.msk [vmem:[%s287 + $0x8] sm:$0xff] %vm629, %v4072
        %4105 = vst.msk [vmem:[%s287 + $0x10] sm:$0xff] %vm629, %v4073
        %4106 = vst.msk [vmem:[%s287 + $0x18] sm:$0xff] %vm629, %v4074
        %4107 = vst.msk [vmem:[%s287 + $0x20] sm:$0xff] %vm629, %v4075
        %4108 = vst.msk [vmem:[%s287 + $0x28] sm:$0xff] %vm629, %v4076
        %4109 = vst.msk [vmem:[%s287 + $0x30] sm:$0xff] %vm629, %v4077
        %4110 = vst.msk [vmem:[%s287 + $0x38] sm:$0xff] %vm629, %v4078
        %4111 = vst.msk [vmem:[%s287 + $0x40] sm:$0xff] %vm629, %v4079
        %4112 = vst.msk [vmem:[%s287 + $0x48] sm:$0xff] %vm629, %v4080
        %4113 = vst.msk [vmem:[%s287 + $0x50] sm:$0xff] %vm629, %v4081
        %4114 = vst.msk [vmem:[%s287 + $0x58] sm:$0xff] %vm629, %v4082
        %4115 = vst.msk [vmem:[%s287 + $0x60] sm:$0xff] %vm629, %v4083
        %4116 = vst.msk [vmem:[%s287 + $0x68] sm:$0xff] %vm629, %v4084
        %4117 = vst.msk [vmem:[%s287 + $0x70] sm:$0xff] %vm629, %v4085
        %4118 = vst.msk [vmem:[%s287 + $0x78] sm:$0xff] %vm629, %v4086
        %4119 = vst.msk [vmem:[%s287 + $0x80] sm:$0xff] %vm629, %v4087
        %4120 = vst.msk [vmem:[%s287 + $0x88] sm:$0xff] %vm629, %v4088
        %4121 = vst.msk [vmem:[%s287 + $0x90] sm:$0xff] %vm629, %v4089
        %4122 = vst.msk [vmem:[%s287 + $0x98] sm:$0xff] %vm629, %v4090
        %4123 = vst.msk [vmem:[%s287 + $0xa0] sm:$0xff] %vm629, %v4091
        %4124 = vst.msk [vmem:[%s287 + $0xa8] sm:$0xff] %vm629, %v4092
        %4125 = vst.msk [vmem:[%s287 + $0xb0] sm:$0xff] %vm629, %v4093
        %4126 = vst.msk [vmem:[%s287 + $0xb8] sm:$0xff] %vm629, %v4094
        %4127 = vst.msk [vmem:[%s287 + $0xc0] sm:$0xff] %vm629, %v4095
        %4128 = vst.msk [vmem:[%s287 + $0xc8] sm:$0xff] %vm629, %v4096
        %4129 = vst.msk [vmem:[%s287 + $0xd0] sm:$0xff] %vm629, %v4097
        %4130 = vst.msk [vmem:[%s287 + $0xd8] sm:$0xff] %vm629, %v4098
        %4131 = vst.msk [vmem:[%s287 + $0xe0] sm:$0xff] %vm629, %v4099
        %4132 = vst.msk [vmem:[%s287 + $0xe8] sm:$0xff] %vm629, %v4100
        %4133 = vst.msk [vmem:[%s287 + $0xf0] sm:$0xff] %vm629, %v4101
        %4134 = vst.msk [vmem:[%s287 + $0xf8] sm:$0xff] %vm629, %v4102
        %s4135 = sand.u32 %s187, 1
        %s4136 = scalar_lea.sflag [#allocation5], %s4135
        %s4137 = sand.u32 %s187, 1
        %s4138 = smul.addr %s4137, 256
        %s4139 = scalar_lea.vmem [#allocation4], %s4138
        // Predicated region
        $region49: #{residual_block_forward.1} parent=47 // pred_check
          %p4140 = pneg %p197
        $region50: #{residual_block_forward.1} parent=47 // pred_check_branch
          %4142 = sbr.rel (%p4140) target = $region52
        $region51: #{residual_block_forward.1} parent=47 // pred_region
          %s4144 = ssub.s32 4096, 4096
          %4145 = vsyncadd %s4136, %s4144
          %s4146 = smul.addr %s22, 32
          %s4147 = smul.addr %s4146, 128
          %s4148 = scalar_lea.hbm %s7, %s4147
          %s4149 = sshll.u32 %s4139, 4
          %s4150 = int_to_ptr.vmem [resolvable:$true] %s4149
          %4155 = dma.vmem_to_hbm [thread:$0]  %s4150, 4096, %s4148, %s4136, 128, 128, 8
        $region52: #{residual_block_forward.1} parent=47 // pred_fallthru
          _
      $region48: #{residual_block_forward.1} parent=5 // pred_fallthru
        _
      %p4156 = scmp.le.s32.totalorder 2, %s17
      // Predicated region
      $region53: #{residual_block_forward.1} parent=5 // pred_check
        %p4157 = pneg %p4156
      $region54: #{residual_block_forward.1} parent=5 // pred_check_branch
        %4159 = sbr.rel (%p4157) target = $region56
      $region55: #{residual_block_forward.1} parent=5 // pred_region
        %s4160 = ssub.s32 %s17, 2
        // Predicated region
        $region57: #{residual_block_forward.1} parent=55 // pred_check
          %p4161 = pneg %p203
        $region58: #{residual_block_forward.1} parent=55 // pred_check_branch
          %4163 = sbr.rel (%p4161) target = $region60
        $region59: #{residual_block_forward.1} parent=55 // pred_region
          %s4164 = sand.u32 %s188, 1
          %s4165 = scalar_lea.sflag [#allocation5], %s4164
          %s4166 = sand.u32 %s188, 1
          %s4167 = smul.addr %s4166, 256
          %s4168 = scalar_lea.vmem [#allocation4], %s4167
          %4169 = dma.done %s4165, 4096
        $region60: #{residual_block_forward.1} parent=55 // pred_fallthru
          _
      $region56: #{residual_block_forward.1} parent=5 // pred_fallthru
        _
    $region6: #{residual_block_forward.1} parent=1 // loop_footer
      %s21 = sadd.s32 1, %s17
    $region7: #{residual_block_forward.1} parent=1 // loop_footer_branch
      %16 = sbr.rel target = $region3
    $region8: #{residual_block_forward.1} parent=1 // loop_exit
      _
    %4170 = vsyncpa [#allocation5], 1
    %s4171 = scalar_lea.sflag [#allocation5], 1
    %4172 = vsyncpa %s4171, 1

</llo_original>
